<compile_context>
chip_gen: v5e
topology: v5e:2x2
jax: 0.10.0
libtpu: 0.0.40
codegen_flags: <defaults>
</compile_context>

<pallas_src>
import functools

import jax
import jax.numpy as jnp
from jax import lax
from jax.experimental import pallas as pl
from jax.experimental.pallas import tpu as pltpu


def _disen_vae_kernel(x_ref, catesT_ref, items_nt_ref, w1_ref, b1_ref, w2_ref, b2_ref,
                      logits_ref, mulv_ref, *, K, D, mm_dtype):
    eps2 = 1e-24  # floor on the squared norm (matches F.normalize eps=1e-12 on the norm)

    X = x_ref[...]                 # (nb, M)
    catesT = catesT_ref[...]       # (K, M)  -- precomputed softmax over clusters (hoisted)
    items_nt = items_nt_ref[...]   # (M, D)  -- normalized items, already scaled by 1/tau
    nb, M = X.shape

    def mm(a, b):                  # MXU matmul, optional low-precision operands, f32 accum
        return jnp.dot(a.astype(mm_dtype), b.astype(mm_dtype),
                       preferred_element_type=jnp.float32)

    def mm_t(a, b):                # a @ b.T (contract last dims), f32 accum
        return lax.dot_general(a.astype(mm_dtype), b.astype(mm_dtype),
                               (((1,), (1,)), ((), ())),
                               preferred_element_type=jnp.float32)

    # ---- encode(): masked inputs for all K clusters in one stacked tensor.
    # rows [k*nb : (k+1)*nb] of Xall correspond to cluster k (layout-free reshape).
    Xall = (catesT[:, None, :] * X[None, :, :]).reshape(K * nb, M)          # (K*nb, M)
    h1 = jnp.tanh(mm(Xall, w1_ref[...]) + b1_ref[...])                      # (K*nb, Hp)
    heads = mm(h1, w2_ref[...]) + b2_ref[...]                               # (K*nb, 2D) = [mu | logvar]
    mu_all = heads[:, :D]                                                   # (K*nb, D)

    # ---- sample() eval mode: z = mu ; decode() in ONE matmul for all clusters.
    z_n = mu_all * lax.rsqrt(
        jnp.maximum(jnp.sum(mu_all * mu_all, axis=1, keepdims=True), eps2))
    lg_all = mm_t(z_n, items_nt)                                            # (K*nb, M), 1/tau pre-folded

    # mixture over clusters with a per-(row,item) max shift so probs never underflows
    lg_max = lg_all[0:nb, :]
    for k in range(1, K):
        lg_max = jnp.maximum(lg_max, lg_all[k * nb:(k + 1) * nb, :])
    probs = jnp.zeros_like(X)
    for k in range(K):
        probs = probs + jnp.exp(lg_all[k * nb:(k + 1) * nb, :] - lg_max) * catesT[k:k + 1, :]
    lg = lg_max + jnp.log(probs)                                            # (nb, M)

    # log_softmax over items, reusing probs (exp(lg - m) == probs * exp(lg_max - m))
    m = jnp.max(lg, axis=1, keepdims=True)
    lse = m + jnp.log(jnp.sum(probs * jnp.exp(lg_max - m), axis=1, keepdims=True))
    logits_ref[...] = lg - lse

    # lane-dense mu|logvar slab: columns [k*2D : (k+1)*2D] hold [mu_k | logvar_k]
    for k in range(K):
        mulv_ref[:, k * 2 * D:(k + 1) * 2 * D] = heads[k * nb:(k + 1) * nb, :]


def _resident_spec(shape):
    nd = len(shape)
    return pl.BlockSpec(shape, lambda i, _nd=nd: (0,) * _nd)


def _round_up(x, m):
    return (x + m - 1) // m * m


def _vmem_limit_bytes(nb, M, K, D, Hp):
    f = 4
    weights = (M * D + K * M + M * Hp + Hp * 2 * D + Hp + 2 * D) * f
    io_blocks = 2 * (2 * nb * M + nb * 2 * K * D) * f   # double-buffered X / logits / mu|lv slab
    temps = (K * nb * (2 * M + Hp + 2 * D)) * f          # Xall, lg_all, h1, heads
    est = 2 * weights + io_blocks + 2 * temps + (2 << 20)
    # cap at 3/4 of physical VMEM (v5e/v6e: 96 MiB, v7x: 48 MiB); fallback is v7x-safe
    try:
        cap = int(getattr(pltpu.get_tpu_info(), "vmem_capacity_bytes", 0) * 3 // 4)
        if cap <= 0:
            cap = 48 << 20
    except Exception:
        cap = 48 << 20
    return int(min(max(est, 8 << 20), cap))


def disen_vae_forward(X, A, params, *, K, D, tau, n_block=512,
                      matmul_dtype=jnp.float32):
    """Eval-mode forward of DisenVAE. Returns (logits, mu, logvar, None, None, None)."""
    del A  # unused by the X branch (mirrors the PyTorch forward)
    n, M = X.shape
    H = params["W1"].shape[1]
    f32 = jnp.float32
    hp = jax.lax.Precision.HIGHEST

    # ---- cluster() hoisted out of the kernel (X-independent, parameters only) ----
    eps = 1e-12
    items = params["items"].astype(f32)
    cores = params["cores"].astype(f32)
    items_n = items / jnp.maximum(jnp.linalg.norm(items, axis=1, keepdims=True), eps)
    cores_n = cores / jnp.maximum(jnp.linalg.norm(cores, axis=1, keepdims=True), eps)
    cates = jax.nn.softmax(jnp.dot(items_n, cores_n.T, precision=hp) / tau, axis=1)  # (M, K)
    catesT = cates.T                                                                  # (K, M)
    items_nt = items_n / tau                # fold 1/tau into the decode item table once

    # ---- merge the two heads and zero-pad H up to a full 128-lane multiple ----
    Hp = _round_up(max(H, 1), 128)
    W1p = jnp.zeros((M, Hp), f32).at[:, :H].set(params["W1"].astype(f32))
    b1p = jnp.zeros((1, Hp), f32).at[:, :H].set(params["b1"].astype(f32).reshape(1, H))
    W2 = jnp.concatenate([params["W2mu"], params["W2lv"]], axis=1).astype(f32)   # (H, 2D)
    W2p = jnp.zeros((Hp, 2 * D), f32).at[:H, :].set(W2)
    b2 = jnp.concatenate([params["b2mu"], params["b2lv"]], axis=1).astype(f32).reshape(1, 2 * D)

    # ---- choose a batch block (multiple of 8 sublanes); keep grid length >= 2 so both
    #      v7x TensorCores get work under dimension_semantics=("parallel",) ----
    n_pad8 = _round_up(max(n, 1), 8)
    nb = _round_up(min(n_block, n_pad8), 8)
    if n_pad8 // nb < 2 and n_pad8 >= 16:
        nb = _round_up(-(-n_pad8 // 2), 8)
    n_pad = _round_up(n_pad8, nb)
    Xp = X if n_pad == n else jnp.zeros((n_pad, M), X.dtype).at[:n, :].set(X)
    grid = (n_pad // nb,)

    in_specs = [
        pl.BlockSpec((nb, M), lambda i: (i, 0)),   # X tile (streamed, double-buffered)
        _resident_spec(catesT.shape),              # weights: constant index map -> no per-step DMA
        _resident_spec(items_nt.shape),
        _resident_spec(W1p.shape),
        _resident_spec(b1p.shape),
        _resident_spec(W2p.shape),
        _resident_spec(b2.shape),
    ]
    out_specs = (
        pl.BlockSpec((nb, M), lambda i: (i, 0)),            # logits
        pl.BlockSpec((nb, 2 * K * D), lambda i: (i, 0)),    # [mu|logvar] lane-dense slab
    )
    out_shape = (
        jax.ShapeDtypeStruct((n_pad, M), jnp.float32),
        jax.ShapeDtypeStruct((n_pad, 2 * K * D), jnp.float32),
    )

    kernel = functools.partial(_disen_vae_kernel, K=K, D=D, mm_dtype=matmul_dtype)
    logits, mulv = pl.pallas_call(
        kernel,
        grid=grid,
        in_specs=in_specs,
        out_specs=out_specs,
        out_shape=out_shape,
        compiler_params=pltpu.CompilerParams(
            dimension_semantics=("parallel",),              # shard batch over TCs (v7x)
            vmem_limit_bytes=_vmem_limit_bytes(nb, M, K, D, Hp),
        ),
    )(Xp, catesT, items_nt, W1p, b1p, W2p, b2)

    logits = logits[:n]
    # (n, 2*K*D) slab -> PyTorch's (n*K, D) row ordering (row index = i*K + k)
    mulv = mulv[:n].reshape(n, K, 2 * D)
    mu = mulv[:, :, :D].reshape(n * K, D)
    logvar = mulv[:, :, D:].reshape(n * K, D)
    return logits, mu, logvar, None, None, None


# ---------------- pure-JAX reference (mirrors the PyTorch module, eval mode) ----------------
def _reference_forward(X, params, *, K, D, tau):
    hp = jax.lax.Precision.HIGHEST
    eps = 1e-12
    items, cores = params["items"], params["cores"]
    itn = items / jnp.maximum(jnp.linalg.norm(items, axis=1, keepdims=True), eps)
    crn = cores / jnp.maximum(jnp.linalg.norm(cores, axis=1, keepdims=True), eps)
    cates = jax.nn.softmax(jnp.dot(itn, crn.T, precision=hp) / tau, axis=1)   # (M, K)
    n, M = X.shape
    Xe = (X[:, None, :] * cates.T[None, :, :]).reshape(n * K, M)
    h1 = jnp.tanh(jnp.dot(Xe, params["W1"], precision=hp) + params["b1"])
    mu = jnp.dot(h1, params["W2mu"], precision=hp) + params["b2mu"]
    logvar = jnp.dot(h1, params["W2lv"], precision=hp) + params["b2lv"]
    z = mu
    zn = z / jnp.maximum(jnp.linalg.norm(z, axis=1, keepdims=True), eps)
    lg = jnp.dot(zn, itn.T, precision=hp) / tau
    probs = jnp.sum(jnp.exp(lg).reshape(n, K, M) * cates.T[None], axis=1)
    logits = jax.nn.log_softmax(jnp.log(probs), axis=1)
    return logits, mu, logvar


if __name__ == "__main__":
    n, M, K, D = 256, 256, 4, 32
    H = 3 * D
    tau = 0.1

    key = jax.random.PRNGKey(0)
    ks = jax.random.split(key, 10)
    X = jax.random.uniform(ks[0], (n, M), jnp.float32)

    # deterministic synthetic parameters (xavier-normal-ish scales)
    params = {
        "items": jax.random.normal(ks[1], (M, D), jnp.float32) * (2.0 / (M + D)) ** 0.5,
        "cores": jax.random.normal(ks[2], (K, D), jnp.float32) * (2.0 / (K + D)) ** 0.5,
        "W1":    jax.random.normal(ks[3], (M, H), jnp.float32) * (1.0 / M) ** 0.5,
        "b1":    jax.random.normal(ks[4], (1, H), jnp.float32) * 0.01,
        "W2mu":  jax.random.normal(ks[5], (H, D), jnp.float32) * (1.0 / H) ** 0.5,
        "b2mu":  jax.random.normal(ks[6], (1, D), jnp.float32) * 0.01,
        "W2lv":  jax.random.normal(ks[7], (H, D), jnp.float32) * (1.0 / H) ** 0.5,
        "b2lv":  jax.random.normal(ks[8], (1, D), jnp.float32) * 0.01,
    }

    # default n_block=512: the wrapper halves it to 128 here so grid=(2,), exercising the
    # streamed/resident-weight pipeline and keeping both v7x TensorCores busy.
    # (use matmul_dtype=jnp.bfloat16 on v6e/v7x for MXU rate if looser tolerances are OK)
    logits, mu, logvar, _, _, _ = disen_vae_forward(
        X, None, params, K=K, D=D, tau=tau, matmul_dtype=jnp.float32)
    jax.block_until_ready((logits, mu, logvar))

    assert logits.shape == (n, M)
    assert mu.shape == (n * K, D) and logvar.shape == (n * K, D)

    ref_logits, ref_mu, ref_logvar = _reference_forward(X, params, K=K, D=D, tau=tau)
    assert jnp.all(jnp.isfinite(logits))
    assert jnp.allclose(logits, ref_logits, atol=2e-2, rtol=2e-2)
    assert jnp.allclose(mu, ref_mu, atol=3e-3, rtol=3e-3)
    assert jnp.allclose(logvar, ref_logvar, atol=3e-3, rtol=3e-3)

    print("KERNEL_OK")
</pallas_src>

<mosaic_0001>
module attributes {stable_mosaic.version = 11 : i64} {
  func.func @_disen_vae_kernel(%arg0: i32, %arg1: memref<128x256xf32, #tpu.memory_space<vmem>>, %arg2: memref<4x256xf32, #tpu.memory_space<vmem>>, %arg3: memref<256x32xf32, #tpu.memory_space<vmem>>, %arg4: memref<256x128xf32, #tpu.memory_space<vmem>>, %arg5: memref<1x128xf32, #tpu.memory_space<vmem>>, %arg6: memref<128x64xf32, #tpu.memory_space<vmem>>, %arg7: memref<1x64xf32, #tpu.memory_space<vmem>>, %arg8: memref<128x256xf32, #tpu.memory_space<vmem>>, %arg9: memref<128x256xf32, #tpu.memory_space<vmem>>) attributes {dimension_semantics = [#tpu.dimension_semantics<parallel>], iteration_bounds = array<i64: 2>, scalar_prefetch = 0 : i64, scratch_operands = 0 : i64, tpu.core_type = #tpu.core_type<tc>, window_params = [{transform_indices = @transform_0, window_bounds = array<i64: 128, 256>}, {pipeline_mode = #tpu.pipeline_mode<synchronous>, transform_indices = @transform_1, window_bounds = array<i64: 4, 256>}, {pipeline_mode = #tpu.pipeline_mode<synchronous>, transform_indices = @transform_2, window_bounds = array<i64: 256, 32>}, {pipeline_mode = #tpu.pipeline_mode<synchronous>, transform_indices = @transform_3, window_bounds = array<i64: 256, 128>}, {pipeline_mode = #tpu.pipeline_mode<synchronous>, transform_indices = @transform_4, window_bounds = array<i64: 1, 128>}, {pipeline_mode = #tpu.pipeline_mode<synchronous>, transform_indices = @transform_5, window_bounds = array<i64: 128, 64>}, {pipeline_mode = #tpu.pipeline_mode<synchronous>, transform_indices = @transform_6, window_bounds = array<i64: 1, 64>}, {transform_indices = @transform_7, window_bounds = array<i64: 128, 256>}, {transform_indices = @transform_8, window_bounds = array<i64: 128, 256>}]} {
    %c0 = arith.constant 0 : index
    %c0_0 = arith.constant 0 : index
    %0 = vector.load %arg1[%c0, %c0_0] : memref<128x256xf32, #tpu.memory_space<vmem>>, vector<128x256xf32>
    %c0_1 = arith.constant 0 : index
    %c0_2 = arith.constant 0 : index
    %1 = vector.load %arg2[%c0_1, %c0_2] : memref<4x256xf32, #tpu.memory_space<vmem>>, vector<4x256xf32>
    %c0_3 = arith.constant 0 : index
    %c0_4 = arith.constant 0 : index
    %2 = vector.load %arg3[%c0_3, %c0_4] : memref<256x32xf32, #tpu.memory_space<vmem>>, vector<256x32xf32>
    %3 = vector.shape_cast %1 : vector<4x256xf32> to vector<4x1x256xf32>
    %4 = vector.shape_cast %0 : vector<128x256xf32> to vector<1x128x256xf32>
    %5 = vector.broadcast %3 : vector<4x1x256xf32> to vector<4x128x256xf32>
    %6 = vector.broadcast %4 : vector<1x128x256xf32> to vector<4x128x256xf32>
    %7 = arith.mulf %5, %6 : vector<4x128x256xf32>
    %8 = vector.shape_cast %7 : vector<4x128x256xf32> to vector<512x256xf32>
    %c0_5 = arith.constant 0 : index
    %c0_6 = arith.constant 0 : index
    %9 = vector.load %arg4[%c0_5, %c0_6] : memref<256x128xf32, #tpu.memory_space<vmem>>, vector<256x128xf32>
    %cst = arith.constant dense<0.000000e+00> : vector<512x128xf32>
    %10 = tpu.matmul %8, %9, %cst {dimension_numbers = #tpu.dot_dimension_numbers<[1], [0], [0], [1], [0, 0, 1, 1], [], []>} : vector<512x256xf32>, vector<256x128xf32>, vector<512x128xf32> -> vector<512x128xf32>
    %c0_7 = arith.constant 0 : index
    %c0_8 = arith.constant 0 : index
    %11 = vector.load %arg5[%c0_7, %c0_8] : memref<1x128xf32, #tpu.memory_space<vmem>>, vector<1x128xf32>
    %12 = vector.broadcast %11 : vector<1x128xf32> to vector<512x128xf32>
    %13 = arith.addf %10, %12 : vector<512x128xf32>
    %14 = math.tanh %13 : vector<512x128xf32>
    %c0_9 = arith.constant 0 : index
    %c0_10 = arith.constant 0 : index
    %15 = vector.load %arg6[%c0_9, %c0_10] : memref<128x64xf32, #tpu.memory_space<vmem>>, vector<128x64xf32>
    %cst_11 = arith.constant dense<0.000000e+00> : vector<512x64xf32>
    %16 = tpu.matmul %14, %15, %cst_11 {dimension_numbers = #tpu.dot_dimension_numbers<[1], [0], [0], [1], [0, 0, 1, 1], [], []>} : vector<512x128xf32>, vector<128x64xf32>, vector<512x64xf32> -> vector<512x64xf32>
    %c0_12 = arith.constant 0 : index
    %c0_13 = arith.constant 0 : index
    %17 = vector.load %arg7[%c0_12, %c0_13] : memref<1x64xf32, #tpu.memory_space<vmem>>, vector<1x64xf32>
    %18 = vector.broadcast %17 : vector<1x64xf32> to vector<512x64xf32>
    %19 = arith.addf %16, %18 : vector<512x64xf32>
    %20 = vector.extract_strided_slice %19 {offsets = [0, 0], sizes = [512, 32], strides = [1, 1]} : vector<512x64xf32> to vector<512x32xf32>
    %21 = arith.mulf %20, %20 : vector<512x32xf32>
    %cst_14 = arith.constant dense<0.000000e+00> : vector<512xf32>
    %22 = vector.multi_reduction <add>, %21, %cst_14 [1] : vector<512x32xf32> to vector<512xf32>
    %23 = vector.shape_cast %22 : vector<512xf32> to vector<512x1xf32>
    %cst_15 = arith.constant 1.000000e-24 : f32
    %24 = vector.broadcast %cst_15 : f32 to vector<512x1xf32>
    %25 = arith.maximumf %23, %24 : vector<512x1xf32>
    %26 = math.rsqrt %25 : vector<512x1xf32>
    %27 = vector.broadcast %26 : vector<512x1xf32> to vector<512x32xf32>
    %28 = arith.mulf %20, %27 : vector<512x32xf32>
    %cst_16 = arith.constant dense<0.000000e+00> : vector<512x256xf32>
    %29 = tpu.matmul %28, %2, %cst_16 {dimension_numbers = #tpu.dot_dimension_numbers<[1], [1], [0], [0], [0, 0, 1, 0], [], []>} : vector<512x32xf32>, vector<256x32xf32>, vector<512x256xf32> -> vector<512x256xf32>
    %30 = vector.extract_strided_slice %29 {offsets = [0, 0], sizes = [128, 256], strides = [1, 1]} : vector<512x256xf32> to vector<128x256xf32>
    %31 = vector.extract_strided_slice %29 {offsets = [128, 0], sizes = [128, 256], strides = [1, 1]} : vector<512x256xf32> to vector<128x256xf32>
    %32 = arith.maximumf %30, %31 : vector<128x256xf32>
    %33 = vector.extract_strided_slice %29 {offsets = [256, 0], sizes = [128, 256], strides = [1, 1]} : vector<512x256xf32> to vector<128x256xf32>
    %34 = arith.maximumf %32, %33 : vector<128x256xf32>
    %35 = vector.extract_strided_slice %29 {offsets = [384, 0], sizes = [128, 256], strides = [1, 1]} : vector<512x256xf32> to vector<128x256xf32>
    %36 = arith.maximumf %34, %35 : vector<128x256xf32>
    %cst_17 = arith.constant 0.000000e+00 : f32
    %37 = vector.broadcast %cst_17 : f32 to vector<128x256xf32>
    %38 = vector.extract_strided_slice %29 {offsets = [0, 0], sizes = [128, 256], strides = [1, 1]} : vector<512x256xf32> to vector<128x256xf32>
    %39 = arith.subf %38, %36 : vector<128x256xf32>
    %40 = math.exp %39 : vector<128x256xf32>
    %41 = vector.extract_strided_slice %1 {offsets = [0, 0], sizes = [1, 256], strides = [1, 1]} : vector<4x256xf32> to vector<1x256xf32>
    %42 = vector.broadcast %41 : vector<1x256xf32> to vector<128x256xf32>
    %43 = arith.mulf %40, %42 : vector<128x256xf32>
    %44 = arith.addf %37, %43 : vector<128x256xf32>
    %45 = vector.extract_strided_slice %29 {offsets = [128, 0], sizes = [128, 256], strides = [1, 1]} : vector<512x256xf32> to vector<128x256xf32>
    %46 = arith.subf %45, %36 : vector<128x256xf32>
    %47 = math.exp %46 : vector<128x256xf32>
    %48 = vector.extract_strided_slice %1 {offsets = [1, 0], sizes = [1, 256], strides = [1, 1]} : vector<4x256xf32> to vector<1x256xf32>
    %49 = vector.broadcast %48 : vector<1x256xf32> to vector<128x256xf32>
    %50 = arith.mulf %47, %49 : vector<128x256xf32>
    %51 = arith.addf %44, %50 : vector<128x256xf32>
    %52 = vector.extract_strided_slice %29 {offsets = [256, 0], sizes = [128, 256], strides = [1, 1]} : vector<512x256xf32> to vector<128x256xf32>
    %53 = arith.subf %52, %36 : vector<128x256xf32>
    %54 = math.exp %53 : vector<128x256xf32>
    %55 = vector.extract_strided_slice %1 {offsets = [2, 0], sizes = [1, 256], strides = [1, 1]} : vector<4x256xf32> to vector<1x256xf32>
    %56 = vector.broadcast %55 : vector<1x256xf32> to vector<128x256xf32>
    %57 = arith.mulf %54, %56 : vector<128x256xf32>
    %58 = arith.addf %51, %57 : vector<128x256xf32>
    %59 = vector.extract_strided_slice %29 {offsets = [384, 0], sizes = [128, 256], strides = [1, 1]} : vector<512x256xf32> to vector<128x256xf32>
    %60 = arith.subf %59, %36 : vector<128x256xf32>
    %61 = math.exp %60 : vector<128x256xf32>
    %62 = vector.extract_strided_slice %1 {offsets = [3, 0], sizes = [1, 256], strides = [1, 1]} : vector<4x256xf32> to vector<1x256xf32>
    %63 = vector.broadcast %62 : vector<1x256xf32> to vector<128x256xf32>
    %64 = arith.mulf %61, %63 : vector<128x256xf32>
    %65 = arith.addf %58, %64 : vector<128x256xf32>
    %66 = math.log %65 : vector<128x256xf32>
    %67 = arith.addf %36, %66 : vector<128x256xf32>
    %cst_18 = arith.constant dense<0xFF800000> : vector<128xf32>
    %68 = vector.multi_reduction <maximumf>, %67, %cst_18 [1] : vector<128x256xf32> to vector<128xf32>
    %69 = vector.shape_cast %68 : vector<128xf32> to vector<128x1xf32>
    %70 = vector.broadcast %69 : vector<128x1xf32> to vector<128x256xf32>
    %71 = arith.subf %36, %70 : vector<128x256xf32>
    %72 = math.exp %71 : vector<128x256xf32>
    %73 = arith.mulf %65, %72 : vector<128x256xf32>
    %cst_19 = arith.constant dense<0.000000e+00> : vector<128xf32>
    %74 = vector.multi_reduction <add>, %73, %cst_19 [1] : vector<128x256xf32> to vector<128xf32>
    %75 = vector.shape_cast %74 : vector<128xf32> to vector<128x1xf32>
    %76 = math.log %75 : vector<128x1xf32>
    %77 = arith.addf %69, %76 : vector<128x1xf32>
    %78 = vector.broadcast %77 : vector<128x1xf32> to vector<128x256xf32>
    %79 = arith.subf %67, %78 : vector<128x256xf32>
    %c0_20 = arith.constant 0 : index
    %c0_21 = arith.constant 0 : index
    %80 = vector.load %arg8[%c0_20, %c0_21] : memref<128x256xf32, #tpu.memory_space<vmem>>, vector<128x256xf32>
    tpu.vector_store %arg8[%c0_20, %c0_21], %79 {strides = array<i32>} : memref<128x256xf32, #tpu.memory_space<vmem>>, vector<128x256xf32>,
    %81 = vector.extract_strided_slice %19 {offsets = [0, 0], sizes = [128, 64], strides = [1, 1]} : vector<512x64xf32> to vector<128x64xf32>
    %c0_22 = arith.constant 0 : index
    %c0_23 = arith.constant 0 : index
    %82 = vector.load %arg9[%c0_22, %c0_23] : memref<128x256xf32, #tpu.memory_space<vmem>>, vector<128x64xf32>
    tpu.vector_store %arg9[%c0_22, %c0_23], %81 {strides = array<i32>} : memref<128x256xf32, #tpu.memory_space<vmem>>, vector<128x64xf32>,
    %83 = vector.extract_strided_slice %19 {offsets = [128, 0], sizes = [128, 64], strides = [1, 1]} : vector<512x64xf32> to vector<128x64xf32>
    %c0_24 = arith.constant 0 : index
    %c64 = arith.constant 64 : index
    %84 = vector.load %arg9[%c0_24, %c64] : memref<128x256xf32, #tpu.memory_space<vmem>>, vector<128x64xf32>
    tpu.vector_store %arg9[%c0_24, %c64], %83 {strides = array<i32>} : memref<128x256xf32, #tpu.memory_space<vmem>>, vector<128x64xf32>,
    %85 = vector.extract_strided_slice %19 {offsets = [256, 0], sizes = [128, 64], strides = [1, 1]} : vector<512x64xf32> to vector<128x64xf32>
    %c0_25 = arith.constant 0 : index
    %c128 = arith.constant 128 : index
    %86 = vector.load %arg9[%c0_25, %c128] : memref<128x256xf32, #tpu.memory_space<vmem>>, vector<128x64xf32>
    tpu.vector_store %arg9[%c0_25, %c128], %85 {strides = array<i32>} : memref<128x256xf32, #tpu.memory_space<vmem>>, vector<128x64xf32>,
    %87 = vector.extract_strided_slice %19 {offsets = [384, 0], sizes = [128, 64], strides = [1, 1]} : vector<512x64xf32> to vector<128x64xf32>
    %c0_26 = arith.constant 0 : index
    %c192 = arith.constant 192 : index
    %88 = vector.load %arg9[%c0_26, %c192] : memref<128x256xf32, #tpu.memory_space<vmem>>, vector<128x64xf32>
    tpu.vector_store %arg9[%c0_26, %c192], %87 {strides = array<i32>} : memref<128x256xf32, #tpu.memory_space<vmem>>, vector<128x64xf32>,
    return
  }
  func.func @transform_0(%arg0: i32) -> (i32, i32) {
    %c0_i32 = arith.constant 0 : i32
    %c0_i32_0 = arith.constant 0 : i32
    return %arg0, %c0_i32 : i32, i32
  }
  func.func @transform_1(%arg0: i32) -> (i32, i32) {
    %c0_i32 = arith.constant 0 : i32
    %c0_i32_0 = arith.constant 0 : i32
    %c0_i32_1 = arith.constant 0 : i32
    return %c0_i32, %c0_i32_0 : i32, i32
  }
  func.func @transform_2(%arg0: i32) -> (i32, i32) {
    %c0_i32 = arith.constant 0 : i32
    %c0_i32_0 = arith.constant 0 : i32
    %c0_i32_1 = arith.constant 0 : i32
    return %c0_i32, %c0_i32_0 : i32, i32
  }
  func.func @transform_3(%arg0: i32) -> (i32, i32) {
    %c0_i32 = arith.constant 0 : i32
    %c0_i32_0 = arith.constant 0 : i32
    %c0_i32_1 = arith.constant 0 : i32
    return %c0_i32, %c0_i32_0 : i32, i32
  }
  func.func @transform_4(%arg0: i32) -> (i32, i32) {
    %c0_i32 = arith.constant 0 : i32
    %c0_i32_0 = arith.constant 0 : i32
    %c0_i32_1 = arith.constant 0 : i32
    return %c0_i32, %c0_i32_0 : i32, i32
  }
  func.func @transform_5(%arg0: i32) -> (i32, i32) {
    %c0_i32 = arith.constant 0 : i32
    %c0_i32_0 = arith.constant 0 : i32
    %c0_i32_1 = arith.constant 0 : i32
    return %c0_i32, %c0_i32_0 : i32, i32
  }
  func.func @transform_6(%arg0: i32) -> (i32, i32) {
    %c0_i32 = arith.constant 0 : i32
    %c0_i32_0 = arith.constant 0 : i32
    %c0_i32_1 = arith.constant 0 : i32
    return %c0_i32, %c0_i32_0 : i32, i32
  }
  func.func @transform_7(%arg0: i32) -> (i32, i32) {
    %c0_i32 = arith.constant 0 : i32
    %c0_i32_0 = arith.constant 0 : i32
    return %arg0, %c0_i32 : i32, i32
  }
  func.func @transform_8(%arg0: i32) -> (i32, i32) {
    %c0_i32 = arith.constant 0 : i32
    %c0_i32_0 = arith.constant 0 : i32
    return %arg0, %c0_i32 : i32, i32
  }
}

</mosaic_0001>

<llo_original>
// kernel: tpu_custom_call.1
$region0: #{tpu_custom_call.1}
  #allocation0 [shape = 'u32[]', space=smem, size = 0x4, offset = 0x4, fixed_abs, tag = 'smem constant byte address 0x4 - core index']
  #allocation1 [shape = 'u32[72,128]{1,0:T(1,128)}', space=vmem, size = 0x9000, scoped, tag = 'internal scratch']
  %s0 = inlined_call_operand.hbm [shape: f32[256,256], index: 0, kind: input, shape index: {}]
  %s1 = inlined_call_operand.vmem [shape: f32[4,256], index: 1, kind: input, shape index: {}]
  %s2 = inlined_call_operand.vmem [shape: f32[256,32], index: 2, kind: input, shape index: {}]
  %s3 = inlined_call_operand.vmem [shape: f32[256,128], index: 3, kind: input, shape index: {}]
  %s4 = inlined_call_operand.vmem [shape: f32[1,128], index: 4, kind: input, shape index: {}]
  %s5 = inlined_call_operand.vmem [shape: f32[128,64], index: 5, kind: input, shape index: {}]
  %s6 = inlined_call_operand.vmem [shape: f32[1,64], index: 6, kind: input, shape index: {}]
  %s7 = inlined_call_operand.hbm [shape: f32[256,256], index: 7, kind: output, shape index: {0}]
  %s8 = inlined_call_operand.hbm [shape: f32[256,256], index: 8, kind: output, shape index: {1}]
  %9 = xla_tuple %s7, %s8
  %s10 = sld [smem:[#allocation0]]
  $region73: #{tpu_custom_call.1} parent=0
    _
  %s12 = ssub.s32 1, %s10
  %s13 = scalar_select 0, %s12, %s10
  $region1: #{tpu_custom_call.1} parent=0
    #allocation2 [shape = 'u8[262144]{0}', space=vmem, size = 0x40000, scoped, tag = 'input window, operand 0']
    #allocation3 [shape = 's32[2]{0}', space=sflag, size = 0x8, scoped, tag = 'scoped memory for tpu_custom_call.1']
    #allocation4 [shape = 's32[2]{0}', space=sflag, size = 0x8, scoped, tag = 'scoped memory for tpu_custom_call.1']
    #allocation5 [shape = 'u8[262144]{0}', space=vmem, size = 0x40000, scoped, tag = 'output window, operand 0']
    #allocation6 [shape = 'u8[262144]{0}', space=vmem, size = 0x40000, scoped, tag = 'output window, operand 1']
    #allocation7 [shape = 's32[2]{0}', space=sflag, size = 0x8, scoped, tag = 'scoped memory for tpu_custom_call.1']
    %14 = vsyncpa [#allocation3], 0
    %s15 = scalar_lea.sflag [#allocation3], 1
    %16 = vsyncpa %s15, 0
    %17 = vsyncpa [#allocation4], 0
    %s18 = scalar_lea.sflag [#allocation4], 1
    %19 = vsyncpa %s18, 0
    %20 = vsyncpa [#allocation7], 0
    %s21 = scalar_lea.sflag [#allocation7], 1
    %22 = vsyncpa %s21, 0
    loop: start=0, step=1, limit=4
    $region2: #{tpu_custom_call.1} parent=1 // loop_pre_header
      _
    $region3: #{tpu_custom_call.1} parent=1 // loop_header
      %s24 = sphi 0, %s28
      %p25 = scmp.ge.s32.totalorder %s24, 4
      %s34 = sphi 0, %s36
      %s37 = sphi 0, %s34
      %s38 = sphi 0, %s37
      %s54 = sphi 0, %s38
      %s58 = sphi 0, %s58
      %s60 = sphi 0, %s58
      %s61 = sphi 0, %s60
      %s75 = sphi 0, %s61
      %s79 = sphi 0, %s79
      %s81 = sphi 0, %s79
      %s82 = sphi 0, %s81
      %s96 = sphi 0, %s82
      %s100 = sphi 0, %s100
      %s102 = sphi 0, %s100
      %s103 = sphi 0, %s102
      %s117 = sphi 0, %s103
      %s121 = sphi 0, %s121
      %s123 = sphi 0, %s121
      %s124 = sphi 0, %s123
      %s138 = sphi 0, %s124
      %s142 = sphi 0, %s142
      %s144 = sphi 0, %s142
      %s145 = sphi 0, %s144
      %s159 = sphi 0, %s145
      %s163 = sphi 0, %s163
      %s165 = sphi 0, %s163
      %s166 = sphi 0, %s165
      %s180 = sphi 0, %s166
      %s186 = sphi 0, %s188
      %s189 = sphi 0, %s186
      %s190 = sphi 0, %s189
      %s206 = sphi 0, %s190
      %s212 = sphi 0, %s214
      %s215 = sphi 0, %s212
      %s216 = sphi 0, %s215
      %s232 = sphi 0, %s216
    $region4: #{tpu_custom_call.1} parent=1 // loop_header_branch
      %27 = sbr.rel (%p25) target = $region8
    $region5: #{tpu_custom_call.1} parent=1 // loop_body
      %s29 = ssub.s32 %s24, 1
      %s30 = ssub.s32 %s24, 2
      %s31 = sadd.s32 %s24, 1
      %s32 = ssub.s32 %s24, %s31
      %p33 = scmp.eq.s32.totalorder %s32, 0
      %s35 = sadd.s32 %s34, 1
      %s36 = scalar_select %p33, %s34, %s35
      %p39 = pneg %p33
      %p40 = scmp.eq.s32.totalorder %s24, 1
      %p41 = por %p39, %p40
      %p42 = scmp.ne.s32.totalorder %s34, %s37
      %p43 = scmp.eq.s32.totalorder %s24, 0
      %p44 = por %p42, %p43
      %p45 = scmp.ne.s32.totalorder %s34, %s37
      %p46 = scmp.eq.s32.totalorder %s29, 1
      %p47 = por %p45, %p46
      %p48 = scmp.ne.s32.totalorder %s37, %s38
      %p49 = scmp.eq.s32.totalorder %s29, 0
      %p50 = por %p48, %p49
      %p51 = scmp.ne.s32.totalorder %s37, %s38
      %p52 = scmp.eq.s32.totalorder %s30, 1
      %p53 = por %p51, %p52
      %p55 = scmp.ne.s32.totalorder %s38, %s54
      %p56 = scmp.eq.s32.totalorder %s30, 0
      %p57 = por %p55, %p56
      %s59 = sadd.s32 %s58, 1
      %p62 = scmp.eq.s32.totalorder %s24, 1
      %p63 = scmp.ne.s32.totalorder %s58, %s60
      %p64 = scmp.eq.s32.totalorder %s24, 0
      %p65 = por %p63, %p64
      %p66 = scmp.ne.s32.totalorder %s58, %s60
      %p67 = scmp.eq.s32.totalorder %s29, 1
      %p68 = por %p66, %p67
      %p69 = scmp.ne.s32.totalorder %s60, %s61
      %p70 = scmp.eq.s32.totalorder %s29, 0
      %p71 = por %p69, %p70
      %p72 = scmp.ne.s32.totalorder %s60, %s61
      %p73 = scmp.eq.s32.totalorder %s30, 1
      %p74 = por %p72, %p73
      %p76 = scmp.ne.s32.totalorder %s61, %s75
      %p77 = scmp.eq.s32.totalorder %s30, 0
      %p78 = por %p76, %p77
      %s80 = sadd.s32 %s79, 1
      %p83 = scmp.eq.s32.totalorder %s24, 1
      %p84 = scmp.ne.s32.totalorder %s79, %s81
      %p85 = scmp.eq.s32.totalorder %s24, 0
      %p86 = por %p84, %p85
      %p87 = scmp.ne.s32.totalorder %s79, %s81
      %p88 = scmp.eq.s32.totalorder %s29, 1
      %p89 = por %p87, %p88
      %p90 = scmp.ne.s32.totalorder %s81, %s82
      %p91 = scmp.eq.s32.totalorder %s29, 0
      %p92 = por %p90, %p91
      %p93 = scmp.ne.s32.totalorder %s81, %s82
      %p94 = scmp.eq.s32.totalorder %s30, 1
      %p95 = por %p93, %p94
      %p97 = scmp.ne.s32.totalorder %s82, %s96
      %p98 = scmp.eq.s32.totalorder %s30, 0
      %p99 = por %p97, %p98
      %s101 = sadd.s32 %s100, 1
      %p104 = scmp.eq.s32.totalorder %s24, 1
      %p105 = scmp.ne.s32.totalorder %s100, %s102
      %p106 = scmp.eq.s32.totalorder %s24, 0
      %p107 = por %p105, %p106
      %p108 = scmp.ne.s32.totalorder %s100, %s102
      %p109 = scmp.eq.s32.totalorder %s29, 1
      %p110 = por %p108, %p109
      %p111 = scmp.ne.s32.totalorder %s102, %s103
      %p112 = scmp.eq.s32.totalorder %s29, 0
      %p113 = por %p111, %p112
      %p114 = scmp.ne.s32.totalorder %s102, %s103
      %p115 = scmp.eq.s32.totalorder %s30, 1
      %p116 = por %p114, %p115
      %p118 = scmp.ne.s32.totalorder %s103, %s117
      %p119 = scmp.eq.s32.totalorder %s30, 0
      %p120 = por %p118, %p119
      %s122 = sadd.s32 %s121, 1
      %p125 = scmp.eq.s32.totalorder %s24, 1
      %p126 = scmp.ne.s32.totalorder %s121, %s123
      %p127 = scmp.eq.s32.totalorder %s24, 0
      %p128 = por %p126, %p127
      %p129 = scmp.ne.s32.totalorder %s121, %s123
      %p130 = scmp.eq.s32.totalorder %s29, 1
      %p131 = por %p129, %p130
      %p132 = scmp.ne.s32.totalorder %s123, %s124
      %p133 = scmp.eq.s32.totalorder %s29, 0
      %p134 = por %p132, %p133
      %p135 = scmp.ne.s32.totalorder %s123, %s124
      %p136 = scmp.eq.s32.totalorder %s30, 1
      %p137 = por %p135, %p136
      %p139 = scmp.ne.s32.totalorder %s124, %s138
      %p140 = scmp.eq.s32.totalorder %s30, 0
      %p141 = por %p139, %p140
      %s143 = sadd.s32 %s142, 1
      %p146 = scmp.eq.s32.totalorder %s24, 1
      %p147 = scmp.ne.s32.totalorder %s142, %s144
      %p148 = scmp.eq.s32.totalorder %s24, 0
      %p149 = por %p147, %p148
      %p150 = scmp.ne.s32.totalorder %s142, %s144
      %p151 = scmp.eq.s32.totalorder %s29, 1
      %p152 = por %p150, %p151
      %p153 = scmp.ne.s32.totalorder %s144, %s145
      %p154 = scmp.eq.s32.totalorder %s29, 0
      %p155 = por %p153, %p154
      %p156 = scmp.ne.s32.totalorder %s144, %s145
      %p157 = scmp.eq.s32.totalorder %s30, 1
      %p158 = por %p156, %p157
      %p160 = scmp.ne.s32.totalorder %s145, %s159
      %p161 = scmp.eq.s32.totalorder %s30, 0
      %p162 = por %p160, %p161
      %s164 = sadd.s32 %s163, 1
      %p167 = scmp.eq.s32.totalorder %s24, 1
      %p168 = scmp.ne.s32.totalorder %s163, %s165
      %p169 = scmp.eq.s32.totalorder %s24, 0
      %p170 = por %p168, %p169
      %p171 = scmp.ne.s32.totalorder %s163, %s165
      %p172 = scmp.eq.s32.totalorder %s29, 1
      %p173 = por %p171, %p172
      %p174 = scmp.ne.s32.totalorder %s165, %s166
      %p175 = scmp.eq.s32.totalorder %s29, 0
      %p176 = por %p174, %p175
      %p177 = scmp.ne.s32.totalorder %s165, %s166
      %p178 = scmp.eq.s32.totalorder %s30, 1
      %p179 = por %p177, %p178
      %p181 = scmp.ne.s32.totalorder %s166, %s180
      %p182 = scmp.eq.s32.totalorder %s30, 0
      %p183 = por %p181, %p182
      %s184 = ssub.s32 %s24, %s31
      %p185 = scmp.eq.s32.totalorder %s184, 0
      %s187 = sadd.s32 %s186, 1
      %s188 = scalar_select %p185, %s186, %s187
      %p191 = pneg %p185
      %p192 = scmp.eq.s32.totalorder %s24, 1
      %p193 = por %p191, %p192
      %p194 = scmp.ne.s32.totalorder %s186, %s189
      %p195 = scmp.eq.s32.totalorder %s24, 0
      %p196 = por %p194, %p195
      %p197 = scmp.ne.s32.totalorder %s186, %s189
      %p198 = scmp.eq.s32.totalorder %s29, 1
      %p199 = por %p197, %p198
      %p200 = scmp.ne.s32.totalorder %s189, %s190
      %p201 = scmp.eq.s32.totalorder %s29, 0
      %p202 = por %p200, %p201
      %p203 = scmp.ne.s32.totalorder %s189, %s190
      %p204 = scmp.eq.s32.totalorder %s30, 1
      %p205 = por %p203, %p204
      %p207 = scmp.ne.s32.totalorder %s190, %s206
      %p208 = scmp.eq.s32.totalorder %s30, 0
      %p209 = por %p207, %p208
      %s210 = ssub.s32 %s24, %s31
      %p211 = scmp.eq.s32.totalorder %s210, 0
      %s213 = sadd.s32 %s212, 1
      %s214 = scalar_select %p211, %s212, %s213
      %p217 = pneg %p211
      %p218 = scmp.eq.s32.totalorder %s24, 1
      %p219 = por %p217, %p218
      %p220 = scmp.ne.s32.totalorder %s212, %s215
      %p221 = scmp.eq.s32.totalorder %s24, 0
      %p222 = por %p220, %p221
      %p223 = scmp.ne.s32.totalorder %s212, %s215
      %p224 = scmp.eq.s32.totalorder %s29, 1
      %p225 = por %p223, %p224
      %p226 = scmp.ne.s32.totalorder %s215, %s216
      %p227 = scmp.eq.s32.totalorder %s29, 0
      %p228 = por %p226, %p227
      %p229 = scmp.ne.s32.totalorder %s215, %s216
      %p230 = scmp.eq.s32.totalorder %s30, 1
      %p231 = por %p229, %p230
      %p233 = scmp.ne.s32.totalorder %s216, %s232
      %p234 = scmp.eq.s32.totalorder %s30, 0
      %p235 = por %p233, %p234
      %p236 = scmp.le.s32.totalorder 1, %s24
      %p237 = scmp.lt.s32.totalorder %s24, 3
      %p238 = pnand %p236, %p237
      %p239 = pneg %p238
      // Predicated region
      $region9: #{tpu_custom_call.1} parent=5 // pred_check
        _
      $region10: #{tpu_custom_call.1} parent=5 // pred_check_branch
        %241 = sbr.rel (%p238) target = $region12
      $region11: #{tpu_custom_call.1} parent=5 // pred_region
        %s242 = ssub.s32 %s24, 1
        // Predicated region
        $region13: #{tpu_custom_call.1} parent=11 // pred_check
          %p243 = pneg %p71
        $region14: #{tpu_custom_call.1} parent=11 // pred_check_branch
          %245 = sbr.rel (%p243) target = $region16
        $region15: #{tpu_custom_call.1} parent=11 // pred_region
          _
        $region16: #{tpu_custom_call.1} parent=11 // pred_fallthru
          _
        // Predicated region
        $region17: #{tpu_custom_call.1} parent=11 // pred_check
          %p246 = pneg %p92
        $region18: #{tpu_custom_call.1} parent=11 // pred_check_branch
          %248 = sbr.rel (%p246) target = $region20
        $region19: #{tpu_custom_call.1} parent=11 // pred_region
          _
        $region20: #{tpu_custom_call.1} parent=11 // pred_fallthru
          _
        // Predicated region
        $region21: #{tpu_custom_call.1} parent=11 // pred_check
          %p249 = pneg %p113
        $region22: #{tpu_custom_call.1} parent=11 // pred_check_branch
          %251 = sbr.rel (%p249) target = $region24
        $region23: #{tpu_custom_call.1} parent=11 // pred_region
          _
        $region24: #{tpu_custom_call.1} parent=11 // pred_fallthru
          _
        // Predicated region
        $region25: #{tpu_custom_call.1} parent=11 // pred_check
          %p252 = pneg %p134
        $region26: #{tpu_custom_call.1} parent=11 // pred_check_branch
          %254 = sbr.rel (%p252) target = $region28
        $region27: #{tpu_custom_call.1} parent=11 // pred_region
          _
        $region28: #{tpu_custom_call.1} parent=11 // pred_fallthru
          _
        // Predicated region
        $region29: #{tpu_custom_call.1} parent=11 // pred_check
          %p255 = pneg %p155
        $region30: #{tpu_custom_call.1} parent=11 // pred_check_branch
          %257 = sbr.rel (%p255) target = $region32
        $region31: #{tpu_custom_call.1} parent=11 // pred_region
          _
        $region32: #{tpu_custom_call.1} parent=11 // pred_fallthru
          _
        // Predicated region
        $region33: #{tpu_custom_call.1} parent=11 // pred_check
          %p258 = pneg %p176
        $region34: #{tpu_custom_call.1} parent=11 // pred_check_branch
          %260 = sbr.rel (%p258) target = $region36
        $region35: #{tpu_custom_call.1} parent=11 // pred_region
          _
        $region36: #{tpu_custom_call.1} parent=11 // pred_fallthru
          _
      $region12: #{tpu_custom_call.1} parent=5 // pred_fallthru
        _
      %p261 = scmp.lt.s32.totalorder %s24, 2
      // Predicated region
      $region37: #{tpu_custom_call.1} parent=5 // pred_check
        %p262 = pneg %p261
      $region38: #{tpu_custom_call.1} parent=5 // pred_check_branch
        %264 = sbr.rel (%p262) target = $region40
      $region39: #{tpu_custom_call.1} parent=5 // pred_region
        // Predicated region
        $region41: #{tpu_custom_call.1} parent=39 // pred_check
          %p265 = pneg %p44
        $region42: #{tpu_custom_call.1} parent=39 // pred_check_branch
          %267 = sbr.rel (%p265) target = $region44
        $region43: #{tpu_custom_call.1} parent=39 // pred_region
          %s268 = sand.u32 %s34, 1
          %s269 = scalar_lea.sflag [#allocation3], %s268
          %s270 = sand.u32 %s34, 1
          %s271 = smul.addr %s270, 256
          %s272 = scalar_lea.vmem [#allocation2], %s271
          %s273 = smul.u32 16, %s24
          %275 = vsyncadd %s269, 0
          %s276 = smul.addr %s273, 2
          %s277 = smul.addr %s276, 8
          %s278 = scalar_lea.hbm %s0, %s277
          %s279 = sshll.u32 %s278, 4
          %s280 = int_to_ptr.hbm [resolvable:$true] %s279
          %s281 = sshll.u32 %s272, 4
          %s282 = int_to_ptr.vmem [resolvable:$true] %s281
          %287 = dma.hbm_to_vmem [thread:$0]  %s280, 4096, %s282, %s269, 256, 256, 16
        $region44: #{tpu_custom_call.1} parent=39 // pred_fallthru
          _
      $region40: #{tpu_custom_call.1} parent=5 // pred_fallthru
        _
      %p288 = scmp.le.s32.totalorder 1, %s24
      %p289 = scmp.lt.s32.totalorder %s24, 3
      %p290 = pnand %p288, %p289
      %p291 = pneg %p290
      // Predicated region
      $region45: #{tpu_custom_call.1} parent=5 // pred_check
        _
      $region46: #{tpu_custom_call.1} parent=5 // pred_check_branch
        %293 = sbr.rel (%p290) target = $region48
      $region47: #{tpu_custom_call.1} parent=5 // pred_region
        %s294 = ssub.s32 %s24, 1
        %s295 = sand.u32 %s37, 1
        %s296 = scalar_lea.sflag [#allocation3], %s295
        %s297 = sand.u32 %s37, 1
        %s298 = smul.addr %s297, 256
        %s299 = scalar_lea.vmem [#allocation2], %s298
        // Predicated region
        $region49: #{tpu_custom_call.1} parent=47 // pred_check
          %p300 = pneg %p50
        $region50: #{tpu_custom_call.1} parent=47 // pred_check_branch
          %302 = sbr.rel (%p300) target = $region52
        $region51: #{tpu_custom_call.1} parent=47 // pred_region
          %304 = dma.done %s296, 4096
        $region52: #{tpu_custom_call.1} parent=47 // pred_fallthru
          _
        %s305 = sand.u32 %s37, 1
        %s306 = scalar_lea.sflag [#allocation3], %s305
        %s307 = sand.u32 %s37, 1
        %s308 = smul.addr %s307, 256
        %s309 = scalar_lea.vmem [#allocation2], %s308
        %p310 = pneg %p50
        %p311 = pneg %p47
        %p312 = pneg %p71
        %p313 = pneg %p68
        %p314 = pneg %p92
        %p315 = pneg %p89
        %p316 = pneg %p113
        %p317 = pneg %p110
        %p318 = pneg %p134
        %p319 = pneg %p131
        %p320 = pneg %p155
        %p321 = pneg %p152
        %p322 = pneg %p176
        %p323 = pneg %p173
        %p324 = pneg %p202
        %p325 = pneg %p199
        %s326 = sand.u32 %s189, 1
        %s327 = scalar_lea.sflag [#allocation4], %s326
        %s328 = sand.u32 %s189, 1
        %s329 = smul.addr %s328, 256
        %s330 = scalar_lea.vmem [#allocation5], %s329
        %p331 = pneg %p228
        %p332 = pneg %p225
        %s333 = sand.u32 %s215, 1
        %s334 = scalar_lea.sflag [#allocation7], %s333
        %s335 = sand.u32 %s215, 1
        %s336 = smul.addr %s335, 256
        %s337 = scalar_lea.vmem [#allocation6], %s336
        %s338 = smul.u32 16, %s29
        %s339 = smul.u32 16, %s29
        %s340 = smul.u32 16, %s29
        %v341 = vld [vmem:[%s299] sm:$0xff]
        %v342 = vld [vmem:[%s299 + $0x8] sm:$0xff]
        %v343 = vld [vmem:[%s299 + $0x10] sm:$0xff]
        %v344 = vld [vmem:[%s299 + $0x18] sm:$0xff]
        %v345 = vld [vmem:[%s299 + $0x20] sm:$0xff]
        %v346 = vld [vmem:[%s299 + $0x28] sm:$0xff]
        %v347 = vld [vmem:[%s299 + $0x30] sm:$0xff]
        %v348 = vld [vmem:[%s299 + $0x38] sm:$0xff]
        %v349 = vld [vmem:[%s299 + $0x40] sm:$0xff]
        %v350 = vld [vmem:[%s299 + $0x48] sm:$0xff]
        %v351 = vld [vmem:[%s299 + $0x50] sm:$0xff]
        %v352 = vld [vmem:[%s299 + $0x58] sm:$0xff]
        %v353 = vld [vmem:[%s299 + $0x60] sm:$0xff]
        %v354 = vld [vmem:[%s299 + $0x68] sm:$0xff]
        %v355 = vld [vmem:[%s299 + $0x70] sm:$0xff]
        %v356 = vld [vmem:[%s299 + $0x78] sm:$0xff]
        %v357 = vld [vmem:[%s299 + $0x80] sm:$0xff]
        %v358 = vld [vmem:[%s299 + $0x88] sm:$0xff]
        %v359 = vld [vmem:[%s299 + $0x90] sm:$0xff]
        %v360 = vld [vmem:[%s299 + $0x98] sm:$0xff]
        %v361 = vld [vmem:[%s299 + $0xa0] sm:$0xff]
        %v362 = vld [vmem:[%s299 + $0xa8] sm:$0xff]
        %v363 = vld [vmem:[%s299 + $0xb0] sm:$0xff]
        %v364 = vld [vmem:[%s299 + $0xb8] sm:$0xff]
        %v365 = vld [vmem:[%s299 + $0xc0] sm:$0xff]
        %v366 = vld [vmem:[%s299 + $0xc8] sm:$0xff]
        %v367 = vld [vmem:[%s299 + $0xd0] sm:$0xff]
        %v368 = vld [vmem:[%s299 + $0xd8] sm:$0xff]
        %v369 = vld [vmem:[%s299 + $0xe0] sm:$0xff]
        %v370 = vld [vmem:[%s299 + $0xe8] sm:$0xff]
        %v371 = vld [vmem:[%s299 + $0xf0] sm:$0xff]
        %v372 = vld [vmem:[%s299 + $0xf8] sm:$0xff]
        %v373 = vld [vmem:[%s1] sm:$0xff]
        %v374 = vld [vmem:[%s2] sm:$0xff]
        %v375 = vld [vmem:[%s2 + $0x8] sm:$0xff]
        %v376 = vld [vmem:[%s2 + $0x10] sm:$0xff]
        %v377 = vld [vmem:[%s2 + $0x18] sm:$0xff]
        %v378 = vld [vmem:[%s2 + $0x20] sm:$0xff]
        %v379 = vld [vmem:[%s2 + $0x28] sm:$0xff]
        %v380 = vld [vmem:[%s2 + $0x30] sm:$0xff]
        %v381 = vld [vmem:[%s2 + $0x38] sm:$0xff]
        %v382 = vld [vmem:[%s2 + $0x40] sm:$0xff]
        %v383 = vld [vmem:[%s2 + $0x48] sm:$0xff]
        %v384 = vld [vmem:[%s2 + $0x50] sm:$0xff]
        %v385 = vld [vmem:[%s2 + $0x58] sm:$0xff]
        %v386 = vld [vmem:[%s2 + $0x60] sm:$0xff]
        %v387 = vld [vmem:[%s2 + $0x68] sm:$0xff]
        %v388 = vld [vmem:[%s2 + $0x70] sm:$0xff]
        %v389 = vld [vmem:[%s2 + $0x78] sm:$0xff]
        %v390 = vld [vmem:[%s2 + $0x80] sm:$0xff]
        %v391 = vld [vmem:[%s2 + $0x88] sm:$0xff]
        %v392 = vld [vmem:[%s2 + $0x90] sm:$0xff]
        %v393 = vld [vmem:[%s2 + $0x98] sm:$0xff]
        %v394 = vld [vmem:[%s2 + $0xa0] sm:$0xff]
        %v395 = vld [vmem:[%s2 + $0xa8] sm:$0xff]
        %v396 = vld [vmem:[%s2 + $0xb0] sm:$0xff]
        %v397 = vld [vmem:[%s2 + $0xb8] sm:$0xff]
        %v398 = vld [vmem:[%s2 + $0xc0] sm:$0xff]
        %v399 = vld [vmem:[%s2 + $0xc8] sm:$0xff]
        %v400 = vld [vmem:[%s2 + $0xd0] sm:$0xff]
        %v401 = vld [vmem:[%s2 + $0xd8] sm:$0xff]
        %v402 = vld [vmem:[%s2 + $0xe0] sm:$0xff]
        %v403 = vld [vmem:[%s2 + $0xe8] sm:$0xff]
        %v404 = vld [vmem:[%s2 + $0xf0] sm:$0xff]
        %v405 = vld [vmem:[%s2 + $0xf8] sm:$0xff]
        %v407 = vrot.slane %v373, 3
        %vm408 = vcmask 1040384
        %v409 = vsel %vm408, %v373, %v407
        %vm410 = vcmask 1041409
        %v411 = vsel %vm410, %v373, %v407
        %v412 = vrot.slane %v411, 1
        %vm413 = vcmask 1042434
        %v414 = vsel %vm413, %v373, %v407
        %v415 = vrot.slane %v414, 2
        %vm416 = vcmask 1043459
        %v417 = vsel %vm416, %v373, %v407
        %v418 = vrot.slane %v417, 3
        %v419 = vperm.slane %v409, 0
        %v420 = vperm.slane %v409, 1
        %v421 = vperm.slane %v412, 0
        %v422 = vperm.slane %v412, 1
        %v423 = vperm.slane %v415, 0
        %v424 = vperm.slane %v415, 1
        %v425 = vperm.slane %v418, 0
        %v426 = vperm.slane %v418, 1
        %v435 = vmul.f32 %v419, %v341
        %v436 = vmul.f32 %v420, %v342
        %v437 = vmul.f32 %v419, %v343
        %v438 = vmul.f32 %v420, %v344
        %v439 = vmul.f32 %v419, %v345
        %v440 = vmul.f32 %v420, %v346
        %v441 = vmul.f32 %v419, %v347
        %v442 = vmul.f32 %v420, %v348
        %v443 = vmul.f32 %v419, %v349
        %v444 = vmul.f32 %v420, %v350
        %v445 = vmul.f32 %v419, %v351
        %v446 = vmul.f32 %v420, %v352
        %v447 = vmul.f32 %v419, %v353
        %v448 = vmul.f32 %v420, %v354
        %v449 = vmul.f32 %v419, %v355
        %v450 = vmul.f32 %v420, %v356
        %v451 = vmul.f32 %v419, %v357
        %v452 = vmul.f32 %v420, %v358
        %v453 = vmul.f32 %v419, %v359
        %v454 = vmul.f32 %v420, %v360
        %v455 = vmul.f32 %v419, %v361
        %v456 = vmul.f32 %v420, %v362
        %v457 = vmul.f32 %v419, %v363
        %v458 = vmul.f32 %v420, %v364
        %v459 = vmul.f32 %v419, %v365
        %v460 = vmul.f32 %v420, %v366
        %v461 = vmul.f32 %v419, %v367
        %v462 = vmul.f32 %v420, %v368
        %v463 = vmul.f32 %v419, %v369
        %v464 = vmul.f32 %v420, %v370
        %v465 = vmul.f32 %v419, %v371
        %v466 = vmul.f32 %v420, %v372
        %v467 = vmul.f32 %v421, %v341
        %v468 = vmul.f32 %v422, %v342
        %v469 = vmul.f32 %v421, %v343
        %v470 = vmul.f32 %v422, %v344
        %v471 = vmul.f32 %v421, %v345
        %v472 = vmul.f32 %v422, %v346
        %v473 = vmul.f32 %v421, %v347
        %v474 = vmul.f32 %v422, %v348
        %v475 = vmul.f32 %v421, %v349
        %v476 = vmul.f32 %v422, %v350
        %v477 = vmul.f32 %v421, %v351
        %v478 = vmul.f32 %v422, %v352
        %v479 = vmul.f32 %v421, %v353
        %v480 = vmul.f32 %v422, %v354
        %v481 = vmul.f32 %v421, %v355
        %v482 = vmul.f32 %v422, %v356
        %v483 = vmul.f32 %v421, %v357
        %v484 = vmul.f32 %v422, %v358
        %v485 = vmul.f32 %v421, %v359
        %v486 = vmul.f32 %v422, %v360
        %v487 = vmul.f32 %v421, %v361
        %v488 = vmul.f32 %v422, %v362
        %v489 = vmul.f32 %v421, %v363
        %v490 = vmul.f32 %v422, %v364
        %v491 = vmul.f32 %v421, %v365
        %v492 = vmul.f32 %v422, %v366
        %v493 = vmul.f32 %v421, %v367
        %v494 = vmul.f32 %v422, %v368
        %v495 = vmul.f32 %v421, %v369
        %v496 = vmul.f32 %v422, %v370
        %v497 = vmul.f32 %v421, %v371
        %v498 = vmul.f32 %v422, %v372
        %v499 = vmul.f32 %v423, %v341
        %v500 = vmul.f32 %v424, %v342
        %v501 = vmul.f32 %v423, %v343
        %v502 = vmul.f32 %v424, %v344
        %v503 = vmul.f32 %v423, %v345
        %v504 = vmul.f32 %v424, %v346
        %v505 = vmul.f32 %v423, %v347
        %v506 = vmul.f32 %v424, %v348
        %v507 = vmul.f32 %v423, %v349
        %v508 = vmul.f32 %v424, %v350
        %v509 = vmul.f32 %v423, %v351
        %v510 = vmul.f32 %v424, %v352
        %v511 = vmul.f32 %v423, %v353
        %v512 = vmul.f32 %v424, %v354
        %v513 = vmul.f32 %v423, %v355
        %v514 = vmul.f32 %v424, %v356
        %v515 = vmul.f32 %v423, %v357
        %v516 = vmul.f32 %v424, %v358
        %v517 = vmul.f32 %v423, %v359
        %v518 = vmul.f32 %v424, %v360
        %v519 = vmul.f32 %v423, %v361
        %v520 = vmul.f32 %v424, %v362
        %v521 = vmul.f32 %v423, %v363
        %v522 = vmul.f32 %v424, %v364
        %v523 = vmul.f32 %v423, %v365
        %v524 = vmul.f32 %v424, %v366
        %v525 = vmul.f32 %v423, %v367
        %v526 = vmul.f32 %v424, %v368
        %v527 = vmul.f32 %v423, %v369
        %v528 = vmul.f32 %v424, %v370
        %v529 = vmul.f32 %v423, %v371
        %v530 = vmul.f32 %v424, %v372
        %v531 = vmul.f32 %v425, %v341
        %v532 = vmul.f32 %v426, %v342
        %v533 = vmul.f32 %v425, %v343
        %v534 = vmul.f32 %v426, %v344
        %v535 = vmul.f32 %v425, %v345
        %v536 = vmul.f32 %v426, %v346
        %v537 = vmul.f32 %v425, %v347
        %v538 = vmul.f32 %v426, %v348
        %v539 = vmul.f32 %v425, %v349
        %v540 = vmul.f32 %v426, %v350
        %v541 = vmul.f32 %v425, %v351
        %v542 = vmul.f32 %v426, %v352
        %v543 = vmul.f32 %v425, %v353
        %v544 = vmul.f32 %v426, %v354
        %v545 = vmul.f32 %v425, %v355
        %v546 = vmul.f32 %v426, %v356
        %v547 = vmul.f32 %v425, %v357
        %v548 = vmul.f32 %v426, %v358
        %v549 = vmul.f32 %v425, %v359
        %v550 = vmul.f32 %v426, %v360
        %v551 = vmul.f32 %v425, %v361
        %v552 = vmul.f32 %v426, %v362
        %v553 = vmul.f32 %v425, %v363
        %v554 = vmul.f32 %v426, %v364
        %v555 = vmul.f32 %v425, %v365
        %v556 = vmul.f32 %v426, %v366
        %v557 = vmul.f32 %v425, %v367
        %v558 = vmul.f32 %v426, %v368
        %v559 = vmul.f32 %v425, %v369
        %v560 = vmul.f32 %v426, %v370
        %v561 = vmul.f32 %v425, %v371
        %v562 = vmul.f32 %v426, %v372
        %v563 = vld [vmem:[%s3] sm:$0xff]
        %v564 = vld [vmem:[%s3 + $0x8] sm:$0xff]
        %v565 = vld [vmem:[%s3 + $0x10] sm:$0xff]
        %v566 = vld [vmem:[%s3 + $0x18] sm:$0xff]
        %v567 = vld [vmem:[%s3 + $0x20] sm:$0xff]
        %v568 = vld [vmem:[%s3 + $0x28] sm:$0xff]
        %v569 = vld [vmem:[%s3 + $0x30] sm:$0xff]
        %v570 = vld [vmem:[%s3 + $0x38] sm:$0xff]
        %v571 = vld [vmem:[%s3 + $0x40] sm:$0xff]
        %v572 = vld [vmem:[%s3 + $0x48] sm:$0xff]
        %v573 = vld [vmem:[%s3 + $0x50] sm:$0xff]
        %v574 = vld [vmem:[%s3 + $0x58] sm:$0xff]
        %v575 = vld [vmem:[%s3 + $0x60] sm:$0xff]
        %v576 = vld [vmem:[%s3 + $0x68] sm:$0xff]
        %v577 = vld [vmem:[%s3 + $0x70] sm:$0xff]
        %v578 = vld [vmem:[%s3 + $0x78] sm:$0xff]
        %v579 = vld [vmem:[%s3 + $0x80] sm:$0xff]
        %v580 = vld [vmem:[%s3 + $0x88] sm:$0xff]
        %v581 = vld [vmem:[%s3 + $0x90] sm:$0xff]
        %v582 = vld [vmem:[%s3 + $0x98] sm:$0xff]
        %v583 = vld [vmem:[%s3 + $0xa0] sm:$0xff]
        %v584 = vld [vmem:[%s3 + $0xa8] sm:$0xff]
        %v585 = vld [vmem:[%s3 + $0xb0] sm:$0xff]
        %v586 = vld [vmem:[%s3 + $0xb8] sm:$0xff]
        %v587 = vld [vmem:[%s3 + $0xc0] sm:$0xff]
        %v588 = vld [vmem:[%s3 + $0xc8] sm:$0xff]
        %v589 = vld [vmem:[%s3 + $0xd0] sm:$0xff]
        %v590 = vld [vmem:[%s3 + $0xd8] sm:$0xff]
        %v591 = vld [vmem:[%s3 + $0xe0] sm:$0xff]
        %v592 = vld [vmem:[%s3 + $0xe8] sm:$0xff]
        %v593 = vld [vmem:[%s3 + $0xf0] sm:$0xff]
        %v594 = vld [vmem:[%s3 + $0xf8] sm:$0xff]
        %v595 = vld [vmem:[%s4] sm:$0x1]
        %v597 = vperm.slane %v595, 0
        %599 = vmatpush.msra.mxu0 %v578
        %600 = vmatpush.msra.mxu0 %v577
        %601 = vmatpush.msra.mxu0 %v576
        %602 = vmatpush.msra.mxu0 %v575
        %603 = vmatpush.msra.mxu0 %v574
        %604 = vmatpush.msra.mxu0 %v573
        %605 = vmatpush.msra.mxu0 %v572
        %606 = vmatpush.msra.mxu0 %v571
        %607 = vmatpush.msra.mxu0 %v570
        %608 = vmatpush.msra.mxu0 %v569
        %609 = vmatpush.msra.mxu0 %v568
        %610 = vmatpush.msra.mxu0 %v567
        %611 = vmatpush.msra.mxu0 %v566
        %612 = vmatpush.msra.mxu0 %v565
        %613 = vmatpush.msra.mxu0 %v564
        %614 = vmatpush.msra.mxu0 %v563
        %615 = vmatmul.f32.gmra.mxu0 %v435
        %v616 = vpop.f32.mrf.mxu0
        %v617 = vadd.f32 %v597, %v616
        %618 = vmatmul.f32.gmra.mxu0 %v437
        %v619 = vpop.f32.mrf.mxu0
        %v620 = vadd.f32 %v597, %v619
        %621 = vmatmul.f32.gmra.mxu0 %v439
        %v622 = vpop.f32.mrf.mxu0
        %v623 = vadd.f32 %v597, %v622
        %624 = vmatmul.f32.gmra.mxu0 %v441
        %v625 = vpop.f32.mrf.mxu0
        %v626 = vadd.f32 %v597, %v625
        %627 = vmatmul.f32.gmra.mxu0 %v443
        %v628 = vpop.f32.mrf.mxu0
        %v629 = vadd.f32 %v597, %v628
        %630 = vmatmul.f32.gmra.mxu0 %v445
        %v631 = vpop.f32.mrf.mxu0
        %v632 = vadd.f32 %v597, %v631
        %633 = vmatmul.f32.gmra.mxu0 %v447
        %v634 = vpop.f32.mrf.mxu0
        %v635 = vadd.f32 %v597, %v634
        %636 = vmatmul.f32.gmra.mxu0 %v449
        %v637 = vpop.f32.mrf.mxu0
        %v638 = vadd.f32 %v597, %v637
        %639 = vmatmul.f32.gmra.mxu0 %v451
        %v640 = vpop.f32.mrf.mxu0
        %v641 = vadd.f32 %v597, %v640
        %642 = vmatmul.f32.gmra.mxu0 %v453
        %v643 = vpop.f32.mrf.mxu0
        %v644 = vadd.f32 %v597, %v643
        %645 = vmatmul.f32.gmra.mxu0 %v455
        %v646 = vpop.f32.mrf.mxu0
        %v647 = vadd.f32 %v597, %v646
        %648 = vmatmul.f32.gmra.mxu0 %v457
        %v649 = vpop.f32.mrf.mxu0
        %v650 = vadd.f32 %v597, %v649
        %651 = vmatmul.f32.gmra.mxu0 %v459
        %v652 = vpop.f32.mrf.mxu0
        %v653 = vadd.f32 %v597, %v652
        %654 = vmatmul.f32.gmra.mxu0 %v461
        %v655 = vpop.f32.mrf.mxu0
        %v656 = vadd.f32 %v597, %v655
        %657 = vmatmul.f32.gmra.mxu0 %v463
        %v658 = vpop.f32.mrf.mxu0
        %v659 = vadd.f32 %v597, %v658
        %660 = vmatmul.f32.gmra.mxu0 %v465
        %v661 = vpop.f32.mrf.mxu0
        %v662 = vadd.f32 %v597, %v661
        %663 = vmatmul.f32.gmra.mxu0 %v467
        %v664 = vpop.f32.mrf.mxu0
        %v665 = vadd.f32 %v597, %v664
        %666 = vmatmul.f32.gmra.mxu0 %v469
        %v667 = vpop.f32.mrf.mxu0
        %v668 = vadd.f32 %v597, %v667
        %669 = vmatmul.f32.gmra.mxu0 %v471
        %v670 = vpop.f32.mrf.mxu0
        %v671 = vadd.f32 %v597, %v670
        %672 = vmatmul.f32.gmra.mxu0 %v473
        %v673 = vpop.f32.mrf.mxu0
        %v674 = vadd.f32 %v597, %v673
        %675 = vmatmul.f32.gmra.mxu0 %v475
        %v676 = vpop.f32.mrf.mxu0
        %v677 = vadd.f32 %v597, %v676
        %678 = vmatmul.f32.gmra.mxu0 %v477
        %v679 = vpop.f32.mrf.mxu0
        %v680 = vadd.f32 %v597, %v679
        %681 = vmatmul.f32.gmra.mxu0 %v479
        %v682 = vpop.f32.mrf.mxu0
        %v683 = vadd.f32 %v597, %v682
        %684 = vmatmul.f32.gmra.mxu0 %v481
        %v685 = vpop.f32.mrf.mxu0
        %v686 = vadd.f32 %v597, %v685
        %687 = vmatmul.f32.gmra.mxu0 %v483
        %v688 = vpop.f32.mrf.mxu0
        %v689 = vadd.f32 %v597, %v688
        %690 = vmatmul.f32.gmra.mxu0 %v485
        %v691 = vpop.f32.mrf.mxu0
        %v692 = vadd.f32 %v597, %v691
        %693 = vmatmul.f32.gmra.mxu0 %v487
        %v694 = vpop.f32.mrf.mxu0
        %v695 = vadd.f32 %v597, %v694
        %696 = vmatmul.f32.gmra.mxu0 %v489
        %v697 = vpop.f32.mrf.mxu0
        %v698 = vadd.f32 %v597, %v697
        %699 = vmatmul.f32.gmra.mxu0 %v491
        %v700 = vpop.f32.mrf.mxu0
        %v701 = vadd.f32 %v597, %v700
        %702 = vmatmul.f32.gmra.mxu0 %v493
        %v703 = vpop.f32.mrf.mxu0
        %v704 = vadd.f32 %v597, %v703
        %705 = vmatmul.f32.gmra.mxu0 %v495
        %v706 = vpop.f32.mrf.mxu0
        %v707 = vadd.f32 %v597, %v706
        %708 = vmatmul.f32.gmra.mxu0 %v497
        %v709 = vpop.f32.mrf.mxu0
        %v710 = vadd.f32 %v597, %v709
        %711 = vmatmul.f32.gmra.mxu0 %v499
        %v712 = vpop.f32.mrf.mxu0
        %v713 = vadd.f32 %v597, %v712
        %714 = vmatmul.f32.gmra.mxu0 %v501
        %v715 = vpop.f32.mrf.mxu0
        %v716 = vadd.f32 %v597, %v715
        %717 = vmatmul.f32.gmra.mxu0 %v503
        %v718 = vpop.f32.mrf.mxu0
        %v719 = vadd.f32 %v597, %v718
        %720 = vmatmul.f32.gmra.mxu0 %v505
        %v721 = vpop.f32.mrf.mxu0
        %v722 = vadd.f32 %v597, %v721
        %723 = vmatmul.f32.gmra.mxu0 %v507
        %v724 = vpop.f32.mrf.mxu0
        %v725 = vadd.f32 %v597, %v724
        %726 = vmatmul.f32.gmra.mxu0 %v509
        %v727 = vpop.f32.mrf.mxu0
        %v728 = vadd.f32 %v597, %v727
        %729 = vmatmul.f32.gmra.mxu0 %v511
        %v730 = vpop.f32.mrf.mxu0
        %v731 = vadd.f32 %v597, %v730
        %732 = vmatmul.f32.gmra.mxu0 %v513
        %v733 = vpop.f32.mrf.mxu0
        %v734 = vadd.f32 %v597, %v733
        %735 = vmatmul.f32.gmra.mxu0 %v515
        %v736 = vpop.f32.mrf.mxu0
        %v737 = vadd.f32 %v597, %v736
        %738 = vmatmul.f32.gmra.mxu0 %v517
        %v739 = vpop.f32.mrf.mxu0
        %v740 = vadd.f32 %v597, %v739
        %741 = vmatmul.f32.gmra.mxu0 %v519
        %v742 = vpop.f32.mrf.mxu0
        %v743 = vadd.f32 %v597, %v742
        %744 = vmatmul.f32.gmra.mxu0 %v521
        %v745 = vpop.f32.mrf.mxu0
        %v746 = vadd.f32 %v597, %v745
        %747 = vmatmul.f32.gmra.mxu0 %v523
        %v748 = vpop.f32.mrf.mxu0
        %v749 = vadd.f32 %v597, %v748
        %750 = vmatmul.f32.gmra.mxu0 %v525
        %v751 = vpop.f32.mrf.mxu0
        %v752 = vadd.f32 %v597, %v751
        %753 = vmatmul.f32.gmra.mxu0 %v527
        %v754 = vpop.f32.mrf.mxu0
        %v755 = vadd.f32 %v597, %v754
        %756 = vmatmul.f32.gmra.mxu0 %v529
        %v757 = vpop.f32.mrf.mxu0
        %v758 = vadd.f32 %v597, %v757
        %759 = vmatmul.f32.gmra.mxu0 %v531
        %v760 = vpop.f32.mrf.mxu0
        %v761 = vadd.f32 %v597, %v760
        %762 = vmatmul.f32.gmra.mxu0 %v533
        %v763 = vpop.f32.mrf.mxu0
        %v764 = vadd.f32 %v597, %v763
        %765 = vmatmul.f32.gmra.mxu0 %v535
        %v766 = vpop.f32.mrf.mxu0
        %v767 = vadd.f32 %v597, %v766
        %768 = vmatmul.f32.gmra.mxu0 %v537
        %v769 = vpop.f32.mrf.mxu0
        %v770 = vadd.f32 %v597, %v769
        %771 = vmatmul.f32.gmra.mxu0 %v539
        %v772 = vpop.f32.mrf.mxu0
        %v773 = vadd.f32 %v597, %v772
        %774 = vmatmul.f32.gmra.mxu0 %v541
        %v775 = vpop.f32.mrf.mxu0
        %v776 = vadd.f32 %v597, %v775
        %777 = vmatmul.f32.gmra.mxu0 %v543
        %v778 = vpop.f32.mrf.mxu0
        %v779 = vadd.f32 %v597, %v778
        %780 = vmatmul.f32.gmra.mxu0 %v545
        %v781 = vpop.f32.mrf.mxu0
        %v782 = vadd.f32 %v597, %v781
        %783 = vmatmul.f32.gmra.mxu0 %v547
        %v784 = vpop.f32.mrf.mxu0
        %v785 = vadd.f32 %v597, %v784
        %786 = vmatmul.f32.gmra.mxu0 %v549
        %v787 = vpop.f32.mrf.mxu0
        %v788 = vadd.f32 %v597, %v787
        %789 = vmatmul.f32.gmra.mxu0 %v551
        %v790 = vpop.f32.mrf.mxu0
        %v791 = vadd.f32 %v597, %v790
        %792 = vmatmul.f32.gmra.mxu0 %v553
        %v793 = vpop.f32.mrf.mxu0
        %v794 = vadd.f32 %v597, %v793
        %795 = vmatmul.f32.gmra.mxu0 %v555
        %v796 = vpop.f32.mrf.mxu0
        %v797 = vadd.f32 %v597, %v796
        %798 = vmatmul.f32.gmra.mxu0 %v557
        %v799 = vpop.f32.mrf.mxu0
        %v800 = vadd.f32 %v597, %v799
        %801 = vmatmul.f32.gmra.mxu0 %v559
        %v802 = vpop.f32.mrf.mxu0
        %v803 = vadd.f32 %v597, %v802
        %804 = vmatmul.f32.gmra.mxu0 %v561
        %v805 = vpop.f32.mrf.mxu0
        %v806 = vadd.f32 %v597, %v805
        %807 = vdwg.mxu0
        %808 = vmatpush.msra.mxu0 %v594
        %809 = vmatpush.msra.mxu0 %v593
        %810 = vmatpush.msra.mxu0 %v592
        %811 = vmatpush.msra.mxu0 %v591
        %812 = vmatpush.msra.mxu0 %v590
        %813 = vmatpush.msra.mxu0 %v589
        %814 = vmatpush.msra.mxu0 %v588
        %815 = vmatpush.msra.mxu0 %v587
        %816 = vmatpush.msra.mxu0 %v586
        %817 = vmatpush.msra.mxu0 %v585
        %818 = vmatpush.msra.mxu0 %v584
        %819 = vmatpush.msra.mxu0 %v583
        %820 = vmatpush.msra.mxu0 %v582
        %821 = vmatpush.msra.mxu0 %v581
        %822 = vmatpush.msra.mxu0 %v580
        %823 = vmatpush.msra.mxu0 %v579
        %824 = vmatmul.f32.gmra.mxu0 %v436
        %v825 = vpop.f32.mrf.mxu0
        %v826 = vadd.f32 %v617, %v825
        %827 = vmatmul.f32.gmra.mxu0 %v438
        %v828 = vpop.f32.mrf.mxu0
        %v829 = vadd.f32 %v620, %v828
        %830 = vmatmul.f32.gmra.mxu0 %v440
        %v831 = vpop.f32.mrf.mxu0
        %v832 = vadd.f32 %v623, %v831
        %833 = vmatmul.f32.gmra.mxu0 %v442
        %v834 = vpop.f32.mrf.mxu0
        %v835 = vadd.f32 %v626, %v834
        %836 = vmatmul.f32.gmra.mxu0 %v444
        %v837 = vpop.f32.mrf.mxu0
        %v838 = vadd.f32 %v629, %v837
        %839 = vmatmul.f32.gmra.mxu0 %v446
        %v840 = vpop.f32.mrf.mxu0
        %v841 = vadd.f32 %v632, %v840
        %842 = vmatmul.f32.gmra.mxu0 %v448
        %v843 = vpop.f32.mrf.mxu0
        %v844 = vadd.f32 %v635, %v843
        %845 = vmatmul.f32.gmra.mxu0 %v450
        %v846 = vpop.f32.mrf.mxu0
        %v847 = vadd.f32 %v638, %v846
        %848 = vmatmul.f32.gmra.mxu0 %v452
        %v849 = vpop.f32.mrf.mxu0
        %v850 = vadd.f32 %v641, %v849
        %851 = vmatmul.f32.gmra.mxu0 %v454
        %v852 = vpop.f32.mrf.mxu0
        %v853 = vadd.f32 %v644, %v852
        %854 = vmatmul.f32.gmra.mxu0 %v456
        %v855 = vpop.f32.mrf.mxu0
        %v856 = vadd.f32 %v647, %v855
        %857 = vmatmul.f32.gmra.mxu0 %v458
        %v858 = vpop.f32.mrf.mxu0
        %v859 = vadd.f32 %v650, %v858
        %860 = vmatmul.f32.gmra.mxu0 %v460
        %v861 = vpop.f32.mrf.mxu0
        %v862 = vadd.f32 %v653, %v861
        %863 = vmatmul.f32.gmra.mxu0 %v462
        %v864 = vpop.f32.mrf.mxu0
        %v865 = vadd.f32 %v656, %v864
        %866 = vmatmul.f32.gmra.mxu0 %v464
        %v867 = vpop.f32.mrf.mxu0
        %v868 = vadd.f32 %v659, %v867
        %869 = vmatmul.f32.gmra.mxu0 %v466
        %v870 = vpop.f32.mrf.mxu0
        %v871 = vadd.f32 %v662, %v870
        %872 = vmatmul.f32.gmra.mxu0 %v468
        %v873 = vpop.f32.mrf.mxu0
        %v874 = vadd.f32 %v665, %v873
        %875 = vmatmul.f32.gmra.mxu0 %v470
        %v876 = vpop.f32.mrf.mxu0
        %v877 = vadd.f32 %v668, %v876
        %878 = vmatmul.f32.gmra.mxu0 %v472
        %v879 = vpop.f32.mrf.mxu0
        %v880 = vadd.f32 %v671, %v879
        %881 = vmatmul.f32.gmra.mxu0 %v474
        %v882 = vpop.f32.mrf.mxu0
        %v883 = vadd.f32 %v674, %v882
        %884 = vmatmul.f32.gmra.mxu0 %v476
        %v885 = vpop.f32.mrf.mxu0
        %v886 = vadd.f32 %v677, %v885
        %887 = vmatmul.f32.gmra.mxu0 %v478
        %v888 = vpop.f32.mrf.mxu0
        %v889 = vadd.f32 %v680, %v888
        %890 = vmatmul.f32.gmra.mxu0 %v480
        %v891 = vpop.f32.mrf.mxu0
        %v892 = vadd.f32 %v683, %v891
        %893 = vmatmul.f32.gmra.mxu0 %v482
        %v894 = vpop.f32.mrf.mxu0
        %v895 = vadd.f32 %v686, %v894
        %896 = vmatmul.f32.gmra.mxu0 %v484
        %v897 = vpop.f32.mrf.mxu0
        %v898 = vadd.f32 %v689, %v897
        %899 = vmatmul.f32.gmra.mxu0 %v486
        %v900 = vpop.f32.mrf.mxu0
        %v901 = vadd.f32 %v692, %v900
        %902 = vmatmul.f32.gmra.mxu0 %v488
        %v903 = vpop.f32.mrf.mxu0
        %v904 = vadd.f32 %v695, %v903
        %905 = vmatmul.f32.gmra.mxu0 %v490
        %v906 = vpop.f32.mrf.mxu0
        %v907 = vadd.f32 %v698, %v906
        %908 = vmatmul.f32.gmra.mxu0 %v492
        %v909 = vpop.f32.mrf.mxu0
        %v910 = vadd.f32 %v701, %v909
        %911 = vmatmul.f32.gmra.mxu0 %v494
        %v912 = vpop.f32.mrf.mxu0
        %v913 = vadd.f32 %v704, %v912
        %914 = vmatmul.f32.gmra.mxu0 %v496
        %v915 = vpop.f32.mrf.mxu0
        %v916 = vadd.f32 %v707, %v915
        %917 = vmatmul.f32.gmra.mxu0 %v498
        %v918 = vpop.f32.mrf.mxu0
        %v919 = vadd.f32 %v710, %v918
        %920 = vmatmul.f32.gmra.mxu0 %v500
        %v921 = vpop.f32.mrf.mxu0
        %v922 = vadd.f32 %v713, %v921
        %923 = vmatmul.f32.gmra.mxu0 %v502
        %v924 = vpop.f32.mrf.mxu0
        %v925 = vadd.f32 %v716, %v924
        %926 = vmatmul.f32.gmra.mxu0 %v504
        %v927 = vpop.f32.mrf.mxu0
        %v928 = vadd.f32 %v719, %v927
        %929 = vmatmul.f32.gmra.mxu0 %v506
        %v930 = vpop.f32.mrf.mxu0
        %v931 = vadd.f32 %v722, %v930
        %932 = vmatmul.f32.gmra.mxu0 %v508
        %v933 = vpop.f32.mrf.mxu0
        %v934 = vadd.f32 %v725, %v933
        %935 = vmatmul.f32.gmra.mxu0 %v510
        %v936 = vpop.f32.mrf.mxu0
        %v937 = vadd.f32 %v728, %v936
        %938 = vmatmul.f32.gmra.mxu0 %v512
        %v939 = vpop.f32.mrf.mxu0
        %v940 = vadd.f32 %v731, %v939
        %941 = vmatmul.f32.gmra.mxu0 %v514
        %v942 = vpop.f32.mrf.mxu0
        %v943 = vadd.f32 %v734, %v942
        %944 = vmatmul.f32.gmra.mxu0 %v516
        %v945 = vpop.f32.mrf.mxu0
        %v946 = vadd.f32 %v737, %v945
        %947 = vmatmul.f32.gmra.mxu0 %v518
        %v948 = vpop.f32.mrf.mxu0
        %v949 = vadd.f32 %v740, %v948
        %950 = vmatmul.f32.gmra.mxu0 %v520
        %v951 = vpop.f32.mrf.mxu0
        %v952 = vadd.f32 %v743, %v951
        %953 = vmatmul.f32.gmra.mxu0 %v522
        %v954 = vpop.f32.mrf.mxu0
        %v955 = vadd.f32 %v746, %v954
        %956 = vmatmul.f32.gmra.mxu0 %v524
        %v957 = vpop.f32.mrf.mxu0
        %v958 = vadd.f32 %v749, %v957
        %959 = vmatmul.f32.gmra.mxu0 %v526
        %v960 = vpop.f32.mrf.mxu0
        %v961 = vadd.f32 %v752, %v960
        %962 = vmatmul.f32.gmra.mxu0 %v528
        %v963 = vpop.f32.mrf.mxu0
        %v964 = vadd.f32 %v755, %v963
        %965 = vmatmul.f32.gmra.mxu0 %v530
        %v966 = vpop.f32.mrf.mxu0
        %v967 = vadd.f32 %v758, %v966
        %968 = vmatmul.f32.gmra.mxu0 %v532
        %v969 = vpop.f32.mrf.mxu0
        %v970 = vadd.f32 %v761, %v969
        %971 = vmatmul.f32.gmra.mxu0 %v534
        %v972 = vpop.f32.mrf.mxu0
        %v973 = vadd.f32 %v764, %v972
        %974 = vmatmul.f32.gmra.mxu0 %v536
        %v975 = vpop.f32.mrf.mxu0
        %v976 = vadd.f32 %v767, %v975
        %977 = vmatmul.f32.gmra.mxu0 %v538
        %v978 = vpop.f32.mrf.mxu0
        %v979 = vadd.f32 %v770, %v978
        %980 = vmatmul.f32.gmra.mxu0 %v540
        %v981 = vpop.f32.mrf.mxu0
        %v982 = vadd.f32 %v773, %v981
        %983 = vmatmul.f32.gmra.mxu0 %v542
        %v984 = vpop.f32.mrf.mxu0
        %v985 = vadd.f32 %v776, %v984
        %986 = vmatmul.f32.gmra.mxu0 %v544
        %v987 = vpop.f32.mrf.mxu0
        %v988 = vadd.f32 %v779, %v987
        %989 = vmatmul.f32.gmra.mxu0 %v546
        %v990 = vpop.f32.mrf.mxu0
        %v991 = vadd.f32 %v782, %v990
        %992 = vmatmul.f32.gmra.mxu0 %v548
        %v993 = vpop.f32.mrf.mxu0
        %v994 = vadd.f32 %v785, %v993
        %995 = vmatmul.f32.gmra.mxu0 %v550
        %v996 = vpop.f32.mrf.mxu0
        %v997 = vadd.f32 %v788, %v996
        %998 = vmatmul.f32.gmra.mxu0 %v552
        %v999 = vpop.f32.mrf.mxu0
        %v1000 = vadd.f32 %v791, %v999
        %1001 = vmatmul.f32.gmra.mxu0 %v554
        %v1002 = vpop.f32.mrf.mxu0
        %v1003 = vadd.f32 %v794, %v1002
        %1004 = vmatmul.f32.gmra.mxu0 %v556
        %v1005 = vpop.f32.mrf.mxu0
        %v1006 = vadd.f32 %v797, %v1005
        %1007 = vmatmul.f32.gmra.mxu0 %v558
        %v1008 = vpop.f32.mrf.mxu0
        %v1009 = vadd.f32 %v800, %v1008
        %1010 = vmatmul.f32.gmra.mxu0 %v560
        %v1011 = vpop.f32.mrf.mxu0
        %v1012 = vadd.f32 %v803, %v1011
        %1013 = vmatmul.f32.gmra.mxu0 %v562
        %v1014 = vpop.f32.mrf.mxu0
        %v1015 = vadd.f32 %v806, %v1014
        %1016 = vdwg.mxu0
        %v1017 = vtanh.pop %v826
        %v1018 = vtanh.pop %v829
        %v1019 = vtanh.pop %v832
        %v1020 = vtanh.pop %v835
        %v1021 = vtanh.pop %v838
        %v1022 = vtanh.pop %v841
        %v1023 = vtanh.pop %v844
        %v1024 = vtanh.pop %v847
        %v1025 = vtanh.pop %v850
        %v1026 = vtanh.pop %v853
        %v1027 = vtanh.pop %v856
        %v1028 = vtanh.pop %v859
        %v1029 = vtanh.pop %v862
        %v1030 = vtanh.pop %v865
        %v1031 = vtanh.pop %v868
        %v1032 = vtanh.pop %v871
        %v1033 = vtanh.pop %v874
        %v1034 = vtanh.pop %v877
        %v1035 = vtanh.pop %v880
        %v1036 = vtanh.pop %v883
        %v1037 = vtanh.pop %v886
        %v1038 = vtanh.pop %v889
        %v1039 = vtanh.pop %v892
        %v1040 = vtanh.pop %v895
        %v1041 = vtanh.pop %v898
        %v1042 = vtanh.pop %v901
        %v1043 = vtanh.pop %v904
        %v1044 = vtanh.pop %v907
        %v1045 = vtanh.pop %v910
        %v1046 = vtanh.pop %v913
        %v1047 = vtanh.pop %v916
        %v1048 = vtanh.pop %v919
        %v1049 = vtanh.pop %v922
        %v1050 = vtanh.pop %v925
        %v1051 = vtanh.pop %v928
        %v1052 = vtanh.pop %v931
        %v1053 = vtanh.pop %v934
        %v1054 = vtanh.pop %v937
        %v1055 = vtanh.pop %v940
        %v1056 = vtanh.pop %v943
        %v1057 = vtanh.pop %v946
        %v1058 = vtanh.pop %v949
        %v1059 = vtanh.pop %v952
        %v1060 = vtanh.pop %v955
        %v1061 = vtanh.pop %v958
        %v1062 = vtanh.pop %v961
        %v1063 = vtanh.pop %v964
        %v1064 = vtanh.pop %v967
        %v1065 = vtanh.pop %v970
        %v1066 = vtanh.pop %v973
        %v1067 = vtanh.pop %v976
        %v1068 = vtanh.pop %v979
        %v1069 = vtanh.pop %v982
        %v1070 = vtanh.pop %v985
        %v1071 = vtanh.pop %v988
        %v1072 = vtanh.pop %v991
        %v1073 = vtanh.pop %v994
        %v1074 = vtanh.pop %v997
        %v1075 = vtanh.pop %v1000
        %v1076 = vtanh.pop %v1003
        %v1077 = vtanh.pop %v1006
        %v1078 = vtanh.pop %v1009
        %v1079 = vtanh.pop %v1012
        %v1080 = vtanh.pop %v1015
        %v1081 = vld [vmem:[%s5] sm:$0xff]
        %v1082 = vld [vmem:[%s5 + $0x8] sm:$0xff]
        %v1083 = vld [vmem:[%s5 + $0x10] sm:$0xff]
        %v1084 = vld [vmem:[%s5 + $0x18] sm:$0xff]
        %v1085 = vld [vmem:[%s5 + $0x20] sm:$0xff]
        %v1086 = vld [vmem:[%s5 + $0x28] sm:$0xff]
        %v1087 = vld [vmem:[%s5 + $0x30] sm:$0xff]
        %v1088 = vld [vmem:[%s5 + $0x38] sm:$0xff]
        %v1089 = vld [vmem:[%s5 + $0x40] sm:$0xff]
        %v1090 = vld [vmem:[%s5 + $0x48] sm:$0xff]
        %v1091 = vld [vmem:[%s5 + $0x50] sm:$0xff]
        %v1092 = vld [vmem:[%s5 + $0x58] sm:$0xff]
        %v1093 = vld [vmem:[%s5 + $0x60] sm:$0xff]
        %v1094 = vld [vmem:[%s5 + $0x68] sm:$0xff]
        %v1095 = vld [vmem:[%s5 + $0x70] sm:$0xff]
        %v1096 = vld [vmem:[%s5 + $0x78] sm:$0xff]
        %v1097 = vld [vmem:[%s6] sm:$0x1]
        %v1099 = vperm.slane %v1097, 0
        %1101 = vmatpush.msra.mxu0 %v1096
        %1102 = vmatpush.msra.mxu0 %v1095
        %1103 = vmatpush.msra.mxu0 %v1094
        %1104 = vmatpush.msra.mxu0 %v1093
        %1105 = vmatpush.msra.mxu0 %v1092
        %1106 = vmatpush.msra.mxu0 %v1091
        %1107 = vmatpush.msra.mxu0 %v1090
        %1108 = vmatpush.msra.mxu0 %v1089
        %1109 = vmatpush.msra.mxu0 %v1088
        %1110 = vmatpush.msra.mxu0 %v1087
        %1111 = vmatpush.msra.mxu0 %v1086
        %1112 = vmatpush.msra.mxu0 %v1085
        %1113 = vmatpush.msra.mxu0 %v1084
        %1114 = vmatpush.msra.mxu0 %v1083
        %1115 = vmatpush.msra.mxu0 %v1082
        %1116 = vmatpush.msra.mxu0 %v1081
        %1117 = vmatmul.f32.gmra.mxu0 %v1017
        %v1118 = vpop.f32.mrf.mxu0
        %v1119 = vadd.f32 %v1099, %v1118
        %1120 = vmatmul.f32.gmra.mxu0 %v1018
        %v1121 = vpop.f32.mrf.mxu0
        %v1122 = vadd.f32 %v1099, %v1121
        %1123 = vmatmul.f32.gmra.mxu0 %v1019
        %v1124 = vpop.f32.mrf.mxu0
        %v1125 = vadd.f32 %v1099, %v1124
        %1126 = vmatmul.f32.gmra.mxu0 %v1020
        %v1127 = vpop.f32.mrf.mxu0
        %v1128 = vadd.f32 %v1099, %v1127
        %1129 = vmatmul.f32.gmra.mxu0 %v1021
        %v1130 = vpop.f32.mrf.mxu0
        %v1131 = vadd.f32 %v1099, %v1130
        %1132 = vmatmul.f32.gmra.mxu0 %v1022
        %v1133 = vpop.f32.mrf.mxu0
        %v1134 = vadd.f32 %v1099, %v1133
        %1135 = vmatmul.f32.gmra.mxu0 %v1023
        %v1136 = vpop.f32.mrf.mxu0
        %v1137 = vadd.f32 %v1099, %v1136
        %1138 = vmatmul.f32.gmra.mxu0 %v1024
        %v1139 = vpop.f32.mrf.mxu0
        %v1140 = vadd.f32 %v1099, %v1139
        %1141 = vmatmul.f32.gmra.mxu0 %v1025
        %v1142 = vpop.f32.mrf.mxu0
        %v1143 = vadd.f32 %v1099, %v1142
        %1144 = vmatmul.f32.gmra.mxu0 %v1026
        %v1145 = vpop.f32.mrf.mxu0
        %v1146 = vadd.f32 %v1099, %v1145
        %1147 = vmatmul.f32.gmra.mxu0 %v1027
        %v1148 = vpop.f32.mrf.mxu0
        %v1149 = vadd.f32 %v1099, %v1148
        %1150 = vmatmul.f32.gmra.mxu0 %v1028
        %v1151 = vpop.f32.mrf.mxu0
        %v1152 = vadd.f32 %v1099, %v1151
        %1153 = vmatmul.f32.gmra.mxu0 %v1029
        %v1154 = vpop.f32.mrf.mxu0
        %v1155 = vadd.f32 %v1099, %v1154
        %1156 = vmatmul.f32.gmra.mxu0 %v1030
        %v1157 = vpop.f32.mrf.mxu0
        %v1158 = vadd.f32 %v1099, %v1157
        %1159 = vmatmul.f32.gmra.mxu0 %v1031
        %v1160 = vpop.f32.mrf.mxu0
        %v1161 = vadd.f32 %v1099, %v1160
        %1162 = vmatmul.f32.gmra.mxu0 %v1032
        %v1163 = vpop.f32.mrf.mxu0
        %v1164 = vadd.f32 %v1099, %v1163
        %1165 = vmatmul.f32.gmra.mxu0 %v1033
        %v1166 = vpop.f32.mrf.mxu0
        %v1167 = vadd.f32 %v1099, %v1166
        %1168 = vmatmul.f32.gmra.mxu0 %v1034
        %v1169 = vpop.f32.mrf.mxu0
        %v1170 = vadd.f32 %v1099, %v1169
        %1171 = vmatmul.f32.gmra.mxu0 %v1035
        %v1172 = vpop.f32.mrf.mxu0
        %v1173 = vadd.f32 %v1099, %v1172
        %1174 = vmatmul.f32.gmra.mxu0 %v1036
        %v1175 = vpop.f32.mrf.mxu0
        %v1176 = vadd.f32 %v1099, %v1175
        %1177 = vmatmul.f32.gmra.mxu0 %v1037
        %v1178 = vpop.f32.mrf.mxu0
        %v1179 = vadd.f32 %v1099, %v1178
        %1180 = vmatmul.f32.gmra.mxu0 %v1038
        %v1181 = vpop.f32.mrf.mxu0
        %v1182 = vadd.f32 %v1099, %v1181
        %1183 = vmatmul.f32.gmra.mxu0 %v1039
        %v1184 = vpop.f32.mrf.mxu0
        %v1185 = vadd.f32 %v1099, %v1184
        %1186 = vmatmul.f32.gmra.mxu0 %v1040
        %v1187 = vpop.f32.mrf.mxu0
        %v1188 = vadd.f32 %v1099, %v1187
        %1189 = vmatmul.f32.gmra.mxu0 %v1041
        %v1190 = vpop.f32.mrf.mxu0
        %v1191 = vadd.f32 %v1099, %v1190
        %1192 = vmatmul.f32.gmra.mxu0 %v1042
        %v1193 = vpop.f32.mrf.mxu0
        %v1194 = vadd.f32 %v1099, %v1193
        %1195 = vmatmul.f32.gmra.mxu0 %v1043
        %v1196 = vpop.f32.mrf.mxu0
        %v1197 = vadd.f32 %v1099, %v1196
        %1198 = vmatmul.f32.gmra.mxu0 %v1044
        %v1199 = vpop.f32.mrf.mxu0
        %v1200 = vadd.f32 %v1099, %v1199
        %1201 = vmatmul.f32.gmra.mxu0 %v1045
        %v1202 = vpop.f32.mrf.mxu0
        %v1203 = vadd.f32 %v1099, %v1202
        %1204 = vmatmul.f32.gmra.mxu0 %v1046
        %v1205 = vpop.f32.mrf.mxu0
        %v1206 = vadd.f32 %v1099, %v1205
        %1207 = vmatmul.f32.gmra.mxu0 %v1047
        %v1208 = vpop.f32.mrf.mxu0
        %v1209 = vadd.f32 %v1099, %v1208
        %1210 = vmatmul.f32.gmra.mxu0 %v1048
        %v1211 = vpop.f32.mrf.mxu0
        %v1212 = vadd.f32 %v1099, %v1211
        %1213 = vmatmul.f32.gmra.mxu0 %v1049
        %v1214 = vpop.f32.mrf.mxu0
        %v1215 = vadd.f32 %v1099, %v1214
        %1216 = vmatmul.f32.gmra.mxu0 %v1050
        %v1217 = vpop.f32.mrf.mxu0
        %v1218 = vadd.f32 %v1099, %v1217
        %1219 = vmatmul.f32.gmra.mxu0 %v1051
        %v1220 = vpop.f32.mrf.mxu0
        %v1221 = vadd.f32 %v1099, %v1220
        %1222 = vmatmul.f32.gmra.mxu0 %v1052
        %v1223 = vpop.f32.mrf.mxu0
        %v1224 = vadd.f32 %v1099, %v1223
        %1225 = vmatmul.f32.gmra.mxu0 %v1053
        %v1226 = vpop.f32.mrf.mxu0
        %v1227 = vadd.f32 %v1099, %v1226
        %1228 = vmatmul.f32.gmra.mxu0 %v1054
        %v1229 = vpop.f32.mrf.mxu0
        %v1230 = vadd.f32 %v1099, %v1229
        %1231 = vmatmul.f32.gmra.mxu0 %v1055
        %v1232 = vpop.f32.mrf.mxu0
        %v1233 = vadd.f32 %v1099, %v1232
        %1234 = vmatmul.f32.gmra.mxu0 %v1056
        %v1235 = vpop.f32.mrf.mxu0
        %v1236 = vadd.f32 %v1099, %v1235
        %1237 = vmatmul.f32.gmra.mxu0 %v1057
        %v1238 = vpop.f32.mrf.mxu0
        %v1239 = vadd.f32 %v1099, %v1238
        %1240 = vmatmul.f32.gmra.mxu0 %v1058
        %v1241 = vpop.f32.mrf.mxu0
        %v1242 = vadd.f32 %v1099, %v1241
        %1243 = vmatmul.f32.gmra.mxu0 %v1059
        %v1244 = vpop.f32.mrf.mxu0
        %v1245 = vadd.f32 %v1099, %v1244
        %1246 = vmatmul.f32.gmra.mxu0 %v1060
        %v1247 = vpop.f32.mrf.mxu0
        %v1248 = vadd.f32 %v1099, %v1247
        %1249 = vmatmul.f32.gmra.mxu0 %v1061
        %v1250 = vpop.f32.mrf.mxu0
        %v1251 = vadd.f32 %v1099, %v1250
        %1252 = vmatmul.f32.gmra.mxu0 %v1062
        %v1253 = vpop.f32.mrf.mxu0
        %v1254 = vadd.f32 %v1099, %v1253
        %1255 = vmatmul.f32.gmra.mxu0 %v1063
        %v1256 = vpop.f32.mrf.mxu0
        %v1257 = vadd.f32 %v1099, %v1256
        %1258 = vmatmul.f32.gmra.mxu0 %v1064
        %v1259 = vpop.f32.mrf.mxu0
        %v1260 = vadd.f32 %v1099, %v1259
        %1261 = vmatmul.f32.gmra.mxu0 %v1065
        %v1262 = vpop.f32.mrf.mxu0
        %v1263 = vadd.f32 %v1099, %v1262
        %1264 = vmatmul.f32.gmra.mxu0 %v1066
        %v1265 = vpop.f32.mrf.mxu0
        %v1266 = vadd.f32 %v1099, %v1265
        %1267 = vmatmul.f32.gmra.mxu0 %v1067
        %v1268 = vpop.f32.mrf.mxu0
        %v1269 = vadd.f32 %v1099, %v1268
        %1270 = vmatmul.f32.gmra.mxu0 %v1068
        %v1271 = vpop.f32.mrf.mxu0
        %v1272 = vadd.f32 %v1099, %v1271
        %1273 = vmatmul.f32.gmra.mxu0 %v1069
        %v1274 = vpop.f32.mrf.mxu0
        %v1275 = vadd.f32 %v1099, %v1274
        %1276 = vmatmul.f32.gmra.mxu0 %v1070
        %v1277 = vpop.f32.mrf.mxu0
        %v1278 = vadd.f32 %v1099, %v1277
        %1279 = vmatmul.f32.gmra.mxu0 %v1071
        %v1280 = vpop.f32.mrf.mxu0
        %v1281 = vadd.f32 %v1099, %v1280
        %1282 = vmatmul.f32.gmra.mxu0 %v1072
        %v1283 = vpop.f32.mrf.mxu0
        %v1284 = vadd.f32 %v1099, %v1283
        %1285 = vmatmul.f32.gmra.mxu0 %v1073
        %v1286 = vpop.f32.mrf.mxu0
        %v1287 = vadd.f32 %v1099, %v1286
        %1288 = vmatmul.f32.gmra.mxu0 %v1074
        %v1289 = vpop.f32.mrf.mxu0
        %v1290 = vadd.f32 %v1099, %v1289
        %1291 = vmatmul.f32.gmra.mxu0 %v1075
        %v1292 = vpop.f32.mrf.mxu0
        %v1293 = vadd.f32 %v1099, %v1292
        %1294 = vmatmul.f32.gmra.mxu0 %v1076
        %v1295 = vpop.f32.mrf.mxu0
        %v1296 = vadd.f32 %v1099, %v1295
        %1297 = vmatmul.f32.gmra.mxu0 %v1077
        %v1298 = vpop.f32.mrf.mxu0
        %v1299 = vadd.f32 %v1099, %v1298
        %1300 = vmatmul.f32.gmra.mxu0 %v1078
        %v1301 = vpop.f32.mrf.mxu0
        %v1302 = vadd.f32 %v1099, %v1301
        %1303 = vmatmul.f32.gmra.mxu0 %v1079
        %v1304 = vpop.f32.mrf.mxu0
        %v1305 = vadd.f32 %v1099, %v1304
        %1306 = vmatmul.f32.gmra.mxu0 %v1080
        %v1307 = vpop.f32.mrf.mxu0
        %v1308 = vadd.f32 %v1099, %v1307
        %1309 = vdwg.mxu0
        %v1310 = vmul.f32 %v1119, %v1119
        %v1311 = vmul.f32 %v1122, %v1122
        %v1312 = vmul.f32 %v1125, %v1125
        %v1313 = vmul.f32 %v1128, %v1128
        %v1314 = vmul.f32 %v1131, %v1131
        %v1315 = vmul.f32 %v1134, %v1134
        %v1316 = vmul.f32 %v1137, %v1137
        %v1317 = vmul.f32 %v1140, %v1140
        %v1318 = vmul.f32 %v1143, %v1143
        %v1319 = vmul.f32 %v1146, %v1146
        %v1320 = vmul.f32 %v1149, %v1149
        %v1321 = vmul.f32 %v1152, %v1152
        %v1322 = vmul.f32 %v1155, %v1155
        %v1323 = vmul.f32 %v1158, %v1158
        %v1324 = vmul.f32 %v1161, %v1161
        %v1325 = vmul.f32 %v1164, %v1164
        %v1326 = vmul.f32 %v1167, %v1167
        %v1327 = vmul.f32 %v1170, %v1170
        %v1328 = vmul.f32 %v1173, %v1173
        %v1329 = vmul.f32 %v1176, %v1176
        %v1330 = vmul.f32 %v1179, %v1179
        %v1331 = vmul.f32 %v1182, %v1182
        %v1332 = vmul.f32 %v1185, %v1185
        %v1333 = vmul.f32 %v1188, %v1188
        %v1334 = vmul.f32 %v1191, %v1191
        %v1335 = vmul.f32 %v1194, %v1194
        %v1336 = vmul.f32 %v1197, %v1197
        %v1337 = vmul.f32 %v1200, %v1200
        %v1338 = vmul.f32 %v1203, %v1203
        %v1339 = vmul.f32 %v1206, %v1206
        %v1340 = vmul.f32 %v1209, %v1209
        %v1341 = vmul.f32 %v1212, %v1212
        %v1342 = vmul.f32 %v1215, %v1215
        %v1343 = vmul.f32 %v1218, %v1218
        %v1344 = vmul.f32 %v1221, %v1221
        %v1345 = vmul.f32 %v1224, %v1224
        %v1346 = vmul.f32 %v1227, %v1227
        %v1347 = vmul.f32 %v1230, %v1230
        %v1348 = vmul.f32 %v1233, %v1233
        %v1349 = vmul.f32 %v1236, %v1236
        %v1350 = vmul.f32 %v1239, %v1239
        %v1351 = vmul.f32 %v1242, %v1242
        %v1352 = vmul.f32 %v1245, %v1245
        %v1353 = vmul.f32 %v1248, %v1248
        %v1354 = vmul.f32 %v1251, %v1251
        %v1355 = vmul.f32 %v1254, %v1254
        %v1356 = vmul.f32 %v1257, %v1257
        %v1357 = vmul.f32 %v1260, %v1260
        %v1358 = vmul.f32 %v1263, %v1263
        %v1359 = vmul.f32 %v1266, %v1266
        %v1360 = vmul.f32 %v1269, %v1269
        %v1361 = vmul.f32 %v1272, %v1272
        %v1362 = vmul.f32 %v1275, %v1275
        %v1363 = vmul.f32 %v1278, %v1278
        %v1364 = vmul.f32 %v1281, %v1281
        %v1365 = vmul.f32 %v1284, %v1284
        %v1366 = vmul.f32 %v1287, %v1287
        %v1367 = vmul.f32 %v1290, %v1290
        %v1368 = vmul.f32 %v1293, %v1293
        %v1369 = vmul.f32 %v1296, %v1296
        %v1370 = vmul.f32 %v1299, %v1299
        %v1371 = vmul.f32 %v1302, %v1302
        %v1372 = vmul.f32 %v1305, %v1305
        %v1373 = vmul.f32 %v1308, %v1308
        %vm1374 = vcmask 261120
        %v1375 = vsel %vm1374, %v1310, 0.0
        %1376 = vadd.xlane.f32.xlu0 %v1375
        %v1377 = vpop.xlane.xlu0 %1376
        %v1378 = vsel %vm1374, %v1311, 0.0
        %1379 = vadd.xlane.f32.xlu0 %v1378
        %v1380 = vpop.xlane.xlu0 %1379
        %v1381 = vsel %vm1374, %v1312, 0.0
        %1382 = vadd.xlane.f32.xlu0 %v1381
        %v1383 = vpop.xlane.xlu0 %1382
        %v1384 = vsel %vm1374, %v1313, 0.0
        %1385 = vadd.xlane.f32.xlu0 %v1384
        %v1386 = vpop.xlane.xlu0 %1385
        %v1387 = vsel %vm1374, %v1314, 0.0
        %1388 = vadd.xlane.f32.xlu0 %v1387
        %v1389 = vpop.xlane.xlu0 %1388
        %v1390 = vsel %vm1374, %v1315, 0.0
        %1391 = vadd.xlane.f32.xlu0 %v1390
        %v1392 = vpop.xlane.xlu0 %1391
        %v1393 = vsel %vm1374, %v1316, 0.0
        %1394 = vadd.xlane.f32.xlu0 %v1393
        %v1395 = vpop.xlane.xlu0 %1394
        %v1396 = vsel %vm1374, %v1317, 0.0
        %1397 = vadd.xlane.f32.xlu0 %v1396
        %v1398 = vpop.xlane.xlu0 %1397
        %v1399 = vsel %vm1374, %v1318, 0.0
        %1400 = vadd.xlane.f32.xlu0 %v1399
        %v1401 = vpop.xlane.xlu0 %1400
        %v1402 = vsel %vm1374, %v1319, 0.0
        %1403 = vadd.xlane.f32.xlu0 %v1402
        %v1404 = vpop.xlane.xlu0 %1403
        %v1405 = vsel %vm1374, %v1320, 0.0
        %1406 = vadd.xlane.f32.xlu0 %v1405
        %v1407 = vpop.xlane.xlu0 %1406
        %v1408 = vsel %vm1374, %v1321, 0.0
        %1409 = vadd.xlane.f32.xlu0 %v1408
        %v1410 = vpop.xlane.xlu0 %1409
        %v1411 = vsel %vm1374, %v1322, 0.0
        %1412 = vadd.xlane.f32.xlu0 %v1411
        %v1413 = vpop.xlane.xlu0 %1412
        %v1414 = vsel %vm1374, %v1323, 0.0
        %1415 = vadd.xlane.f32.xlu0 %v1414
        %v1416 = vpop.xlane.xlu0 %1415
        %v1417 = vsel %vm1374, %v1324, 0.0
        %1418 = vadd.xlane.f32.xlu0 %v1417
        %v1419 = vpop.xlane.xlu0 %1418
        %v1420 = vsel %vm1374, %v1325, 0.0
        %1421 = vadd.xlane.f32.xlu0 %v1420
        %v1422 = vpop.xlane.xlu0 %1421
        %v1423 = vsel %vm1374, %v1326, 0.0
        %1424 = vadd.xlane.f32.xlu0 %v1423
        %v1425 = vpop.xlane.xlu0 %1424
        %v1426 = vsel %vm1374, %v1327, 0.0
        %1427 = vadd.xlane.f32.xlu0 %v1426
        %v1428 = vpop.xlane.xlu0 %1427
        %v1429 = vsel %vm1374, %v1328, 0.0
        %1430 = vadd.xlane.f32.xlu0 %v1429
        %v1431 = vpop.xlane.xlu0 %1430
        %v1432 = vsel %vm1374, %v1329, 0.0
        %1433 = vadd.xlane.f32.xlu0 %v1432
        %v1434 = vpop.xlane.xlu0 %1433
        %v1435 = vsel %vm1374, %v1330, 0.0
        %1436 = vadd.xlane.f32.xlu0 %v1435
        %v1437 = vpop.xlane.xlu0 %1436
        %v1438 = vsel %vm1374, %v1331, 0.0
        %1439 = vadd.xlane.f32.xlu0 %v1438
        %v1440 = vpop.xlane.xlu0 %1439
        %v1441 = vsel %vm1374, %v1332, 0.0
        %1442 = vadd.xlane.f32.xlu0 %v1441
        %v1443 = vpop.xlane.xlu0 %1442
        %v1444 = vsel %vm1374, %v1333, 0.0
        %1445 = vadd.xlane.f32.xlu0 %v1444
        %v1446 = vpop.xlane.xlu0 %1445
        %v1447 = vsel %vm1374, %v1334, 0.0
        %1448 = vadd.xlane.f32.xlu0 %v1447
        %v1449 = vpop.xlane.xlu0 %1448
        %v1450 = vsel %vm1374, %v1335, 0.0
        %1451 = vadd.xlane.f32.xlu0 %v1450
        %v1452 = vpop.xlane.xlu0 %1451
        %v1453 = vsel %vm1374, %v1336, 0.0
        %1454 = vadd.xlane.f32.xlu0 %v1453
        %v1455 = vpop.xlane.xlu0 %1454
        %v1456 = vsel %vm1374, %v1337, 0.0
        %1457 = vadd.xlane.f32.xlu0 %v1456
        %v1458 = vpop.xlane.xlu0 %1457
        %v1459 = vsel %vm1374, %v1338, 0.0
        %1460 = vadd.xlane.f32.xlu0 %v1459
        %v1461 = vpop.xlane.xlu0 %1460
        %v1462 = vsel %vm1374, %v1339, 0.0
        %1463 = vadd.xlane.f32.xlu0 %v1462
        %v1464 = vpop.xlane.xlu0 %1463
        %v1465 = vsel %vm1374, %v1340, 0.0
        %1466 = vadd.xlane.f32.xlu0 %v1465
        %v1467 = vpop.xlane.xlu0 %1466
        %v1468 = vsel %vm1374, %v1341, 0.0
        %1469 = vadd.xlane.f32.xlu0 %v1468
        %v1470 = vpop.xlane.xlu0 %1469
        %v1471 = vsel %vm1374, %v1342, 0.0
        %1472 = vadd.xlane.f32.xlu0 %v1471
        %v1473 = vpop.xlane.xlu0 %1472
        %v1474 = vsel %vm1374, %v1343, 0.0
        %1475 = vadd.xlane.f32.xlu0 %v1474
        %v1476 = vpop.xlane.xlu0 %1475
        %v1477 = vsel %vm1374, %v1344, 0.0
        %1478 = vadd.xlane.f32.xlu0 %v1477
        %v1479 = vpop.xlane.xlu0 %1478
        %v1480 = vsel %vm1374, %v1345, 0.0
        %1481 = vadd.xlane.f32.xlu0 %v1480
        %v1482 = vpop.xlane.xlu0 %1481
        %v1483 = vsel %vm1374, %v1346, 0.0
        %1484 = vadd.xlane.f32.xlu0 %v1483
        %v1485 = vpop.xlane.xlu0 %1484
        %v1486 = vsel %vm1374, %v1347, 0.0
        %1487 = vadd.xlane.f32.xlu0 %v1486
        %v1488 = vpop.xlane.xlu0 %1487
        %v1489 = vsel %vm1374, %v1348, 0.0
        %1490 = vadd.xlane.f32.xlu0 %v1489
        %v1491 = vpop.xlane.xlu0 %1490
        %v1492 = vsel %vm1374, %v1349, 0.0
        %1493 = vadd.xlane.f32.xlu0 %v1492
        %v1494 = vpop.xlane.xlu0 %1493
        %v1495 = vsel %vm1374, %v1350, 0.0
        %1496 = vadd.xlane.f32.xlu0 %v1495
        %v1497 = vpop.xlane.xlu0 %1496
        %v1498 = vsel %vm1374, %v1351, 0.0
        %1499 = vadd.xlane.f32.xlu0 %v1498
        %v1500 = vpop.xlane.xlu0 %1499
        %v1501 = vsel %vm1374, %v1352, 0.0
        %1502 = vadd.xlane.f32.xlu0 %v1501
        %v1503 = vpop.xlane.xlu0 %1502
        %v1504 = vsel %vm1374, %v1353, 0.0
        %1505 = vadd.xlane.f32.xlu0 %v1504
        %v1506 = vpop.xlane.xlu0 %1505
        %v1507 = vsel %vm1374, %v1354, 0.0
        %1508 = vadd.xlane.f32.xlu0 %v1507
        %v1509 = vpop.xlane.xlu0 %1508
        %v1510 = vsel %vm1374, %v1355, 0.0
        %1511 = vadd.xlane.f32.xlu0 %v1510
        %v1512 = vpop.xlane.xlu0 %1511
        %v1513 = vsel %vm1374, %v1356, 0.0
        %1514 = vadd.xlane.f32.xlu0 %v1513
        %v1515 = vpop.xlane.xlu0 %1514
        %v1516 = vsel %vm1374, %v1357, 0.0
        %1517 = vadd.xlane.f32.xlu0 %v1516
        %v1518 = vpop.xlane.xlu0 %1517
        %v1519 = vsel %vm1374, %v1358, 0.0
        %1520 = vadd.xlane.f32.xlu0 %v1519
        %v1521 = vpop.xlane.xlu0 %1520
        %v1522 = vsel %vm1374, %v1359, 0.0
        %1523 = vadd.xlane.f32.xlu0 %v1522
        %v1524 = vpop.xlane.xlu0 %1523
        %v1525 = vsel %vm1374, %v1360, 0.0
        %1526 = vadd.xlane.f32.xlu0 %v1525
        %v1527 = vpop.xlane.xlu0 %1526
        %v1528 = vsel %vm1374, %v1361, 0.0
        %1529 = vadd.xlane.f32.xlu0 %v1528
        %v1530 = vpop.xlane.xlu0 %1529
        %v1531 = vsel %vm1374, %v1362, 0.0
        %1532 = vadd.xlane.f32.xlu0 %v1531
        %v1533 = vpop.xlane.xlu0 %1532
        %v1534 = vsel %vm1374, %v1363, 0.0
        %1535 = vadd.xlane.f32.xlu0 %v1534
        %v1536 = vpop.xlane.xlu0 %1535
        %v1537 = vsel %vm1374, %v1364, 0.0
        %1538 = vadd.xlane.f32.xlu0 %v1537
        %v1539 = vpop.xlane.xlu0 %1538
        %v1540 = vsel %vm1374, %v1365, 0.0
        %1541 = vadd.xlane.f32.xlu0 %v1540
        %v1542 = vpop.xlane.xlu0 %1541
        %v1543 = vsel %vm1374, %v1366, 0.0
        %1544 = vadd.xlane.f32.xlu0 %v1543
        %v1545 = vpop.xlane.xlu0 %1544
        %v1546 = vsel %vm1374, %v1367, 0.0
        %1547 = vadd.xlane.f32.xlu0 %v1546
        %v1548 = vpop.xlane.xlu0 %1547
        %v1549 = vsel %vm1374, %v1368, 0.0
        %1550 = vadd.xlane.f32.xlu0 %v1549
        %v1551 = vpop.xlane.xlu0 %1550
        %v1552 = vsel %vm1374, %v1369, 0.0
        %1553 = vadd.xlane.f32.xlu0 %v1552
        %v1554 = vpop.xlane.xlu0 %1553
        %v1555 = vsel %vm1374, %v1370, 0.0
        %1556 = vadd.xlane.f32.xlu0 %v1555
        %v1557 = vpop.xlane.xlu0 %1556
        %v1558 = vsel %vm1374, %v1371, 0.0
        %1559 = vadd.xlane.f32.xlu0 %v1558
        %v1560 = vpop.xlane.xlu0 %1559
        %v1561 = vsel %vm1374, %v1372, 0.0
        %1562 = vadd.xlane.f32.xlu0 %v1561
        %v1563 = vpop.xlane.xlu0 %1562
        %v1564 = vsel %vm1374, %v1373, 0.0
        %1565 = vadd.xlane.f32.xlu0 %v1564
        %v1566 = vpop.xlane.xlu0 %1565
        %v1567 = vmax.f32 %v1377, 1e-24
        %v1568 = vmax.f32 %v1380, 1e-24
        %v1569 = vmax.f32 %v1383, 1e-24
        %v1570 = vmax.f32 %v1386, 1e-24
        %v1571 = vmax.f32 %v1389, 1e-24
        %v1572 = vmax.f32 %v1392, 1e-24
        %v1573 = vmax.f32 %v1395, 1e-24
        %v1574 = vmax.f32 %v1398, 1e-24
        %v1575 = vmax.f32 %v1401, 1e-24
        %v1576 = vmax.f32 %v1404, 1e-24
        %v1577 = vmax.f32 %v1407, 1e-24
        %v1578 = vmax.f32 %v1410, 1e-24
        %v1579 = vmax.f32 %v1413, 1e-24
        %v1580 = vmax.f32 %v1416, 1e-24
        %v1581 = vmax.f32 %v1419, 1e-24
        %v1582 = vmax.f32 %v1422, 1e-24
        %v1583 = vmax.f32 %v1425, 1e-24
        %v1584 = vmax.f32 %v1428, 1e-24
        %v1585 = vmax.f32 %v1431, 1e-24
        %v1586 = vmax.f32 %v1434, 1e-24
        %v1587 = vmax.f32 %v1437, 1e-24
        %v1588 = vmax.f32 %v1440, 1e-24
        %v1589 = vmax.f32 %v1443, 1e-24
        %v1590 = vmax.f32 %v1446, 1e-24
        %v1591 = vmax.f32 %v1449, 1e-24
        %v1592 = vmax.f32 %v1452, 1e-24
        %v1593 = vmax.f32 %v1455, 1e-24
        %v1594 = vmax.f32 %v1458, 1e-24
        %v1595 = vmax.f32 %v1461, 1e-24
        %v1596 = vmax.f32 %v1464, 1e-24
        %v1597 = vmax.f32 %v1467, 1e-24
        %v1598 = vmax.f32 %v1470, 1e-24
        %v1599 = vmax.f32 %v1473, 1e-24
        %v1600 = vmax.f32 %v1476, 1e-24
        %v1601 = vmax.f32 %v1479, 1e-24
        %v1602 = vmax.f32 %v1482, 1e-24
        %v1603 = vmax.f32 %v1485, 1e-24
        %v1604 = vmax.f32 %v1488, 1e-24
        %v1605 = vmax.f32 %v1491, 1e-24
        %v1606 = vmax.f32 %v1494, 1e-24
        %v1607 = vmax.f32 %v1497, 1e-24
        %v1608 = vmax.f32 %v1500, 1e-24
        %v1609 = vmax.f32 %v1503, 1e-24
        %v1610 = vmax.f32 %v1506, 1e-24
        %v1611 = vmax.f32 %v1509, 1e-24
        %v1612 = vmax.f32 %v1512, 1e-24
        %v1613 = vmax.f32 %v1515, 1e-24
        %v1614 = vmax.f32 %v1518, 1e-24
        %v1615 = vmax.f32 %v1521, 1e-24
        %v1616 = vmax.f32 %v1524, 1e-24
        %v1617 = vmax.f32 %v1527, 1e-24
        %v1618 = vmax.f32 %v1530, 1e-24
        %v1619 = vmax.f32 %v1533, 1e-24
        %v1620 = vmax.f32 %v1536, 1e-24
        %v1621 = vmax.f32 %v1539, 1e-24
        %v1622 = vmax.f32 %v1542, 1e-24
        %v1623 = vmax.f32 %v1545, 1e-24
        %v1624 = vmax.f32 %v1548, 1e-24
        %v1625 = vmax.f32 %v1551, 1e-24
        %v1626 = vmax.f32 %v1554, 1e-24
        %v1627 = vmax.f32 %v1557, 1e-24
        %v1628 = vmax.f32 %v1560, 1e-24
        %v1629 = vmax.f32 %v1563, 1e-24
        %v1630 = vmax.f32 %v1566, 1e-24
        %v1631 = vrsqrt.pop %v1567
        %v1632 = vmul.f32 %v1631, %v1567
        %v1633 = vmul.f32 %v1632, %v1631
        %v1634 = vmul.f32 0.5, %v1633
        %v1635 = vsub.f32 1.5, %v1634
        %v1636 = vmul.f32 %v1631, %v1635
        %vm1637 = vweird.f32 %v1567
        %vm1638 = vweird.f32 %v1631
        %vm1639 = vmor %vm1637, %vm1638
        %v1640 = vsel %vm1639, %v1631, %v1636
        %v1641 = vrsqrt.pop %v1568
        %v1642 = vmul.f32 %v1641, %v1568
        %v1643 = vmul.f32 %v1642, %v1641
        %v1644 = vmul.f32 0.5, %v1643
        %v1645 = vsub.f32 1.5, %v1644
        %v1646 = vmul.f32 %v1641, %v1645
        %vm1647 = vweird.f32 %v1568
        %vm1648 = vweird.f32 %v1641
        %vm1649 = vmor %vm1647, %vm1648
        %v1650 = vsel %vm1649, %v1641, %v1646
        %v1651 = vrsqrt.pop %v1569
        %v1652 = vmul.f32 %v1651, %v1569
        %v1653 = vmul.f32 %v1652, %v1651
        %v1654 = vmul.f32 0.5, %v1653
        %v1655 = vsub.f32 1.5, %v1654
        %v1656 = vmul.f32 %v1651, %v1655
        %vm1657 = vweird.f32 %v1569
        %vm1658 = vweird.f32 %v1651
        %vm1659 = vmor %vm1657, %vm1658
        %v1660 = vsel %vm1659, %v1651, %v1656
        %v1661 = vrsqrt.pop %v1570
        %v1662 = vmul.f32 %v1661, %v1570
        %v1663 = vmul.f32 %v1662, %v1661
        %v1664 = vmul.f32 0.5, %v1663
        %v1665 = vsub.f32 1.5, %v1664
        %v1666 = vmul.f32 %v1661, %v1665
        %vm1667 = vweird.f32 %v1570
        %vm1668 = vweird.f32 %v1661
        %vm1669 = vmor %vm1667, %vm1668
        %v1670 = vsel %vm1669, %v1661, %v1666
        %v1671 = vrsqrt.pop %v1571
        %v1672 = vmul.f32 %v1671, %v1571
        %v1673 = vmul.f32 %v1672, %v1671
        %v1674 = vmul.f32 0.5, %v1673
        %v1675 = vsub.f32 1.5, %v1674
        %v1676 = vmul.f32 %v1671, %v1675
        %vm1677 = vweird.f32 %v1571
        %vm1678 = vweird.f32 %v1671
        %vm1679 = vmor %vm1677, %vm1678
        %v1680 = vsel %vm1679, %v1671, %v1676
        %v1681 = vrsqrt.pop %v1572
        %v1682 = vmul.f32 %v1681, %v1572
        %v1683 = vmul.f32 %v1682, %v1681
        %v1684 = vmul.f32 0.5, %v1683
        %v1685 = vsub.f32 1.5, %v1684
        %v1686 = vmul.f32 %v1681, %v1685
        %vm1687 = vweird.f32 %v1572
        %vm1688 = vweird.f32 %v1681
        %vm1689 = vmor %vm1687, %vm1688
        %v1690 = vsel %vm1689, %v1681, %v1686
        %v1691 = vrsqrt.pop %v1573
        %v1692 = vmul.f32 %v1691, %v1573
        %v1693 = vmul.f32 %v1692, %v1691
        %v1694 = vmul.f32 0.5, %v1693
        %v1695 = vsub.f32 1.5, %v1694
        %v1696 = vmul.f32 %v1691, %v1695
        %vm1697 = vweird.f32 %v1573
        %vm1698 = vweird.f32 %v1691
        %vm1699 = vmor %vm1697, %vm1698
        %v1700 = vsel %vm1699, %v1691, %v1696
        %v1701 = vrsqrt.pop %v1574
        %v1702 = vmul.f32 %v1701, %v1574
        %v1703 = vmul.f32 %v1702, %v1701
        %v1704 = vmul.f32 0.5, %v1703
        %v1705 = vsub.f32 1.5, %v1704
        %v1706 = vmul.f32 %v1701, %v1705
        %vm1707 = vweird.f32 %v1574
        %vm1708 = vweird.f32 %v1701
        %vm1709 = vmor %vm1707, %vm1708
        %v1710 = vsel %vm1709, %v1701, %v1706
        %v1711 = vrsqrt.pop %v1575
        %v1712 = vmul.f32 %v1711, %v1575
        %v1713 = vmul.f32 %v1712, %v1711
        %v1714 = vmul.f32 0.5, %v1713
        %v1715 = vsub.f32 1.5, %v1714
        %v1716 = vmul.f32 %v1711, %v1715
        %vm1717 = vweird.f32 %v1575
        %vm1718 = vweird.f32 %v1711
        %vm1719 = vmor %vm1717, %vm1718
        %v1720 = vsel %vm1719, %v1711, %v1716
        %v1721 = vrsqrt.pop %v1576
        %v1722 = vmul.f32 %v1721, %v1576
        %v1723 = vmul.f32 %v1722, %v1721
        %v1724 = vmul.f32 0.5, %v1723
        %v1725 = vsub.f32 1.5, %v1724
        %v1726 = vmul.f32 %v1721, %v1725
        %vm1727 = vweird.f32 %v1576
        %vm1728 = vweird.f32 %v1721
        %vm1729 = vmor %vm1727, %vm1728
        %v1730 = vsel %vm1729, %v1721, %v1726
        %v1731 = vrsqrt.pop %v1577
        %v1732 = vmul.f32 %v1731, %v1577
        %v1733 = vmul.f32 %v1732, %v1731
        %v1734 = vmul.f32 0.5, %v1733
        %v1735 = vsub.f32 1.5, %v1734
        %v1736 = vmul.f32 %v1731, %v1735
        %vm1737 = vweird.f32 %v1577
        %vm1738 = vweird.f32 %v1731
        %vm1739 = vmor %vm1737, %vm1738
        %v1740 = vsel %vm1739, %v1731, %v1736
        %v1741 = vrsqrt.pop %v1578
        %v1742 = vmul.f32 %v1741, %v1578
        %v1743 = vmul.f32 %v1742, %v1741
        %v1744 = vmul.f32 0.5, %v1743
        %v1745 = vsub.f32 1.5, %v1744
        %v1746 = vmul.f32 %v1741, %v1745
        %vm1747 = vweird.f32 %v1578
        %vm1748 = vweird.f32 %v1741
        %vm1749 = vmor %vm1747, %vm1748
        %v1750 = vsel %vm1749, %v1741, %v1746
        %v1751 = vrsqrt.pop %v1579
        %v1752 = vmul.f32 %v1751, %v1579
        %v1753 = vmul.f32 %v1752, %v1751
        %v1754 = vmul.f32 0.5, %v1753
        %v1755 = vsub.f32 1.5, %v1754
        %v1756 = vmul.f32 %v1751, %v1755
        %vm1757 = vweird.f32 %v1579
        %vm1758 = vweird.f32 %v1751
        %vm1759 = vmor %vm1757, %vm1758
        %v1760 = vsel %vm1759, %v1751, %v1756
        %v1761 = vrsqrt.pop %v1580
        %v1762 = vmul.f32 %v1761, %v1580
        %v1763 = vmul.f32 %v1762, %v1761
        %v1764 = vmul.f32 0.5, %v1763
        %v1765 = vsub.f32 1.5, %v1764
        %v1766 = vmul.f32 %v1761, %v1765
        %vm1767 = vweird.f32 %v1580
        %vm1768 = vweird.f32 %v1761
        %vm1769 = vmor %vm1767, %vm1768
        %v1770 = vsel %vm1769, %v1761, %v1766
        %v1771 = vrsqrt.pop %v1581
        %v1772 = vmul.f32 %v1771, %v1581
        %v1773 = vmul.f32 %v1772, %v1771
        %v1774 = vmul.f32 0.5, %v1773
        %v1775 = vsub.f32 1.5, %v1774
        %v1776 = vmul.f32 %v1771, %v1775
        %vm1777 = vweird.f32 %v1581
        %vm1778 = vweird.f32 %v1771
        %vm1779 = vmor %vm1777, %vm1778
        %v1780 = vsel %vm1779, %v1771, %v1776
        %v1781 = vrsqrt.pop %v1582
        %v1782 = vmul.f32 %v1781, %v1582
        %v1783 = vmul.f32 %v1782, %v1781
        %v1784 = vmul.f32 0.5, %v1783
        %v1785 = vsub.f32 1.5, %v1784
        %v1786 = vmul.f32 %v1781, %v1785
        %vm1787 = vweird.f32 %v1582
        %vm1788 = vweird.f32 %v1781
        %vm1789 = vmor %vm1787, %vm1788
        %v1790 = vsel %vm1789, %v1781, %v1786
        %v1791 = vrsqrt.pop %v1583
        %v1792 = vmul.f32 %v1791, %v1583
        %v1793 = vmul.f32 %v1792, %v1791
        %v1794 = vmul.f32 0.5, %v1793
        %v1795 = vsub.f32 1.5, %v1794
        %v1796 = vmul.f32 %v1791, %v1795
        %vm1797 = vweird.f32 %v1583
        %vm1798 = vweird.f32 %v1791
        %vm1799 = vmor %vm1797, %vm1798
        %v1800 = vsel %vm1799, %v1791, %v1796
        %v1801 = vrsqrt.pop %v1584
        %v1802 = vmul.f32 %v1801, %v1584
        %v1803 = vmul.f32 %v1802, %v1801
        %v1804 = vmul.f32 0.5, %v1803
        %v1805 = vsub.f32 1.5, %v1804
        %v1806 = vmul.f32 %v1801, %v1805
        %vm1807 = vweird.f32 %v1584
        %vm1808 = vweird.f32 %v1801
        %vm1809 = vmor %vm1807, %vm1808
        %v1810 = vsel %vm1809, %v1801, %v1806
        %v1811 = vrsqrt.pop %v1585
        %v1812 = vmul.f32 %v1811, %v1585
        %v1813 = vmul.f32 %v1812, %v1811
        %v1814 = vmul.f32 0.5, %v1813
        %v1815 = vsub.f32 1.5, %v1814
        %v1816 = vmul.f32 %v1811, %v1815
        %vm1817 = vweird.f32 %v1585
        %vm1818 = vweird.f32 %v1811
        %vm1819 = vmor %vm1817, %vm1818
        %v1820 = vsel %vm1819, %v1811, %v1816
        %v1821 = vrsqrt.pop %v1586
        %v1822 = vmul.f32 %v1821, %v1586
        %v1823 = vmul.f32 %v1822, %v1821
        %v1824 = vmul.f32 0.5, %v1823
        %v1825 = vsub.f32 1.5, %v1824
        %v1826 = vmul.f32 %v1821, %v1825
        %vm1827 = vweird.f32 %v1586
        %vm1828 = vweird.f32 %v1821
        %vm1829 = vmor %vm1827, %vm1828
        %v1830 = vsel %vm1829, %v1821, %v1826
        %v1831 = vrsqrt.pop %v1587
        %v1832 = vmul.f32 %v1831, %v1587
        %v1833 = vmul.f32 %v1832, %v1831
        %v1834 = vmul.f32 0.5, %v1833
        %v1835 = vsub.f32 1.5, %v1834
        %v1836 = vmul.f32 %v1831, %v1835
        %vm1837 = vweird.f32 %v1587
        %vm1838 = vweird.f32 %v1831
        %vm1839 = vmor %vm1837, %vm1838
        %v1840 = vsel %vm1839, %v1831, %v1836
        %v1841 = vrsqrt.pop %v1588
        %v1842 = vmul.f32 %v1841, %v1588
        %v1843 = vmul.f32 %v1842, %v1841
        %v1844 = vmul.f32 0.5, %v1843
        %v1845 = vsub.f32 1.5, %v1844
        %v1846 = vmul.f32 %v1841, %v1845
        %vm1847 = vweird.f32 %v1588
        %vm1848 = vweird.f32 %v1841
        %vm1849 = vmor %vm1847, %vm1848
        %v1850 = vsel %vm1849, %v1841, %v1846
        %v1851 = vrsqrt.pop %v1589
        %v1852 = vmul.f32 %v1851, %v1589
        %v1853 = vmul.f32 %v1852, %v1851
        %v1854 = vmul.f32 0.5, %v1853
        %v1855 = vsub.f32 1.5, %v1854
        %v1856 = vmul.f32 %v1851, %v1855
        %vm1857 = vweird.f32 %v1589
        %vm1858 = vweird.f32 %v1851
        %vm1859 = vmor %vm1857, %vm1858
        %v1860 = vsel %vm1859, %v1851, %v1856
        %v1861 = vrsqrt.pop %v1590
        %v1862 = vmul.f32 %v1861, %v1590
        %v1863 = vmul.f32 %v1862, %v1861
        %v1864 = vmul.f32 0.5, %v1863
        %v1865 = vsub.f32 1.5, %v1864
        %v1866 = vmul.f32 %v1861, %v1865
        %vm1867 = vweird.f32 %v1590
        %vm1868 = vweird.f32 %v1861
        %vm1869 = vmor %vm1867, %vm1868
        %v1870 = vsel %vm1869, %v1861, %v1866
        %v1871 = vrsqrt.pop %v1591
        %v1872 = vmul.f32 %v1871, %v1591
        %v1873 = vmul.f32 %v1872, %v1871
        %v1874 = vmul.f32 0.5, %v1873
        %v1875 = vsub.f32 1.5, %v1874
        %v1876 = vmul.f32 %v1871, %v1875
        %vm1877 = vweird.f32 %v1591
        %vm1878 = vweird.f32 %v1871
        %vm1879 = vmor %vm1877, %vm1878
        %v1880 = vsel %vm1879, %v1871, %v1876
        %v1881 = vrsqrt.pop %v1592
        %v1882 = vmul.f32 %v1881, %v1592
        %v1883 = vmul.f32 %v1882, %v1881
        %v1884 = vmul.f32 0.5, %v1883
        %v1885 = vsub.f32 1.5, %v1884
        %v1886 = vmul.f32 %v1881, %v1885
        %vm1887 = vweird.f32 %v1592
        %vm1888 = vweird.f32 %v1881
        %vm1889 = vmor %vm1887, %vm1888
        %v1890 = vsel %vm1889, %v1881, %v1886
        %v1891 = vrsqrt.pop %v1593
        %v1892 = vmul.f32 %v1891, %v1593
        %v1893 = vmul.f32 %v1892, %v1891
        %v1894 = vmul.f32 0.5, %v1893
        %v1895 = vsub.f32 1.5, %v1894
        %v1896 = vmul.f32 %v1891, %v1895
        %vm1897 = vweird.f32 %v1593
        %vm1898 = vweird.f32 %v1891
        %vm1899 = vmor %vm1897, %vm1898
        %v1900 = vsel %vm1899, %v1891, %v1896
        %v1901 = vrsqrt.pop %v1594
        %v1902 = vmul.f32 %v1901, %v1594
        %v1903 = vmul.f32 %v1902, %v1901
        %v1904 = vmul.f32 0.5, %v1903
        %v1905 = vsub.f32 1.5, %v1904
        %v1906 = vmul.f32 %v1901, %v1905
        %vm1907 = vweird.f32 %v1594
        %vm1908 = vweird.f32 %v1901
        %vm1909 = vmor %vm1907, %vm1908
        %v1910 = vsel %vm1909, %v1901, %v1906
        %v1911 = vrsqrt.pop %v1595
        %v1912 = vmul.f32 %v1911, %v1595
        %v1913 = vmul.f32 %v1912, %v1911
        %v1914 = vmul.f32 0.5, %v1913
        %v1915 = vsub.f32 1.5, %v1914
        %v1916 = vmul.f32 %v1911, %v1915
        %vm1917 = vweird.f32 %v1595
        %vm1918 = vweird.f32 %v1911
        %vm1919 = vmor %vm1917, %vm1918
        %v1920 = vsel %vm1919, %v1911, %v1916
        %v1921 = vrsqrt.pop %v1596
        %v1922 = vmul.f32 %v1921, %v1596
        %v1923 = vmul.f32 %v1922, %v1921
        %v1924 = vmul.f32 0.5, %v1923
        %v1925 = vsub.f32 1.5, %v1924
        %v1926 = vmul.f32 %v1921, %v1925
        %vm1927 = vweird.f32 %v1596
        %vm1928 = vweird.f32 %v1921
        %vm1929 = vmor %vm1927, %vm1928
        %v1930 = vsel %vm1929, %v1921, %v1926
        %v1931 = vrsqrt.pop %v1597
        %v1932 = vmul.f32 %v1931, %v1597
        %v1933 = vmul.f32 %v1932, %v1931
        %v1934 = vmul.f32 0.5, %v1933
        %v1935 = vsub.f32 1.5, %v1934
        %v1936 = vmul.f32 %v1931, %v1935
        %vm1937 = vweird.f32 %v1597
        %vm1938 = vweird.f32 %v1931
        %vm1939 = vmor %vm1937, %vm1938
        %v1940 = vsel %vm1939, %v1931, %v1936
        %v1941 = vrsqrt.pop %v1598
        %v1942 = vmul.f32 %v1941, %v1598
        %v1943 = vmul.f32 %v1942, %v1941
        %v1944 = vmul.f32 0.5, %v1943
        %v1945 = vsub.f32 1.5, %v1944
        %v1946 = vmul.f32 %v1941, %v1945
        %vm1947 = vweird.f32 %v1598
        %vm1948 = vweird.f32 %v1941
        %vm1949 = vmor %vm1947, %vm1948
        %v1950 = vsel %vm1949, %v1941, %v1946
        %v1951 = vrsqrt.pop %v1599
        %v1952 = vmul.f32 %v1951, %v1599
        %v1953 = vmul.f32 %v1952, %v1951
        %v1954 = vmul.f32 0.5, %v1953
        %v1955 = vsub.f32 1.5, %v1954
        %v1956 = vmul.f32 %v1951, %v1955
        %vm1957 = vweird.f32 %v1599
        %vm1958 = vweird.f32 %v1951
        %vm1959 = vmor %vm1957, %vm1958
        %v1960 = vsel %vm1959, %v1951, %v1956
        %v1961 = vrsqrt.pop %v1600
        %v1962 = vmul.f32 %v1961, %v1600
        %v1963 = vmul.f32 %v1962, %v1961
        %v1964 = vmul.f32 0.5, %v1963
        %v1965 = vsub.f32 1.5, %v1964
        %v1966 = vmul.f32 %v1961, %v1965
        %vm1967 = vweird.f32 %v1600
        %vm1968 = vweird.f32 %v1961
        %vm1969 = vmor %vm1967, %vm1968
        %v1970 = vsel %vm1969, %v1961, %v1966
        %v1971 = vrsqrt.pop %v1601
        %v1972 = vmul.f32 %v1971, %v1601
        %v1973 = vmul.f32 %v1972, %v1971
        %v1974 = vmul.f32 0.5, %v1973
        %v1975 = vsub.f32 1.5, %v1974
        %v1976 = vmul.f32 %v1971, %v1975
        %vm1977 = vweird.f32 %v1601
        %vm1978 = vweird.f32 %v1971
        %vm1979 = vmor %vm1977, %vm1978
        %v1980 = vsel %vm1979, %v1971, %v1976
        %v1981 = vrsqrt.pop %v1602
        %v1982 = vmul.f32 %v1981, %v1602
        %v1983 = vmul.f32 %v1982, %v1981
        %v1984 = vmul.f32 0.5, %v1983
        %v1985 = vsub.f32 1.5, %v1984
        %v1986 = vmul.f32 %v1981, %v1985
        %vm1987 = vweird.f32 %v1602
        %vm1988 = vweird.f32 %v1981
        %vm1989 = vmor %vm1987, %vm1988
        %v1990 = vsel %vm1989, %v1981, %v1986
        %v1991 = vrsqrt.pop %v1603
        %v1992 = vmul.f32 %v1991, %v1603
        %v1993 = vmul.f32 %v1992, %v1991
        %v1994 = vmul.f32 0.5, %v1993
        %v1995 = vsub.f32 1.5, %v1994
        %v1996 = vmul.f32 %v1991, %v1995
        %vm1997 = vweird.f32 %v1603
        %vm1998 = vweird.f32 %v1991
        %vm1999 = vmor %vm1997, %vm1998
        %v2000 = vsel %vm1999, %v1991, %v1996
        %v2001 = vrsqrt.pop %v1604
        %v2002 = vmul.f32 %v2001, %v1604
        %v2003 = vmul.f32 %v2002, %v2001
        %v2004 = vmul.f32 0.5, %v2003
        %v2005 = vsub.f32 1.5, %v2004
        %v2006 = vmul.f32 %v2001, %v2005
        %vm2007 = vweird.f32 %v1604
        %vm2008 = vweird.f32 %v2001
        %vm2009 = vmor %vm2007, %vm2008
        %v2010 = vsel %vm2009, %v2001, %v2006
        %v2011 = vrsqrt.pop %v1605
        %v2012 = vmul.f32 %v2011, %v1605
        %v2013 = vmul.f32 %v2012, %v2011
        %v2014 = vmul.f32 0.5, %v2013
        %v2015 = vsub.f32 1.5, %v2014
        %v2016 = vmul.f32 %v2011, %v2015
        %vm2017 = vweird.f32 %v1605
        %vm2018 = vweird.f32 %v2011
        %vm2019 = vmor %vm2017, %vm2018
        %v2020 = vsel %vm2019, %v2011, %v2016
        %v2021 = vrsqrt.pop %v1606
        %v2022 = vmul.f32 %v2021, %v1606
        %v2023 = vmul.f32 %v2022, %v2021
        %v2024 = vmul.f32 0.5, %v2023
        %v2025 = vsub.f32 1.5, %v2024
        %v2026 = vmul.f32 %v2021, %v2025
        %vm2027 = vweird.f32 %v1606
        %vm2028 = vweird.f32 %v2021
        %vm2029 = vmor %vm2027, %vm2028
        %v2030 = vsel %vm2029, %v2021, %v2026
        %v2031 = vrsqrt.pop %v1607
        %v2032 = vmul.f32 %v2031, %v1607
        %v2033 = vmul.f32 %v2032, %v2031
        %v2034 = vmul.f32 0.5, %v2033
        %v2035 = vsub.f32 1.5, %v2034
        %v2036 = vmul.f32 %v2031, %v2035
        %vm2037 = vweird.f32 %v1607
        %vm2038 = vweird.f32 %v2031
        %vm2039 = vmor %vm2037, %vm2038
        %v2040 = vsel %vm2039, %v2031, %v2036
        %v2041 = vrsqrt.pop %v1608
        %v2042 = vmul.f32 %v2041, %v1608
        %v2043 = vmul.f32 %v2042, %v2041
        %v2044 = vmul.f32 0.5, %v2043
        %v2045 = vsub.f32 1.5, %v2044
        %v2046 = vmul.f32 %v2041, %v2045
        %vm2047 = vweird.f32 %v1608
        %vm2048 = vweird.f32 %v2041
        %vm2049 = vmor %vm2047, %vm2048
        %v2050 = vsel %vm2049, %v2041, %v2046
        %v2051 = vrsqrt.pop %v1609
        %v2052 = vmul.f32 %v2051, %v1609
        %v2053 = vmul.f32 %v2052, %v2051
        %v2054 = vmul.f32 0.5, %v2053
        %v2055 = vsub.f32 1.5, %v2054
        %v2056 = vmul.f32 %v2051, %v2055
        %vm2057 = vweird.f32 %v1609
        %vm2058 = vweird.f32 %v2051
        %vm2059 = vmor %vm2057, %vm2058
        %v2060 = vsel %vm2059, %v2051, %v2056
        %v2061 = vrsqrt.pop %v1610
        %v2062 = vmul.f32 %v2061, %v1610
        %v2063 = vmul.f32 %v2062, %v2061
        %v2064 = vmul.f32 0.5, %v2063
        %v2065 = vsub.f32 1.5, %v2064
        %v2066 = vmul.f32 %v2061, %v2065
        %vm2067 = vweird.f32 %v1610
        %vm2068 = vweird.f32 %v2061
        %vm2069 = vmor %vm2067, %vm2068
        %v2070 = vsel %vm2069, %v2061, %v2066
        %v2071 = vrsqrt.pop %v1611
        %v2072 = vmul.f32 %v2071, %v1611
        %v2073 = vmul.f32 %v2072, %v2071
        %v2074 = vmul.f32 0.5, %v2073
        %v2075 = vsub.f32 1.5, %v2074
        %v2076 = vmul.f32 %v2071, %v2075
        %vm2077 = vweird.f32 %v1611
        %vm2078 = vweird.f32 %v2071
        %vm2079 = vmor %vm2077, %vm2078
        %v2080 = vsel %vm2079, %v2071, %v2076
        %v2081 = vrsqrt.pop %v1612
        %v2082 = vmul.f32 %v2081, %v1612
        %v2083 = vmul.f32 %v2082, %v2081
        %v2084 = vmul.f32 0.5, %v2083
        %v2085 = vsub.f32 1.5, %v2084
        %v2086 = vmul.f32 %v2081, %v2085
        %vm2087 = vweird.f32 %v1612
        %vm2088 = vweird.f32 %v2081
        %vm2089 = vmor %vm2087, %vm2088
        %v2090 = vsel %vm2089, %v2081, %v2086
        %v2091 = vrsqrt.pop %v1613
        %v2092 = vmul.f32 %v2091, %v1613
        %v2093 = vmul.f32 %v2092, %v2091
        %v2094 = vmul.f32 0.5, %v2093
        %v2095 = vsub.f32 1.5, %v2094
        %v2096 = vmul.f32 %v2091, %v2095
        %vm2097 = vweird.f32 %v1613
        %vm2098 = vweird.f32 %v2091
        %vm2099 = vmor %vm2097, %vm2098
        %v2100 = vsel %vm2099, %v2091, %v2096
        %v2101 = vrsqrt.pop %v1614
        %v2102 = vmul.f32 %v2101, %v1614
        %v2103 = vmul.f32 %v2102, %v2101
        %v2104 = vmul.f32 0.5, %v2103
        %v2105 = vsub.f32 1.5, %v2104
        %v2106 = vmul.f32 %v2101, %v2105
        %vm2107 = vweird.f32 %v1614
        %vm2108 = vweird.f32 %v2101
        %vm2109 = vmor %vm2107, %vm2108
        %v2110 = vsel %vm2109, %v2101, %v2106
        %v2111 = vrsqrt.pop %v1615
        %v2112 = vmul.f32 %v2111, %v1615
        %v2113 = vmul.f32 %v2112, %v2111
        %v2114 = vmul.f32 0.5, %v2113
        %v2115 = vsub.f32 1.5, %v2114
        %v2116 = vmul.f32 %v2111, %v2115
        %vm2117 = vweird.f32 %v1615
        %vm2118 = vweird.f32 %v2111
        %vm2119 = vmor %vm2117, %vm2118
        %v2120 = vsel %vm2119, %v2111, %v2116
        %v2121 = vrsqrt.pop %v1616
        %v2122 = vmul.f32 %v2121, %v1616
        %v2123 = vmul.f32 %v2122, %v2121
        %v2124 = vmul.f32 0.5, %v2123
        %v2125 = vsub.f32 1.5, %v2124
        %v2126 = vmul.f32 %v2121, %v2125
        %vm2127 = vweird.f32 %v1616
        %vm2128 = vweird.f32 %v2121
        %vm2129 = vmor %vm2127, %vm2128
        %v2130 = vsel %vm2129, %v2121, %v2126
        %v2131 = vrsqrt.pop %v1617
        %v2132 = vmul.f32 %v2131, %v1617
        %v2133 = vmul.f32 %v2132, %v2131
        %v2134 = vmul.f32 0.5, %v2133
        %v2135 = vsub.f32 1.5, %v2134
        %v2136 = vmul.f32 %v2131, %v2135
        %vm2137 = vweird.f32 %v1617
        %vm2138 = vweird.f32 %v2131
        %vm2139 = vmor %vm2137, %vm2138
        %v2140 = vsel %vm2139, %v2131, %v2136
        %v2141 = vrsqrt.pop %v1618
        %v2142 = vmul.f32 %v2141, %v1618
        %v2143 = vmul.f32 %v2142, %v2141
        %v2144 = vmul.f32 0.5, %v2143
        %v2145 = vsub.f32 1.5, %v2144
        %v2146 = vmul.f32 %v2141, %v2145
        %vm2147 = vweird.f32 %v1618
        %vm2148 = vweird.f32 %v2141
        %vm2149 = vmor %vm2147, %vm2148
        %v2150 = vsel %vm2149, %v2141, %v2146
        %v2151 = vrsqrt.pop %v1619
        %v2152 = vmul.f32 %v2151, %v1619
        %v2153 = vmul.f32 %v2152, %v2151
        %v2154 = vmul.f32 0.5, %v2153
        %v2155 = vsub.f32 1.5, %v2154
        %v2156 = vmul.f32 %v2151, %v2155
        %vm2157 = vweird.f32 %v1619
        %vm2158 = vweird.f32 %v2151
        %vm2159 = vmor %vm2157, %vm2158
        %v2160 = vsel %vm2159, %v2151, %v2156
        %v2161 = vrsqrt.pop %v1620
        %v2162 = vmul.f32 %v2161, %v1620
        %v2163 = vmul.f32 %v2162, %v2161
        %v2164 = vmul.f32 0.5, %v2163
        %v2165 = vsub.f32 1.5, %v2164
        %v2166 = vmul.f32 %v2161, %v2165
        %vm2167 = vweird.f32 %v1620
        %vm2168 = vweird.f32 %v2161
        %vm2169 = vmor %vm2167, %vm2168
        %v2170 = vsel %vm2169, %v2161, %v2166
        %v2171 = vrsqrt.pop %v1621
        %v2172 = vmul.f32 %v2171, %v1621
        %v2173 = vmul.f32 %v2172, %v2171
        %v2174 = vmul.f32 0.5, %v2173
        %v2175 = vsub.f32 1.5, %v2174
        %v2176 = vmul.f32 %v2171, %v2175
        %vm2177 = vweird.f32 %v1621
        %vm2178 = vweird.f32 %v2171
        %vm2179 = vmor %vm2177, %vm2178
        %v2180 = vsel %vm2179, %v2171, %v2176
        %v2181 = vrsqrt.pop %v1622
        %v2182 = vmul.f32 %v2181, %v1622
        %v2183 = vmul.f32 %v2182, %v2181
        %v2184 = vmul.f32 0.5, %v2183
        %v2185 = vsub.f32 1.5, %v2184
        %v2186 = vmul.f32 %v2181, %v2185
        %vm2187 = vweird.f32 %v1622
        %vm2188 = vweird.f32 %v2181
        %vm2189 = vmor %vm2187, %vm2188
        %v2190 = vsel %vm2189, %v2181, %v2186
        %v2191 = vrsqrt.pop %v1623
        %v2192 = vmul.f32 %v2191, %v1623
        %v2193 = vmul.f32 %v2192, %v2191
        %v2194 = vmul.f32 0.5, %v2193
        %v2195 = vsub.f32 1.5, %v2194
        %v2196 = vmul.f32 %v2191, %v2195
        %vm2197 = vweird.f32 %v1623
        %vm2198 = vweird.f32 %v2191
        %vm2199 = vmor %vm2197, %vm2198
        %v2200 = vsel %vm2199, %v2191, %v2196
        %v2201 = vrsqrt.pop %v1624
        %v2202 = vmul.f32 %v2201, %v1624
        %v2203 = vmul.f32 %v2202, %v2201
        %v2204 = vmul.f32 0.5, %v2203
        %v2205 = vsub.f32 1.5, %v2204
        %v2206 = vmul.f32 %v2201, %v2205
        %vm2207 = vweird.f32 %v1624
        %vm2208 = vweird.f32 %v2201
        %vm2209 = vmor %vm2207, %vm2208
        %v2210 = vsel %vm2209, %v2201, %v2206
        %v2211 = vrsqrt.pop %v1625
        %v2212 = vmul.f32 %v2211, %v1625
        %v2213 = vmul.f32 %v2212, %v2211
        %v2214 = vmul.f32 0.5, %v2213
        %v2215 = vsub.f32 1.5, %v2214
        %v2216 = vmul.f32 %v2211, %v2215
        %vm2217 = vweird.f32 %v1625
        %vm2218 = vweird.f32 %v2211
        %vm2219 = vmor %vm2217, %vm2218
        %v2220 = vsel %vm2219, %v2211, %v2216
        %v2221 = vrsqrt.pop %v1626
        %v2222 = vmul.f32 %v2221, %v1626
        %v2223 = vmul.f32 %v2222, %v2221
        %v2224 = vmul.f32 0.5, %v2223
        %v2225 = vsub.f32 1.5, %v2224
        %v2226 = vmul.f32 %v2221, %v2225
        %vm2227 = vweird.f32 %v1626
        %vm2228 = vweird.f32 %v2221
        %vm2229 = vmor %vm2227, %vm2228
        %v2230 = vsel %vm2229, %v2221, %v2226
        %v2231 = vrsqrt.pop %v1627
        %v2232 = vmul.f32 %v2231, %v1627
        %v2233 = vmul.f32 %v2232, %v2231
        %v2234 = vmul.f32 0.5, %v2233
        %v2235 = vsub.f32 1.5, %v2234
        %v2236 = vmul.f32 %v2231, %v2235
        %vm2237 = vweird.f32 %v1627
        %vm2238 = vweird.f32 %v2231
        %vm2239 = vmor %vm2237, %vm2238
        %v2240 = vsel %vm2239, %v2231, %v2236
        %v2241 = vrsqrt.pop %v1628
        %v2242 = vmul.f32 %v2241, %v1628
        %v2243 = vmul.f32 %v2242, %v2241
        %v2244 = vmul.f32 0.5, %v2243
        %v2245 = vsub.f32 1.5, %v2244
        %v2246 = vmul.f32 %v2241, %v2245
        %vm2247 = vweird.f32 %v1628
        %vm2248 = vweird.f32 %v2241
        %vm2249 = vmor %vm2247, %vm2248
        %v2250 = vsel %vm2249, %v2241, %v2246
        %v2251 = vrsqrt.pop %v1629
        %v2252 = vmul.f32 %v2251, %v1629
        %v2253 = vmul.f32 %v2252, %v2251
        %v2254 = vmul.f32 0.5, %v2253
        %v2255 = vsub.f32 1.5, %v2254
        %v2256 = vmul.f32 %v2251, %v2255
        %vm2257 = vweird.f32 %v1629
        %vm2258 = vweird.f32 %v2251
        %vm2259 = vmor %vm2257, %vm2258
        %v2260 = vsel %vm2259, %v2251, %v2256
        %v2261 = vrsqrt.pop %v1630
        %v2262 = vmul.f32 %v2261, %v1630
        %v2263 = vmul.f32 %v2262, %v2261
        %v2264 = vmul.f32 0.5, %v2263
        %v2265 = vsub.f32 1.5, %v2264
        %v2266 = vmul.f32 %v2261, %v2265
        %vm2267 = vweird.f32 %v1630
        %vm2268 = vweird.f32 %v2261
        %vm2269 = vmor %vm2267, %vm2268
        %v2270 = vsel %vm2269, %v2261, %v2266
        %v2271 = vmul.f32 %v1119, %v1640
        %v2272 = vmul.f32 %v1122, %v1650
        %v2273 = vmul.f32 %v1125, %v1660
        %v2274 = vmul.f32 %v1128, %v1670
        %v2275 = vmul.f32 %v1131, %v1680
        %v2276 = vmul.f32 %v1134, %v1690
        %v2277 = vmul.f32 %v1137, %v1700
        %v2278 = vmul.f32 %v1140, %v1710
        %v2279 = vmul.f32 %v1143, %v1720
        %v2280 = vmul.f32 %v1146, %v1730
        %v2281 = vmul.f32 %v1149, %v1740
        %v2282 = vmul.f32 %v1152, %v1750
        %v2283 = vmul.f32 %v1155, %v1760
        %v2284 = vmul.f32 %v1158, %v1770
        %v2285 = vmul.f32 %v1161, %v1780
        %v2286 = vmul.f32 %v1164, %v1790
        %v2287 = vmul.f32 %v1167, %v1800
        %v2288 = vmul.f32 %v1170, %v1810
        %v2289 = vmul.f32 %v1173, %v1820
        %v2290 = vmul.f32 %v1176, %v1830
        %v2291 = vmul.f32 %v1179, %v1840
        %v2292 = vmul.f32 %v1182, %v1850
        %v2293 = vmul.f32 %v1185, %v1860
        %v2294 = vmul.f32 %v1188, %v1870
        %v2295 = vmul.f32 %v1191, %v1880
        %v2296 = vmul.f32 %v1194, %v1890
        %v2297 = vmul.f32 %v1197, %v1900
        %v2298 = vmul.f32 %v1200, %v1910
        %v2299 = vmul.f32 %v1203, %v1920
        %v2300 = vmul.f32 %v1206, %v1930
        %v2301 = vmul.f32 %v1209, %v1940
        %v2302 = vmul.f32 %v1212, %v1950
        %v2303 = vmul.f32 %v1215, %v1960
        %v2304 = vmul.f32 %v1218, %v1970
        %v2305 = vmul.f32 %v1221, %v1980
        %v2306 = vmul.f32 %v1224, %v1990
        %v2307 = vmul.f32 %v1227, %v2000
        %v2308 = vmul.f32 %v1230, %v2010
        %v2309 = vmul.f32 %v1233, %v2020
        %v2310 = vmul.f32 %v1236, %v2030
        %v2311 = vmul.f32 %v1239, %v2040
        %v2312 = vmul.f32 %v1242, %v2050
        %v2313 = vmul.f32 %v1245, %v2060
        %v2314 = vmul.f32 %v1248, %v2070
        %v2315 = vmul.f32 %v1251, %v2080
        %v2316 = vmul.f32 %v1254, %v2090
        %v2317 = vmul.f32 %v1257, %v2100
        %v2318 = vmul.f32 %v1260, %v2110
        %v2319 = vmul.f32 %v1263, %v2120
        %v2320 = vmul.f32 %v1266, %v2130
        %v2321 = vmul.f32 %v1269, %v2140
        %v2322 = vmul.f32 %v1272, %v2150
        %v2323 = vmul.f32 %v1275, %v2160
        %v2324 = vmul.f32 %v1278, %v2170
        %v2325 = vmul.f32 %v1281, %v2180
        %v2326 = vmul.f32 %v1284, %v2190
        %v2327 = vmul.f32 %v1287, %v2200
        %v2328 = vmul.f32 %v1290, %v2210
        %v2329 = vmul.f32 %v1293, %v2220
        %v2330 = vmul.f32 %v1296, %v2230
        %v2331 = vmul.f32 %v1299, %v2240
        %v2332 = vmul.f32 %v1302, %v2250
        %v2333 = vmul.f32 %v1305, %v2260
        %v2334 = vmul.f32 %v1308, %v2270
        %v2336 = vsel %vm1374, %v2271, 0
        %v2339 = vsel %vm1374, %v2272, 0
        %v2342 = vsel %vm1374, %v2273, 0
        %v2345 = vsel %vm1374, %v2274, 0
        %v2348 = vsel %vm1374, %v2275, 0
        %v2351 = vsel %vm1374, %v2276, 0
        %v2354 = vsel %vm1374, %v2277, 0
        %v2357 = vsel %vm1374, %v2278, 0
        %v2360 = vsel %vm1374, %v2279, 0
        %v2363 = vsel %vm1374, %v2280, 0
        %v2366 = vsel %vm1374, %v2281, 0
        %v2369 = vsel %vm1374, %v2282, 0
        %v2372 = vsel %vm1374, %v2283, 0
        %v2375 = vsel %vm1374, %v2284, 0
        %v2378 = vsel %vm1374, %v2285, 0
        %v2381 = vsel %vm1374, %v2286, 0
        %v2384 = vsel %vm1374, %v2287, 0
        %v2387 = vsel %vm1374, %v2288, 0
        %v2390 = vsel %vm1374, %v2289, 0
        %v2393 = vsel %vm1374, %v2290, 0
        %v2396 = vsel %vm1374, %v2291, 0
        %v2399 = vsel %vm1374, %v2292, 0
        %v2402 = vsel %vm1374, %v2293, 0
        %v2405 = vsel %vm1374, %v2294, 0
        %v2408 = vsel %vm1374, %v2295, 0
        %v2411 = vsel %vm1374, %v2296, 0
        %v2414 = vsel %vm1374, %v2297, 0
        %v2417 = vsel %vm1374, %v2298, 0
        %v2420 = vsel %vm1374, %v2299, 0
        %v2423 = vsel %vm1374, %v2300, 0
        %v2426 = vsel %vm1374, %v2301, 0
        %v2429 = vsel %vm1374, %v2302, 0
        %v2432 = vsel %vm1374, %v2303, 0
        %v2435 = vsel %vm1374, %v2304, 0
        %v2438 = vsel %vm1374, %v2305, 0
        %v2441 = vsel %vm1374, %v2306, 0
        %v2444 = vsel %vm1374, %v2307, 0
        %v2447 = vsel %vm1374, %v2308, 0
        %v2450 = vsel %vm1374, %v2309, 0
        %v2453 = vsel %vm1374, %v2310, 0
        %v2456 = vsel %vm1374, %v2311, 0
        %v2459 = vsel %vm1374, %v2312, 0
        %v2462 = vsel %vm1374, %v2313, 0
        %v2465 = vsel %vm1374, %v2314, 0
        %v2468 = vsel %vm1374, %v2315, 0
        %v2471 = vsel %vm1374, %v2316, 0
        %v2474 = vsel %vm1374, %v2317, 0
        %v2477 = vsel %vm1374, %v2318, 0
        %v2480 = vsel %vm1374, %v2319, 0
        %v2483 = vsel %vm1374, %v2320, 0
        %v2486 = vsel %vm1374, %v2321, 0
        %v2489 = vsel %vm1374, %v2322, 0
        %v2492 = vsel %vm1374, %v2323, 0
        %v2495 = vsel %vm1374, %v2324, 0
        %v2498 = vsel %vm1374, %v2325, 0
        %v2501 = vsel %vm1374, %v2326, 0
        %v2504 = vsel %vm1374, %v2327, 0
        %v2507 = vsel %vm1374, %v2328, 0
        %v2510 = vsel %vm1374, %v2329, 0
        %v2513 = vsel %vm1374, %v2330, 0
        %v2516 = vsel %vm1374, %v2331, 0
        %v2519 = vsel %vm1374, %v2332, 0
        %v2522 = vsel %vm1374, %v2333, 0
        %v2525 = vsel %vm1374, %v2334, 0
        %v2528 = vsel %vm1374, %v374, 0
        %v2531 = vsel %vm1374, %v375, 0
        %v2534 = vsel %vm1374, %v376, 0
        %v2537 = vsel %vm1374, %v377, 0
        %v2540 = vsel %vm1374, %v378, 0
        %v2543 = vsel %vm1374, %v379, 0
        %v2546 = vsel %vm1374, %v380, 0
        %v2549 = vsel %vm1374, %v381, 0
        %v2552 = vsel %vm1374, %v382, 0
        %v2555 = vsel %vm1374, %v383, 0
        %v2558 = vsel %vm1374, %v384, 0
        %v2561 = vsel %vm1374, %v385, 0
        %v2564 = vsel %vm1374, %v386, 0
        %v2567 = vsel %vm1374, %v387, 0
        %v2570 = vsel %vm1374, %v388, 0
        %v2573 = vsel %vm1374, %v389, 0
        %v2576 = vsel %vm1374, %v390, 0
        %v2579 = vsel %vm1374, %v391, 0
        %v2582 = vsel %vm1374, %v392, 0
        %v2585 = vsel %vm1374, %v393, 0
        %v2588 = vsel %vm1374, %v394, 0
        %v2591 = vsel %vm1374, %v395, 0
        %v2594 = vsel %vm1374, %v396, 0
        %v2597 = vsel %vm1374, %v397, 0
        %v2600 = vsel %vm1374, %v398, 0
        %v2603 = vsel %vm1374, %v399, 0
        %v2606 = vsel %vm1374, %v400, 0
        %v2609 = vsel %vm1374, %v401, 0
        %v2612 = vsel %vm1374, %v402, 0
        %v2615 = vsel %vm1374, %v403, 0
        %v2618 = vsel %vm1374, %v404, 0
        %v2621 = vsel %vm1374, %v405, 0
        %2623 = vmatpush.xpose.msra.mxu0 %v2573
        %2624 = vmatpush.xpose.msra.mxu0 %v2570
        %2625 = vmatpush.xpose.msra.mxu0 %v2567
        %2626 = vmatpush.xpose.msra.mxu0 %v2564
        %2627 = vmatpush.xpose.msra.mxu0 %v2561
        %2628 = vmatpush.xpose.msra.mxu0 %v2558
        %2629 = vmatpush.xpose.msra.mxu0 %v2555
        %2630 = vmatpush.xpose.msra.mxu0 %v2552
        %2631 = vmatpush.xpose.msra.mxu0 %v2549
        %2632 = vmatpush.xpose.msra.mxu0 %v2546
        %2633 = vmatpush.xpose.msra.mxu0 %v2543
        %2634 = vmatpush.xpose.msra.mxu0 %v2540
        %2635 = vmatpush.xpose.msra.mxu0 %v2537
        %2636 = vmatpush.xpose.msra.mxu0 %v2534
        %2637 = vmatpush.xpose.msra.mxu0 %v2531
        %2638 = vmatpush.xpose.msra.mxu0 %v2528
        %2639 = vmatmul.f32.gmra.mxu0 %v2336
        %v2640 = vpop.f32.mrf.mxu0
        %v2641 = vadd.f32 0.0, %v2640
        %2642 = vmatmul.f32.gmra.mxu0 %v2339
        %v2643 = vpop.f32.mrf.mxu0
        %v2644 = vadd.f32 0.0, %v2643
        %2645 = vmatmul.f32.gmra.mxu0 %v2342
        %v2646 = vpop.f32.mrf.mxu0
        %v2647 = vadd.f32 0.0, %v2646
        %2648 = vmatmul.f32.gmra.mxu0 %v2345
        %v2649 = vpop.f32.mrf.mxu0
        %v2650 = vadd.f32 0.0, %v2649
        %2651 = vmatmul.f32.gmra.mxu0 %v2348
        %v2652 = vpop.f32.mrf.mxu0
        %v2653 = vadd.f32 0.0, %v2652
        %2654 = vmatmul.f32.gmra.mxu0 %v2351
        %v2655 = vpop.f32.mrf.mxu0
        %v2656 = vadd.f32 0.0, %v2655
        %2657 = vmatmul.f32.gmra.mxu0 %v2354
        %v2658 = vpop.f32.mrf.mxu0
        %v2659 = vadd.f32 0.0, %v2658
        %2660 = vmatmul.f32.gmra.mxu0 %v2357
        %v2661 = vpop.f32.mrf.mxu0
        %v2662 = vadd.f32 0.0, %v2661
        %2663 = vmatmul.f32.gmra.mxu0 %v2360
        %v2664 = vpop.f32.mrf.mxu0
        %v2665 = vadd.f32 0.0, %v2664
        %2666 = vmatmul.f32.gmra.mxu0 %v2363
        %v2667 = vpop.f32.mrf.mxu0
        %v2668 = vadd.f32 0.0, %v2667
        %2669 = vmatmul.f32.gmra.mxu0 %v2366
        %v2670 = vpop.f32.mrf.mxu0
        %v2671 = vadd.f32 0.0, %v2670
        %2672 = vmatmul.f32.gmra.mxu0 %v2369
        %v2673 = vpop.f32.mrf.mxu0
        %v2674 = vadd.f32 0.0, %v2673
        %2675 = vmatmul.f32.gmra.mxu0 %v2372
        %v2676 = vpop.f32.mrf.mxu0
        %v2677 = vadd.f32 0.0, %v2676
        %2678 = vmatmul.f32.gmra.mxu0 %v2375
        %v2679 = vpop.f32.mrf.mxu0
        %v2680 = vadd.f32 0.0, %v2679
        %2681 = vmatmul.f32.gmra.mxu0 %v2378
        %v2682 = vpop.f32.mrf.mxu0
        %v2683 = vadd.f32 0.0, %v2682
        %2684 = vmatmul.f32.gmra.mxu0 %v2381
        %v2685 = vpop.f32.mrf.mxu0
        %v2686 = vadd.f32 0.0, %v2685
        %2687 = vmatmul.f32.gmra.mxu0 %v2384
        %v2688 = vpop.f32.mrf.mxu0
        %v2689 = vadd.f32 0.0, %v2688
        %2690 = vmatmul.f32.gmra.mxu0 %v2387
        %v2691 = vpop.f32.mrf.mxu0
        %v2692 = vadd.f32 0.0, %v2691
        %2693 = vmatmul.f32.gmra.mxu0 %v2390
        %v2694 = vpop.f32.mrf.mxu0
        %v2695 = vadd.f32 0.0, %v2694
        %2696 = vmatmul.f32.gmra.mxu0 %v2393
        %v2697 = vpop.f32.mrf.mxu0
        %v2698 = vadd.f32 0.0, %v2697
        %2699 = vmatmul.f32.gmra.mxu0 %v2396
        %v2700 = vpop.f32.mrf.mxu0
        %v2701 = vadd.f32 0.0, %v2700
        %2702 = vmatmul.f32.gmra.mxu0 %v2399
        %v2703 = vpop.f32.mrf.mxu0
        %v2704 = vadd.f32 0.0, %v2703
        %2705 = vmatmul.f32.gmra.mxu0 %v2402
        %v2706 = vpop.f32.mrf.mxu0
        %v2707 = vadd.f32 0.0, %v2706
        %2708 = vmatmul.f32.gmra.mxu0 %v2405
        %v2709 = vpop.f32.mrf.mxu0
        %v2710 = vadd.f32 0.0, %v2709
        %2711 = vmatmul.f32.gmra.mxu0 %v2408
        %v2712 = vpop.f32.mrf.mxu0
        %v2713 = vadd.f32 0.0, %v2712
        %2714 = vmatmul.f32.gmra.mxu0 %v2411
        %v2715 = vpop.f32.mrf.mxu0
        %v2716 = vadd.f32 0.0, %v2715
        %2717 = vmatmul.f32.gmra.mxu0 %v2414
        %v2718 = vpop.f32.mrf.mxu0
        %v2719 = vadd.f32 0.0, %v2718
        %2720 = vmatmul.f32.gmra.mxu0 %v2417
        %v2721 = vpop.f32.mrf.mxu0
        %v2722 = vadd.f32 0.0, %v2721
        %2723 = vmatmul.f32.gmra.mxu0 %v2420
        %v2724 = vpop.f32.mrf.mxu0
        %v2725 = vadd.f32 0.0, %v2724
        %2726 = vmatmul.f32.gmra.mxu0 %v2423
        %v2727 = vpop.f32.mrf.mxu0
        %v2728 = vadd.f32 0.0, %v2727
        %2729 = vmatmul.f32.gmra.mxu0 %v2426
        %v2730 = vpop.f32.mrf.mxu0
        %v2731 = vadd.f32 0.0, %v2730
        %2732 = vmatmul.f32.gmra.mxu0 %v2429
        %v2733 = vpop.f32.mrf.mxu0
        %v2734 = vadd.f32 0.0, %v2733
        %2735 = vmatmul.f32.gmra.mxu0 %v2432
        %v2736 = vpop.f32.mrf.mxu0
        %v2737 = vadd.f32 0.0, %v2736
        %2738 = vmatmul.f32.gmra.mxu0 %v2435
        %v2739 = vpop.f32.mrf.mxu0
        %v2740 = vadd.f32 0.0, %v2739
        %2741 = vmatmul.f32.gmra.mxu0 %v2438
        %v2742 = vpop.f32.mrf.mxu0
        %v2743 = vadd.f32 0.0, %v2742
        %2744 = vmatmul.f32.gmra.mxu0 %v2441
        %v2745 = vpop.f32.mrf.mxu0
        %v2746 = vadd.f32 0.0, %v2745
        %2747 = vmatmul.f32.gmra.mxu0 %v2444
        %v2748 = vpop.f32.mrf.mxu0
        %v2749 = vadd.f32 0.0, %v2748
        %2750 = vmatmul.f32.gmra.mxu0 %v2447
        %v2751 = vpop.f32.mrf.mxu0
        %v2752 = vadd.f32 0.0, %v2751
        %2753 = vmatmul.f32.gmra.mxu0 %v2450
        %v2754 = vpop.f32.mrf.mxu0
        %v2755 = vadd.f32 0.0, %v2754
        %2756 = vmatmul.f32.gmra.mxu0 %v2453
        %v2757 = vpop.f32.mrf.mxu0
        %v2758 = vadd.f32 0.0, %v2757
        %2759 = vmatmul.f32.gmra.mxu0 %v2456
        %v2760 = vpop.f32.mrf.mxu0
        %v2761 = vadd.f32 0.0, %v2760
        %2762 = vmatmul.f32.gmra.mxu0 %v2459
        %v2763 = vpop.f32.mrf.mxu0
        %v2764 = vadd.f32 0.0, %v2763
        %2765 = vmatmul.f32.gmra.mxu0 %v2462
        %v2766 = vpop.f32.mrf.mxu0
        %v2767 = vadd.f32 0.0, %v2766
        %2768 = vmatmul.f32.gmra.mxu0 %v2465
        %v2769 = vpop.f32.mrf.mxu0
        %v2770 = vadd.f32 0.0, %v2769
        %2771 = vmatmul.f32.gmra.mxu0 %v2468
        %v2772 = vpop.f32.mrf.mxu0
        %v2773 = vadd.f32 0.0, %v2772
        %2774 = vmatmul.f32.gmra.mxu0 %v2471
        %v2775 = vpop.f32.mrf.mxu0
        %v2776 = vadd.f32 0.0, %v2775
        %2777 = vmatmul.f32.gmra.mxu0 %v2474
        %v2778 = vpop.f32.mrf.mxu0
        %v2779 = vadd.f32 0.0, %v2778
        %2780 = vmatmul.f32.gmra.mxu0 %v2477
        %v2781 = vpop.f32.mrf.mxu0
        %v2782 = vadd.f32 0.0, %v2781
        %2783 = vmatmul.f32.gmra.mxu0 %v2480
        %v2784 = vpop.f32.mrf.mxu0
        %v2785 = vadd.f32 0.0, %v2784
        %2786 = vmatmul.f32.gmra.mxu0 %v2483
        %v2787 = vpop.f32.mrf.mxu0
        %v2788 = vadd.f32 0.0, %v2787
        %2789 = vmatmul.f32.gmra.mxu0 %v2486
        %v2790 = vpop.f32.mrf.mxu0
        %v2791 = vadd.f32 0.0, %v2790
        %2792 = vmatmul.f32.gmra.mxu0 %v2489
        %v2793 = vpop.f32.mrf.mxu0
        %v2794 = vadd.f32 0.0, %v2793
        %2795 = vmatmul.f32.gmra.mxu0 %v2492
        %v2796 = vpop.f32.mrf.mxu0
        %v2797 = vadd.f32 0.0, %v2796
        %2798 = vmatmul.f32.gmra.mxu0 %v2495
        %v2799 = vpop.f32.mrf.mxu0
        %v2800 = vadd.f32 0.0, %v2799
        %2801 = vmatmul.f32.gmra.mxu0 %v2498
        %v2802 = vpop.f32.mrf.mxu0
        %v2803 = vadd.f32 0.0, %v2802
        %2804 = vmatmul.f32.gmra.mxu0 %v2501
        %v2805 = vpop.f32.mrf.mxu0
        %v2806 = vadd.f32 0.0, %v2805
        %2807 = vmatmul.f32.gmra.mxu0 %v2504
        %v2808 = vpop.f32.mrf.mxu0
        %v2809 = vadd.f32 0.0, %v2808
        %2810 = vmatmul.f32.gmra.mxu0 %v2507
        %v2811 = vpop.f32.mrf.mxu0
        %v2812 = vadd.f32 0.0, %v2811
        %2813 = vmatmul.f32.gmra.mxu0 %v2510
        %v2814 = vpop.f32.mrf.mxu0
        %v2815 = vadd.f32 0.0, %v2814
        %2816 = vmatmul.f32.gmra.mxu0 %v2513
        %v2817 = vpop.f32.mrf.mxu0
        %v2818 = vadd.f32 0.0, %v2817
        %2819 = vmatmul.f32.gmra.mxu0 %v2516
        %v2820 = vpop.f32.mrf.mxu0
        %v2821 = vadd.f32 0.0, %v2820
        %2822 = vmatmul.f32.gmra.mxu0 %v2519
        %v2823 = vpop.f32.mrf.mxu0
        %v2824 = vadd.f32 0.0, %v2823
        %2825 = vmatmul.f32.gmra.mxu0 %v2522
        %v2826 = vpop.f32.mrf.mxu0
        %v2827 = vadd.f32 0.0, %v2826
        %2828 = vmatmul.f32.gmra.mxu0 %v2525
        %v2829 = vpop.f32.mrf.mxu0
        %v2830 = vadd.f32 0.0, %v2829
        %2831 = vdwg.mxu0
        %2832 = vmatpush.xpose.msra.mxu0 %v2621
        %2833 = vmatpush.xpose.msra.mxu0 %v2618
        %2834 = vmatpush.xpose.msra.mxu0 %v2615
        %2835 = vmatpush.xpose.msra.mxu0 %v2612
        %2836 = vmatpush.xpose.msra.mxu0 %v2609
        %2837 = vmatpush.xpose.msra.mxu0 %v2606
        %2838 = vmatpush.xpose.msra.mxu0 %v2603
        %2839 = vmatpush.xpose.msra.mxu0 %v2600
        %2840 = vmatpush.xpose.msra.mxu0 %v2597
        %2841 = vmatpush.xpose.msra.mxu0 %v2594
        %2842 = vmatpush.xpose.msra.mxu0 %v2591
        %2843 = vmatpush.xpose.msra.mxu0 %v2588
        %2844 = vmatpush.xpose.msra.mxu0 %v2585
        %2845 = vmatpush.xpose.msra.mxu0 %v2582
        %2846 = vmatpush.xpose.msra.mxu0 %v2579
        %2847 = vmatpush.xpose.msra.mxu0 %v2576
        %2848 = vmatmul.f32.gmra.mxu0 %v2336
        %v2849 = vpop.f32.mrf.mxu0
        %v2850 = vadd.f32 0.0, %v2849
        %2851 = vmatmul.f32.gmra.mxu0 %v2339
        %v2852 = vpop.f32.mrf.mxu0
        %v2853 = vadd.f32 0.0, %v2852
        %2854 = vmatmul.f32.gmra.mxu0 %v2342
        %v2855 = vpop.f32.mrf.mxu0
        %v2856 = vadd.f32 0.0, %v2855
        %2857 = vmatmul.f32.gmra.mxu0 %v2345
        %v2858 = vpop.f32.mrf.mxu0
        %v2859 = vadd.f32 0.0, %v2858
        %2860 = vmatmul.f32.gmra.mxu0 %v2348
        %v2861 = vpop.f32.mrf.mxu0
        %v2862 = vadd.f32 0.0, %v2861
        %2863 = vmatmul.f32.gmra.mxu0 %v2351
        %v2864 = vpop.f32.mrf.mxu0
        %v2865 = vadd.f32 0.0, %v2864
        %2866 = vmatmul.f32.gmra.mxu0 %v2354
        %v2867 = vpop.f32.mrf.mxu0
        %v2868 = vadd.f32 0.0, %v2867
        %2869 = vmatmul.f32.gmra.mxu0 %v2357
        %v2870 = vpop.f32.mrf.mxu0
        %v2871 = vadd.f32 0.0, %v2870
        %2872 = vmatmul.f32.gmra.mxu0 %v2360
        %v2873 = vpop.f32.mrf.mxu0
        %v2874 = vadd.f32 0.0, %v2873
        %2875 = vmatmul.f32.gmra.mxu0 %v2363
        %v2876 = vpop.f32.mrf.mxu0
        %v2877 = vadd.f32 0.0, %v2876
        %2878 = vmatmul.f32.gmra.mxu0 %v2366
        %v2879 = vpop.f32.mrf.mxu0
        %v2880 = vadd.f32 0.0, %v2879
        %2881 = vmatmul.f32.gmra.mxu0 %v2369
        %v2882 = vpop.f32.mrf.mxu0
        %v2883 = vadd.f32 0.0, %v2882
        %2884 = vmatmul.f32.gmra.mxu0 %v2372
        %v2885 = vpop.f32.mrf.mxu0
        %v2886 = vadd.f32 0.0, %v2885
        %2887 = vmatmul.f32.gmra.mxu0 %v2375
        %v2888 = vpop.f32.mrf.mxu0
        %v2889 = vadd.f32 0.0, %v2888
        %2890 = vmatmul.f32.gmra.mxu0 %v2378
        %v2891 = vpop.f32.mrf.mxu0
        %v2892 = vadd.f32 0.0, %v2891
        %2893 = vmatmul.f32.gmra.mxu0 %v2381
        %v2894 = vpop.f32.mrf.mxu0
        %v2895 = vadd.f32 0.0, %v2894
        %2896 = vmatmul.f32.gmra.mxu0 %v2384
        %v2897 = vpop.f32.mrf.mxu0
        %v2898 = vadd.f32 0.0, %v2897
        %2899 = vmatmul.f32.gmra.mxu0 %v2387
        %v2900 = vpop.f32.mrf.mxu0
        %v2901 = vadd.f32 0.0, %v2900
        %2902 = vmatmul.f32.gmra.mxu0 %v2390
        %v2903 = vpop.f32.mrf.mxu0
        %v2904 = vadd.f32 0.0, %v2903
        %2905 = vmatmul.f32.gmra.mxu0 %v2393
        %v2906 = vpop.f32.mrf.mxu0
        %v2907 = vadd.f32 0.0, %v2906
        %2908 = vmatmul.f32.gmra.mxu0 %v2396
        %v2909 = vpop.f32.mrf.mxu0
        %v2910 = vadd.f32 0.0, %v2909
        %2911 = vmatmul.f32.gmra.mxu0 %v2399
        %v2912 = vpop.f32.mrf.mxu0
        %v2913 = vadd.f32 0.0, %v2912
        %2914 = vmatmul.f32.gmra.mxu0 %v2402
        %v2915 = vpop.f32.mrf.mxu0
        %v2916 = vadd.f32 0.0, %v2915
        %2917 = vmatmul.f32.gmra.mxu0 %v2405
        %v2918 = vpop.f32.mrf.mxu0
        %v2919 = vadd.f32 0.0, %v2918
        %2920 = vmatmul.f32.gmra.mxu0 %v2408
        %v2921 = vpop.f32.mrf.mxu0
        %v2922 = vadd.f32 0.0, %v2921
        %2923 = vmatmul.f32.gmra.mxu0 %v2411
        %v2924 = vpop.f32.mrf.mxu0
        %v2925 = vadd.f32 0.0, %v2924
        %2926 = vmatmul.f32.gmra.mxu0 %v2414
        %v2927 = vpop.f32.mrf.mxu0
        %v2928 = vadd.f32 0.0, %v2927
        %2929 = vmatmul.f32.gmra.mxu0 %v2417
        %v2930 = vpop.f32.mrf.mxu0
        %v2931 = vadd.f32 0.0, %v2930
        %2932 = vmatmul.f32.gmra.mxu0 %v2420
        %v2933 = vpop.f32.mrf.mxu0
        %v2934 = vadd.f32 0.0, %v2933
        %2935 = vmatmul.f32.gmra.mxu0 %v2423
        %v2936 = vpop.f32.mrf.mxu0
        %v2937 = vadd.f32 0.0, %v2936
        %2938 = vmatmul.f32.gmra.mxu0 %v2426
        %v2939 = vpop.f32.mrf.mxu0
        %v2940 = vadd.f32 0.0, %v2939
        %2941 = vmatmul.f32.gmra.mxu0 %v2429
        %v2942 = vpop.f32.mrf.mxu0
        %v2943 = vadd.f32 0.0, %v2942
        %2944 = vmatmul.f32.gmra.mxu0 %v2432
        %v2945 = vpop.f32.mrf.mxu0
        %v2946 = vadd.f32 0.0, %v2945
        %2947 = vmatmul.f32.gmra.mxu0 %v2435
        %v2948 = vpop.f32.mrf.mxu0
        %v2949 = vadd.f32 0.0, %v2948
        %2950 = vmatmul.f32.gmra.mxu0 %v2438
        %v2951 = vpop.f32.mrf.mxu0
        %v2952 = vadd.f32 0.0, %v2951
        %2953 = vmatmul.f32.gmra.mxu0 %v2441
        %v2954 = vpop.f32.mrf.mxu0
        %v2955 = vadd.f32 0.0, %v2954
        %2956 = vmatmul.f32.gmra.mxu0 %v2444
        %v2957 = vpop.f32.mrf.mxu0
        %v2958 = vadd.f32 0.0, %v2957
        %2959 = vmatmul.f32.gmra.mxu0 %v2447
        %v2960 = vpop.f32.mrf.mxu0
        %v2961 = vadd.f32 0.0, %v2960
        %2962 = vmatmul.f32.gmra.mxu0 %v2450
        %v2963 = vpop.f32.mrf.mxu0
        %v2964 = vadd.f32 0.0, %v2963
        %2965 = vmatmul.f32.gmra.mxu0 %v2453
        %v2966 = vpop.f32.mrf.mxu0
        %v2967 = vadd.f32 0.0, %v2966
        %2968 = vmatmul.f32.gmra.mxu0 %v2456
        %v2969 = vpop.f32.mrf.mxu0
        %v2970 = vadd.f32 0.0, %v2969
        %2971 = vmatmul.f32.gmra.mxu0 %v2459
        %v2972 = vpop.f32.mrf.mxu0
        %v2973 = vadd.f32 0.0, %v2972
        %2974 = vmatmul.f32.gmra.mxu0 %v2462
        %v2975 = vpop.f32.mrf.mxu0
        %v2976 = vadd.f32 0.0, %v2975
        %2977 = vmatmul.f32.gmra.mxu0 %v2465
        %v2978 = vpop.f32.mrf.mxu0
        %v2979 = vadd.f32 0.0, %v2978
        %2980 = vmatmul.f32.gmra.mxu0 %v2468
        %v2981 = vpop.f32.mrf.mxu0
        %v2982 = vadd.f32 0.0, %v2981
        %2983 = vmatmul.f32.gmra.mxu0 %v2471
        %v2984 = vpop.f32.mrf.mxu0
        %v2985 = vadd.f32 0.0, %v2984
        %2986 = vmatmul.f32.gmra.mxu0 %v2474
        %v2987 = vpop.f32.mrf.mxu0
        %v2988 = vadd.f32 0.0, %v2987
        %2989 = vmatmul.f32.gmra.mxu0 %v2477
        %v2990 = vpop.f32.mrf.mxu0
        %v2991 = vadd.f32 0.0, %v2990
        %2992 = vmatmul.f32.gmra.mxu0 %v2480
        %v2993 = vpop.f32.mrf.mxu0
        %v2994 = vadd.f32 0.0, %v2993
        %2995 = vmatmul.f32.gmra.mxu0 %v2483
        %v2996 = vpop.f32.mrf.mxu0
        %v2997 = vadd.f32 0.0, %v2996
        %2998 = vmatmul.f32.gmra.mxu0 %v2486
        %v2999 = vpop.f32.mrf.mxu0
        %v3000 = vadd.f32 0.0, %v2999
        %3001 = vmatmul.f32.gmra.mxu0 %v2489
        %v3002 = vpop.f32.mrf.mxu0
        %v3003 = vadd.f32 0.0, %v3002
        %3004 = vmatmul.f32.gmra.mxu0 %v2492
        %v3005 = vpop.f32.mrf.mxu0
        %v3006 = vadd.f32 0.0, %v3005
        %3007 = vmatmul.f32.gmra.mxu0 %v2495
        %v3008 = vpop.f32.mrf.mxu0
        %v3009 = vadd.f32 0.0, %v3008
        %3010 = vmatmul.f32.gmra.mxu0 %v2498
        %v3011 = vpop.f32.mrf.mxu0
        %v3012 = vadd.f32 0.0, %v3011
        %3013 = vmatmul.f32.gmra.mxu0 %v2501
        %v3014 = vpop.f32.mrf.mxu0
        %v3015 = vadd.f32 0.0, %v3014
        %3016 = vmatmul.f32.gmra.mxu0 %v2504
        %v3017 = vpop.f32.mrf.mxu0
        %v3018 = vadd.f32 0.0, %v3017
        %3019 = vmatmul.f32.gmra.mxu0 %v2507
        %v3020 = vpop.f32.mrf.mxu0
        %v3021 = vadd.f32 0.0, %v3020
        %3022 = vmatmul.f32.gmra.mxu0 %v2510
        %v3023 = vpop.f32.mrf.mxu0
        %v3024 = vadd.f32 0.0, %v3023
        %3025 = vmatmul.f32.gmra.mxu0 %v2513
        %v3026 = vpop.f32.mrf.mxu0
        %v3027 = vadd.f32 0.0, %v3026
        %3028 = vmatmul.f32.gmra.mxu0 %v2516
        %v3029 = vpop.f32.mrf.mxu0
        %v3030 = vadd.f32 0.0, %v3029
        %3031 = vmatmul.f32.gmra.mxu0 %v2519
        %v3032 = vpop.f32.mrf.mxu0
        %v3033 = vadd.f32 0.0, %v3032
        %3034 = vmatmul.f32.gmra.mxu0 %v2522
        %v3035 = vpop.f32.mrf.mxu0
        %v3036 = vadd.f32 0.0, %v3035
        %3037 = vmatmul.f32.gmra.mxu0 %v2525
        %v3038 = vpop.f32.mrf.mxu0
        %v3039 = vadd.f32 0.0, %v3038
        %3040 = vdwg.mxu0
        %v3041 = vmax.f32 %v2641, %v2689
        %v3042 = vmax.f32 %v2850, %v2898
        %v3043 = vmax.f32 %v2644, %v2692
        %v3044 = vmax.f32 %v2853, %v2901
        %v3045 = vmax.f32 %v2647, %v2695
        %v3046 = vmax.f32 %v2856, %v2904
        %v3047 = vmax.f32 %v2650, %v2698
        %v3048 = vmax.f32 %v2859, %v2907
        %v3049 = vmax.f32 %v2653, %v2701
        %v3050 = vmax.f32 %v2862, %v2910
        %v3051 = vmax.f32 %v2656, %v2704
        %v3052 = vmax.f32 %v2865, %v2913
        %v3053 = vmax.f32 %v2659, %v2707
        %v3054 = vmax.f32 %v2868, %v2916
        %v3055 = vmax.f32 %v2662, %v2710
        %v3056 = vmax.f32 %v2871, %v2919
        %v3057 = vmax.f32 %v2665, %v2713
        %v3058 = vmax.f32 %v2874, %v2922
        %v3059 = vmax.f32 %v2668, %v2716
        %v3060 = vmax.f32 %v2877, %v2925
        %v3061 = vmax.f32 %v2671, %v2719
        %v3062 = vmax.f32 %v2880, %v2928
        %v3063 = vmax.f32 %v2674, %v2722
        %v3064 = vmax.f32 %v2883, %v2931
        %v3065 = vmax.f32 %v2677, %v2725
        %v3066 = vmax.f32 %v2886, %v2934
        %v3067 = vmax.f32 %v2680, %v2728
        %v3068 = vmax.f32 %v2889, %v2937
        %v3069 = vmax.f32 %v2683, %v2731
        %v3070 = vmax.f32 %v2892, %v2940
        %v3071 = vmax.f32 %v2686, %v2734
        %v3072 = vmax.f32 %v2895, %v2943
        %v3073 = vmax.f32 %v3041, %v2737
        %v3074 = vmax.f32 %v3042, %v2946
        %v3075 = vmax.f32 %v3043, %v2740
        %v3076 = vmax.f32 %v3044, %v2949
        %v3077 = vmax.f32 %v3045, %v2743
        %v3078 = vmax.f32 %v3046, %v2952
        %v3079 = vmax.f32 %v3047, %v2746
        %v3080 = vmax.f32 %v3048, %v2955
        %v3081 = vmax.f32 %v3049, %v2749
        %v3082 = vmax.f32 %v3050, %v2958
        %v3083 = vmax.f32 %v3051, %v2752
        %v3084 = vmax.f32 %v3052, %v2961
        %v3085 = vmax.f32 %v3053, %v2755
        %v3086 = vmax.f32 %v3054, %v2964
        %v3087 = vmax.f32 %v3055, %v2758
        %v3088 = vmax.f32 %v3056, %v2967
        %v3089 = vmax.f32 %v3057, %v2761
        %v3090 = vmax.f32 %v3058, %v2970
        %v3091 = vmax.f32 %v3059, %v2764
        %v3092 = vmax.f32 %v3060, %v2973
        %v3093 = vmax.f32 %v3061, %v2767
        %v3094 = vmax.f32 %v3062, %v2976
        %v3095 = vmax.f32 %v3063, %v2770
        %v3096 = vmax.f32 %v3064, %v2979
        %v3097 = vmax.f32 %v3065, %v2773
        %v3098 = vmax.f32 %v3066, %v2982
        %v3099 = vmax.f32 %v3067, %v2776
        %v3100 = vmax.f32 %v3068, %v2985
        %v3101 = vmax.f32 %v3069, %v2779
        %v3102 = vmax.f32 %v3070, %v2988
        %v3103 = vmax.f32 %v3071, %v2782
        %v3104 = vmax.f32 %v3072, %v2991
        %v3105 = vmax.f32 %v3073, %v2785
        %v3106 = vmax.f32 %v3074, %v2994
        %v3107 = vmax.f32 %v3075, %v2788
        %v3108 = vmax.f32 %v3076, %v2997
        %v3109 = vmax.f32 %v3077, %v2791
        %v3110 = vmax.f32 %v3078, %v3000
        %v3111 = vmax.f32 %v3079, %v2794
        %v3112 = vmax.f32 %v3080, %v3003
        %v3113 = vmax.f32 %v3081, %v2797
        %v3114 = vmax.f32 %v3082, %v3006
        %v3115 = vmax.f32 %v3083, %v2800
        %v3116 = vmax.f32 %v3084, %v3009
        %v3117 = vmax.f32 %v3085, %v2803
        %v3118 = vmax.f32 %v3086, %v3012
        %v3119 = vmax.f32 %v3087, %v2806
        %v3120 = vmax.f32 %v3088, %v3015
        %v3121 = vmax.f32 %v3089, %v2809
        %v3122 = vmax.f32 %v3090, %v3018
        %v3123 = vmax.f32 %v3091, %v2812
        %v3124 = vmax.f32 %v3092, %v3021
        %v3125 = vmax.f32 %v3093, %v2815
        %v3126 = vmax.f32 %v3094, %v3024
        %v3127 = vmax.f32 %v3095, %v2818
        %v3128 = vmax.f32 %v3096, %v3027
        %v3129 = vmax.f32 %v3097, %v2821
        %v3130 = vmax.f32 %v3098, %v3030
        %v3131 = vmax.f32 %v3099, %v2824
        %v3132 = vmax.f32 %v3100, %v3033
        %v3133 = vmax.f32 %v3101, %v2827
        %v3134 = vmax.f32 %v3102, %v3036
        %v3135 = vmax.f32 %v3103, %v2830
        %v3136 = vmax.f32 %v3104, %v3039
        %v3137 = vsub.f32 %v2641, %v3105
        %v3138 = vsub.f32 %v2850, %v3106
        %v3139 = vsub.f32 %v2644, %v3107
        %v3140 = vsub.f32 %v2853, %v3108
        %v3141 = vsub.f32 %v2647, %v3109
        %v3142 = vsub.f32 %v2856, %v3110
        %v3143 = vsub.f32 %v2650, %v3111
        %v3144 = vsub.f32 %v2859, %v3112
        %v3145 = vsub.f32 %v2653, %v3113
        %v3146 = vsub.f32 %v2862, %v3114
        %v3147 = vsub.f32 %v2656, %v3115
        %v3148 = vsub.f32 %v2865, %v3116
        %v3149 = vsub.f32 %v2659, %v3117
        %v3150 = vsub.f32 %v2868, %v3118
        %v3151 = vsub.f32 %v2662, %v3119
        %v3152 = vsub.f32 %v2871, %v3120
        %v3153 = vsub.f32 %v2665, %v3121
        %v3154 = vsub.f32 %v2874, %v3122
        %v3155 = vsub.f32 %v2668, %v3123
        %v3156 = vsub.f32 %v2877, %v3124
        %v3157 = vsub.f32 %v2671, %v3125
        %v3158 = vsub.f32 %v2880, %v3126
        %v3159 = vsub.f32 %v2674, %v3127
        %v3160 = vsub.f32 %v2883, %v3128
        %v3161 = vsub.f32 %v2677, %v3129
        %v3162 = vsub.f32 %v2886, %v3130
        %v3163 = vsub.f32 %v2680, %v3131
        %v3164 = vsub.f32 %v2889, %v3132
        %v3165 = vsub.f32 %v2683, %v3133
        %v3166 = vsub.f32 %v2892, %v3134
        %v3167 = vsub.f32 %v2686, %v3135
        %v3168 = vsub.f32 %v2895, %v3136
        %v3169 = vmul.f32 %v3137, 1.442695
        %v3170 = vpow.pop %v3169
        %v3171 = vmul.f32 %v3138, 1.442695
        %v3172 = vpow.pop %v3171
        %v3173 = vmul.f32 %v3139, 1.442695
        %v3174 = vpow.pop %v3173
        %v3175 = vmul.f32 %v3140, 1.442695
        %v3176 = vpow.pop %v3175
        %v3177 = vmul.f32 %v3141, 1.442695
        %v3178 = vpow.pop %v3177
        %v3179 = vmul.f32 %v3142, 1.442695
        %v3180 = vpow.pop %v3179
        %v3181 = vmul.f32 %v3143, 1.442695
        %v3182 = vpow.pop %v3181
        %v3183 = vmul.f32 %v3144, 1.442695
        %v3184 = vpow.pop %v3183
        %v3185 = vmul.f32 %v3145, 1.442695
        %v3186 = vpow.pop %v3185
        %v3187 = vmul.f32 %v3146, 1.442695
        %v3188 = vpow.pop %v3187
        %v3189 = vmul.f32 %v3147, 1.442695
        %v3190 = vpow.pop %v3189
        %v3191 = vmul.f32 %v3148, 1.442695
        %v3192 = vpow.pop %v3191
        %v3193 = vmul.f32 %v3149, 1.442695
        %v3194 = vpow.pop %v3193
        %v3195 = vmul.f32 %v3150, 1.442695
        %v3196 = vpow.pop %v3195
        %v3197 = vmul.f32 %v3151, 1.442695
        %v3198 = vpow.pop %v3197
        %v3199 = vmul.f32 %v3152, 1.442695
        %v3200 = vpow.pop %v3199
        %v3201 = vmul.f32 %v3153, 1.442695
        %v3202 = vpow.pop %v3201
        %v3203 = vmul.f32 %v3154, 1.442695
        %v3204 = vpow.pop %v3203
        %v3205 = vmul.f32 %v3155, 1.442695
        %v3206 = vpow.pop %v3205
        %v3207 = vmul.f32 %v3156, 1.442695
        %v3208 = vpow.pop %v3207
        %v3209 = vmul.f32 %v3157, 1.442695
        %v3210 = vpow.pop %v3209
        %v3211 = vmul.f32 %v3158, 1.442695
        %v3212 = vpow.pop %v3211
        %v3213 = vmul.f32 %v3159, 1.442695
        %v3214 = vpow.pop %v3213
        %v3215 = vmul.f32 %v3160, 1.442695
        %v3216 = vpow.pop %v3215
        %v3217 = vmul.f32 %v3161, 1.442695
        %v3218 = vpow.pop %v3217
        %v3219 = vmul.f32 %v3162, 1.442695
        %v3220 = vpow.pop %v3219
        %v3221 = vmul.f32 %v3163, 1.442695
        %v3222 = vpow.pop %v3221
        %v3223 = vmul.f32 %v3164, 1.442695
        %v3224 = vpow.pop %v3223
        %v3225 = vmul.f32 %v3165, 1.442695
        %v3226 = vpow.pop %v3225
        %v3227 = vmul.f32 %v3166, 1.442695
        %v3228 = vpow.pop %v3227
        %v3229 = vmul.f32 %v3167, 1.442695
        %v3230 = vpow.pop %v3229
        %v3231 = vmul.f32 %v3168, 1.442695
        %v3232 = vpow.pop %v3231
        %v3233 = vperm.slane %v373, 0
        %v3234 = vperm.slane %v373, 4
        %v3237 = vperm.slane %v3233, 0
        %v3238 = vperm.slane %v3234, 0
        %v3239 = vmul.f32 %v3170, %v3237
        %v3240 = vmul.f32 %v3172, %v3238
        %v3241 = vmul.f32 %v3174, %v3237
        %v3242 = vmul.f32 %v3176, %v3238
        %v3243 = vmul.f32 %v3178, %v3237
        %v3244 = vmul.f32 %v3180, %v3238
        %v3245 = vmul.f32 %v3182, %v3237
        %v3246 = vmul.f32 %v3184, %v3238
        %v3247 = vmul.f32 %v3186, %v3237
        %v3248 = vmul.f32 %v3188, %v3238
        %v3249 = vmul.f32 %v3190, %v3237
        %v3250 = vmul.f32 %v3192, %v3238
        %v3251 = vmul.f32 %v3194, %v3237
        %v3252 = vmul.f32 %v3196, %v3238
        %v3253 = vmul.f32 %v3198, %v3237
        %v3254 = vmul.f32 %v3200, %v3238
        %v3255 = vmul.f32 %v3202, %v3237
        %v3256 = vmul.f32 %v3204, %v3238
        %v3257 = vmul.f32 %v3206, %v3237
        %v3258 = vmul.f32 %v3208, %v3238
        %v3259 = vmul.f32 %v3210, %v3237
        %v3260 = vmul.f32 %v3212, %v3238
        %v3261 = vmul.f32 %v3214, %v3237
        %v3262 = vmul.f32 %v3216, %v3238
        %v3263 = vmul.f32 %v3218, %v3237
        %v3264 = vmul.f32 %v3220, %v3238
        %v3265 = vmul.f32 %v3222, %v3237
        %v3266 = vmul.f32 %v3224, %v3238
        %v3267 = vmul.f32 %v3226, %v3237
        %v3268 = vmul.f32 %v3228, %v3238
        %v3269 = vmul.f32 %v3230, %v3237
        %v3270 = vmul.f32 %v3232, %v3238
        %v3271 = vadd.f32 %v3239, 0.0
        %v3272 = vadd.f32 %v3240, 0.0
        %v3273 = vadd.f32 %v3241, 0.0
        %v3274 = vadd.f32 %v3242, 0.0
        %v3275 = vadd.f32 %v3243, 0.0
        %v3276 = vadd.f32 %v3244, 0.0
        %v3277 = vadd.f32 %v3245, 0.0
        %v3278 = vadd.f32 %v3246, 0.0
        %v3279 = vadd.f32 %v3247, 0.0
        %v3280 = vadd.f32 %v3248, 0.0
        %v3281 = vadd.f32 %v3249, 0.0
        %v3282 = vadd.f32 %v3250, 0.0
        %v3283 = vadd.f32 %v3251, 0.0
        %v3284 = vadd.f32 %v3252, 0.0
        %v3285 = vadd.f32 %v3253, 0.0
        %v3286 = vadd.f32 %v3254, 0.0
        %v3287 = vadd.f32 %v3255, 0.0
        %v3288 = vadd.f32 %v3256, 0.0
        %v3289 = vadd.f32 %v3257, 0.0
        %v3290 = vadd.f32 %v3258, 0.0
        %v3291 = vadd.f32 %v3259, 0.0
        %v3292 = vadd.f32 %v3260, 0.0
        %v3293 = vadd.f32 %v3261, 0.0
        %v3294 = vadd.f32 %v3262, 0.0
        %v3295 = vadd.f32 %v3263, 0.0
        %v3296 = vadd.f32 %v3264, 0.0
        %v3297 = vadd.f32 %v3265, 0.0
        %v3298 = vadd.f32 %v3266, 0.0
        %v3299 = vadd.f32 %v3267, 0.0
        %v3300 = vadd.f32 %v3268, 0.0
        %v3301 = vadd.f32 %v3269, 0.0
        %v3302 = vadd.f32 %v3270, 0.0
        %v3303 = vsub.f32 %v2689, %v3105
        %v3304 = vsub.f32 %v2898, %v3106
        %v3305 = vsub.f32 %v2692, %v3107
        %v3306 = vsub.f32 %v2901, %v3108
        %v3307 = vsub.f32 %v2695, %v3109
        %v3308 = vsub.f32 %v2904, %v3110
        %v3309 = vsub.f32 %v2698, %v3111
        %v3310 = vsub.f32 %v2907, %v3112
        %v3311 = vsub.f32 %v2701, %v3113
        %v3312 = vsub.f32 %v2910, %v3114
        %v3313 = vsub.f32 %v2704, %v3115
        %v3314 = vsub.f32 %v2913, %v3116
        %v3315 = vsub.f32 %v2707, %v3117
        %v3316 = vsub.f32 %v2916, %v3118
        %v3317 = vsub.f32 %v2710, %v3119
        %v3318 = vsub.f32 %v2919, %v3120
        %v3319 = vsub.f32 %v2713, %v3121
        %v3320 = vsub.f32 %v2922, %v3122
        %v3321 = vsub.f32 %v2716, %v3123
        %v3322 = vsub.f32 %v2925, %v3124
        %v3323 = vsub.f32 %v2719, %v3125
        %v3324 = vsub.f32 %v2928, %v3126
        %v3325 = vsub.f32 %v2722, %v3127
        %v3326 = vsub.f32 %v2931, %v3128
        %v3327 = vsub.f32 %v2725, %v3129
        %v3328 = vsub.f32 %v2934, %v3130
        %v3329 = vsub.f32 %v2728, %v3131
        %v3330 = vsub.f32 %v2937, %v3132
        %v3331 = vsub.f32 %v2731, %v3133
        %v3332 = vsub.f32 %v2940, %v3134
        %v3333 = vsub.f32 %v2734, %v3135
        %v3334 = vsub.f32 %v2943, %v3136
        %v3335 = vmul.f32 %v3303, 1.442695
        %v3336 = vpow.pop %v3335
        %v3337 = vmul.f32 %v3304, 1.442695
        %v3338 = vpow.pop %v3337
        %v3339 = vmul.f32 %v3305, 1.442695
        %v3340 = vpow.pop %v3339
        %v3341 = vmul.f32 %v3306, 1.442695
        %v3342 = vpow.pop %v3341
        %v3343 = vmul.f32 %v3307, 1.442695
        %v3344 = vpow.pop %v3343
        %v3345 = vmul.f32 %v3308, 1.442695
        %v3346 = vpow.pop %v3345
        %v3347 = vmul.f32 %v3309, 1.442695
        %v3348 = vpow.pop %v3347
        %v3349 = vmul.f32 %v3310, 1.442695
        %v3350 = vpow.pop %v3349
        %v3351 = vmul.f32 %v3311, 1.442695
        %v3352 = vpow.pop %v3351
        %v3353 = vmul.f32 %v3312, 1.442695
        %v3354 = vpow.pop %v3353
        %v3355 = vmul.f32 %v3313, 1.442695
        %v3356 = vpow.pop %v3355
        %v3357 = vmul.f32 %v3314, 1.442695
        %v3358 = vpow.pop %v3357
        %v3359 = vmul.f32 %v3315, 1.442695
        %v3360 = vpow.pop %v3359
        %v3361 = vmul.f32 %v3316, 1.442695
        %v3362 = vpow.pop %v3361
        %v3363 = vmul.f32 %v3317, 1.442695
        %v3364 = vpow.pop %v3363
        %v3365 = vmul.f32 %v3318, 1.442695
        %v3366 = vpow.pop %v3365
        %v3367 = vmul.f32 %v3319, 1.442695
        %v3368 = vpow.pop %v3367
        %v3369 = vmul.f32 %v3320, 1.442695
        %v3370 = vpow.pop %v3369
        %v3371 = vmul.f32 %v3321, 1.442695
        %v3372 = vpow.pop %v3371
        %v3373 = vmul.f32 %v3322, 1.442695
        %v3374 = vpow.pop %v3373
        %v3375 = vmul.f32 %v3323, 1.442695
        %v3376 = vpow.pop %v3375
        %v3377 = vmul.f32 %v3324, 1.442695
        %v3378 = vpow.pop %v3377
        %v3379 = vmul.f32 %v3325, 1.442695
        %v3380 = vpow.pop %v3379
        %v3381 = vmul.f32 %v3326, 1.442695
        %v3382 = vpow.pop %v3381
        %v3383 = vmul.f32 %v3327, 1.442695
        %v3384 = vpow.pop %v3383
        %v3385 = vmul.f32 %v3328, 1.442695
        %v3386 = vpow.pop %v3385
        %v3387 = vmul.f32 %v3329, 1.442695
        %v3388 = vpow.pop %v3387
        %v3389 = vmul.f32 %v3330, 1.442695
        %v3390 = vpow.pop %v3389
        %v3391 = vmul.f32 %v3331, 1.442695
        %v3392 = vpow.pop %v3391
        %v3393 = vmul.f32 %v3332, 1.442695
        %v3394 = vpow.pop %v3393
        %v3395 = vmul.f32 %v3333, 1.442695
        %v3396 = vpow.pop %v3395
        %v3397 = vmul.f32 %v3334, 1.442695
        %v3398 = vpow.pop %v3397
        %v3399 = vperm.slane %v373, 1
        %v3400 = vperm.slane %v373, 5
        %v3403 = vperm.slane %v3399, 1
        %v3404 = vperm.slane %v3400, 1
        %v3405 = vmul.f32 %v3336, %v3403
        %v3406 = vmul.f32 %v3338, %v3404
        %v3407 = vmul.f32 %v3340, %v3403
        %v3408 = vmul.f32 %v3342, %v3404
        %v3409 = vmul.f32 %v3344, %v3403
        %v3410 = vmul.f32 %v3346, %v3404
        %v3411 = vmul.f32 %v3348, %v3403
        %v3412 = vmul.f32 %v3350, %v3404
        %v3413 = vmul.f32 %v3352, %v3403
        %v3414 = vmul.f32 %v3354, %v3404
        %v3415 = vmul.f32 %v3356, %v3403
        %v3416 = vmul.f32 %v3358, %v3404
        %v3417 = vmul.f32 %v3360, %v3403
        %v3418 = vmul.f32 %v3362, %v3404
        %v3419 = vmul.f32 %v3364, %v3403
        %v3420 = vmul.f32 %v3366, %v3404
        %v3421 = vmul.f32 %v3368, %v3403
        %v3422 = vmul.f32 %v3370, %v3404
        %v3423 = vmul.f32 %v3372, %v3403
        %v3424 = vmul.f32 %v3374, %v3404
        %v3425 = vmul.f32 %v3376, %v3403
        %v3426 = vmul.f32 %v3378, %v3404
        %v3427 = vmul.f32 %v3380, %v3403
        %v3428 = vmul.f32 %v3382, %v3404
        %v3429 = vmul.f32 %v3384, %v3403
        %v3430 = vmul.f32 %v3386, %v3404
        %v3431 = vmul.f32 %v3388, %v3403
        %v3432 = vmul.f32 %v3390, %v3404
        %v3433 = vmul.f32 %v3392, %v3403
        %v3434 = vmul.f32 %v3394, %v3404
        %v3435 = vmul.f32 %v3396, %v3403
        %v3436 = vmul.f32 %v3398, %v3404
        %v3437 = vadd.f32 %v3271, %v3405
        %v3438 = vadd.f32 %v3272, %v3406
        %v3439 = vadd.f32 %v3273, %v3407
        %v3440 = vadd.f32 %v3274, %v3408
        %v3441 = vadd.f32 %v3275, %v3409
        %v3442 = vadd.f32 %v3276, %v3410
        %v3443 = vadd.f32 %v3277, %v3411
        %v3444 = vadd.f32 %v3278, %v3412
        %v3445 = vadd.f32 %v3279, %v3413
        %v3446 = vadd.f32 %v3280, %v3414
        %v3447 = vadd.f32 %v3281, %v3415
        %v3448 = vadd.f32 %v3282, %v3416
        %v3449 = vadd.f32 %v3283, %v3417
        %v3450 = vadd.f32 %v3284, %v3418
        %v3451 = vadd.f32 %v3285, %v3419
        %v3452 = vadd.f32 %v3286, %v3420
        %v3453 = vadd.f32 %v3287, %v3421
        %v3454 = vadd.f32 %v3288, %v3422
        %v3455 = vadd.f32 %v3289, %v3423
        %v3456 = vadd.f32 %v3290, %v3424
        %v3457 = vadd.f32 %v3291, %v3425
        %v3458 = vadd.f32 %v3292, %v3426
        %v3459 = vadd.f32 %v3293, %v3427
        %v3460 = vadd.f32 %v3294, %v3428
        %v3461 = vadd.f32 %v3295, %v3429
        %v3462 = vadd.f32 %v3296, %v3430
        %v3463 = vadd.f32 %v3297, %v3431
        %v3464 = vadd.f32 %v3298, %v3432
        %v3465 = vadd.f32 %v3299, %v3433
        %v3466 = vadd.f32 %v3300, %v3434
        %v3467 = vadd.f32 %v3301, %v3435
        %v3468 = vadd.f32 %v3302, %v3436
        %v3469 = vsub.f32 %v2737, %v3105
        %v3470 = vsub.f32 %v2946, %v3106
        %v3471 = vsub.f32 %v2740, %v3107
        %v3472 = vsub.f32 %v2949, %v3108
        %v3473 = vsub.f32 %v2743, %v3109
        %v3474 = vsub.f32 %v2952, %v3110
        %v3475 = vsub.f32 %v2746, %v3111
        %v3476 = vsub.f32 %v2955, %v3112
        %v3477 = vsub.f32 %v2749, %v3113
        %v3478 = vsub.f32 %v2958, %v3114
        %v3479 = vsub.f32 %v2752, %v3115
        %v3480 = vsub.f32 %v2961, %v3116
        %v3481 = vsub.f32 %v2755, %v3117
        %v3482 = vsub.f32 %v2964, %v3118
        %v3483 = vsub.f32 %v2758, %v3119
        %v3484 = vsub.f32 %v2967, %v3120
        %v3485 = vsub.f32 %v2761, %v3121
        %v3486 = vsub.f32 %v2970, %v3122
        %v3487 = vsub.f32 %v2764, %v3123
        %v3488 = vsub.f32 %v2973, %v3124
        %v3489 = vsub.f32 %v2767, %v3125
        %v3490 = vsub.f32 %v2976, %v3126
        %v3491 = vsub.f32 %v2770, %v3127
        %v3492 = vsub.f32 %v2979, %v3128
        %v3493 = vsub.f32 %v2773, %v3129
        %v3494 = vsub.f32 %v2982, %v3130
        %v3495 = vsub.f32 %v2776, %v3131
        %v3496 = vsub.f32 %v2985, %v3132
        %v3497 = vsub.f32 %v2779, %v3133
        %v3498 = vsub.f32 %v2988, %v3134
        %v3499 = vsub.f32 %v2782, %v3135
        %v3500 = vsub.f32 %v2991, %v3136
        %v3501 = vmul.f32 %v3469, 1.442695
        %v3502 = vpow.pop %v3501
        %v3503 = vmul.f32 %v3470, 1.442695
        %v3504 = vpow.pop %v3503
        %v3505 = vmul.f32 %v3471, 1.442695
        %v3506 = vpow.pop %v3505
        %v3507 = vmul.f32 %v3472, 1.442695
        %v3508 = vpow.pop %v3507
        %v3509 = vmul.f32 %v3473, 1.442695
        %v3510 = vpow.pop %v3509
        %v3511 = vmul.f32 %v3474, 1.442695
        %v3512 = vpow.pop %v3511
        %v3513 = vmul.f32 %v3475, 1.442695
        %v3514 = vpow.pop %v3513
        %v3515 = vmul.f32 %v3476, 1.442695
        %v3516 = vpow.pop %v3515
        %v3517 = vmul.f32 %v3477, 1.442695
        %v3518 = vpow.pop %v3517
        %v3519 = vmul.f32 %v3478, 1.442695
        %v3520 = vpow.pop %v3519
        %v3521 = vmul.f32 %v3479, 1.442695
        %v3522 = vpow.pop %v3521
        %v3523 = vmul.f32 %v3480, 1.442695
        %v3524 = vpow.pop %v3523
        %v3525 = vmul.f32 %v3481, 1.442695
        %v3526 = vpow.pop %v3525
        %v3527 = vmul.f32 %v3482, 1.442695
        %v3528 = vpow.pop %v3527
        %v3529 = vmul.f32 %v3483, 1.442695
        %v3530 = vpow.pop %v3529
        %v3531 = vmul.f32 %v3484, 1.442695
        %v3532 = vpow.pop %v3531
        %v3533 = vmul.f32 %v3485, 1.442695
        %v3534 = vpow.pop %v3533
        %v3535 = vmul.f32 %v3486, 1.442695
        %v3536 = vpow.pop %v3535
        %v3537 = vmul.f32 %v3487, 1.442695
        %v3538 = vpow.pop %v3537
        %v3539 = vmul.f32 %v3488, 1.442695
        %v3540 = vpow.pop %v3539
        %v3541 = vmul.f32 %v3489, 1.442695
        %v3542 = vpow.pop %v3541
        %v3543 = vmul.f32 %v3490, 1.442695
        %v3544 = vpow.pop %v3543
        %v3545 = vmul.f32 %v3491, 1.442695
        %v3546 = vpow.pop %v3545
        %v3547 = vmul.f32 %v3492, 1.442695
        %v3548 = vpow.pop %v3547
        %v3549 = vmul.f32 %v3493, 1.442695
        %v3550 = vpow.pop %v3549
        %v3551 = vmul.f32 %v3494, 1.442695
        %v3552 = vpow.pop %v3551
        %v3553 = vmul.f32 %v3495, 1.442695
        %v3554 = vpow.pop %v3553
        %v3555 = vmul.f32 %v3496, 1.442695
        %v3556 = vpow.pop %v3555
        %v3557 = vmul.f32 %v3497, 1.442695
        %v3558 = vpow.pop %v3557
        %v3559 = vmul.f32 %v3498, 1.442695
        %v3560 = vpow.pop %v3559
        %v3561 = vmul.f32 %v3499, 1.442695
        %v3562 = vpow.pop %v3561
        %v3563 = vmul.f32 %v3500, 1.442695
        %v3564 = vpow.pop %v3563
        %v3565 = vperm.slane %v373, 2
        %v3566 = vperm.slane %v373, 6
        %v3569 = vperm.slane %v3565, 2
        %v3570 = vperm.slane %v3566, 2
        %v3571 = vmul.f32 %v3502, %v3569
        %v3572 = vmul.f32 %v3504, %v3570
        %v3573 = vmul.f32 %v3506, %v3569
        %v3574 = vmul.f32 %v3508, %v3570
        %v3575 = vmul.f32 %v3510, %v3569
        %v3576 = vmul.f32 %v3512, %v3570
        %v3577 = vmul.f32 %v3514, %v3569
        %v3578 = vmul.f32 %v3516, %v3570
        %v3579 = vmul.f32 %v3518, %v3569
        %v3580 = vmul.f32 %v3520, %v3570
        %v3581 = vmul.f32 %v3522, %v3569
        %v3582 = vmul.f32 %v3524, %v3570
        %v3583 = vmul.f32 %v3526, %v3569
        %v3584 = vmul.f32 %v3528, %v3570
        %v3585 = vmul.f32 %v3530, %v3569
        %v3586 = vmul.f32 %v3532, %v3570
        %v3587 = vmul.f32 %v3534, %v3569
        %v3588 = vmul.f32 %v3536, %v3570
        %v3589 = vmul.f32 %v3538, %v3569
        %v3590 = vmul.f32 %v3540, %v3570
        %v3591 = vmul.f32 %v3542, %v3569
        %v3592 = vmul.f32 %v3544, %v3570
        %v3593 = vmul.f32 %v3546, %v3569
        %v3594 = vmul.f32 %v3548, %v3570
        %v3595 = vmul.f32 %v3550, %v3569
        %v3596 = vmul.f32 %v3552, %v3570
        %v3597 = vmul.f32 %v3554, %v3569
        %v3598 = vmul.f32 %v3556, %v3570
        %v3599 = vmul.f32 %v3558, %v3569
        %v3600 = vmul.f32 %v3560, %v3570
        %v3601 = vmul.f32 %v3562, %v3569
        %v3602 = vmul.f32 %v3564, %v3570
        %v3603 = vadd.f32 %v3437, %v3571
        %v3604 = vadd.f32 %v3438, %v3572
        %v3605 = vadd.f32 %v3439, %v3573
        %v3606 = vadd.f32 %v3440, %v3574
        %v3607 = vadd.f32 %v3441, %v3575
        %v3608 = vadd.f32 %v3442, %v3576
        %v3609 = vadd.f32 %v3443, %v3577
        %v3610 = vadd.f32 %v3444, %v3578
        %v3611 = vadd.f32 %v3445, %v3579
        %v3612 = vadd.f32 %v3446, %v3580
        %v3613 = vadd.f32 %v3447, %v3581
        %v3614 = vadd.f32 %v3448, %v3582
        %v3615 = vadd.f32 %v3449, %v3583
        %v3616 = vadd.f32 %v3450, %v3584
        %v3617 = vadd.f32 %v3451, %v3585
        %v3618 = vadd.f32 %v3452, %v3586
        %v3619 = vadd.f32 %v3453, %v3587
        %v3620 = vadd.f32 %v3454, %v3588
        %v3621 = vadd.f32 %v3455, %v3589
        %v3622 = vadd.f32 %v3456, %v3590
        %v3623 = vadd.f32 %v3457, %v3591
        %v3624 = vadd.f32 %v3458, %v3592
        %v3625 = vadd.f32 %v3459, %v3593
        %v3626 = vadd.f32 %v3460, %v3594
        %v3627 = vadd.f32 %v3461, %v3595
        %v3628 = vadd.f32 %v3462, %v3596
        %v3629 = vadd.f32 %v3463, %v3597
        %v3630 = vadd.f32 %v3464, %v3598
        %v3631 = vadd.f32 %v3465, %v3599
        %v3632 = vadd.f32 %v3466, %v3600
        %v3633 = vadd.f32 %v3467, %v3601
        %v3634 = vadd.f32 %v3468, %v3602
        %v3635 = vsub.f32 %v2785, %v3105
        %v3636 = vsub.f32 %v2994, %v3106
        %v3637 = vsub.f32 %v2788, %v3107
        %v3638 = vsub.f32 %v2997, %v3108
        %v3639 = vsub.f32 %v2791, %v3109
        %v3640 = vsub.f32 %v3000, %v3110
        %v3641 = vsub.f32 %v2794, %v3111
        %v3642 = vsub.f32 %v3003, %v3112
        %v3643 = vsub.f32 %v2797, %v3113
        %v3644 = vsub.f32 %v3006, %v3114
        %v3645 = vsub.f32 %v2800, %v3115
        %v3646 = vsub.f32 %v3009, %v3116
        %v3647 = vsub.f32 %v2803, %v3117
        %v3648 = vsub.f32 %v3012, %v3118
        %v3649 = vsub.f32 %v2806, %v3119
        %v3650 = vsub.f32 %v3015, %v3120
        %v3651 = vsub.f32 %v2809, %v3121
        %v3652 = vsub.f32 %v3018, %v3122
        %v3653 = vsub.f32 %v2812, %v3123
        %v3654 = vsub.f32 %v3021, %v3124
        %v3655 = vsub.f32 %v2815, %v3125
        %v3656 = vsub.f32 %v3024, %v3126
        %v3657 = vsub.f32 %v2818, %v3127
        %v3658 = vsub.f32 %v3027, %v3128
        %v3659 = vsub.f32 %v2821, %v3129
        %v3660 = vsub.f32 %v3030, %v3130
        %v3661 = vsub.f32 %v2824, %v3131
        %v3662 = vsub.f32 %v3033, %v3132
        %v3663 = vsub.f32 %v2827, %v3133
        %v3664 = vsub.f32 %v3036, %v3134
        %v3665 = vsub.f32 %v2830, %v3135
        %v3666 = vsub.f32 %v3039, %v3136
        %v3667 = vmul.f32 %v3635, 1.442695
        %v3668 = vpow.pop %v3667
        %v3669 = vmul.f32 %v3636, 1.442695
        %v3670 = vpow.pop %v3669
        %v3671 = vmul.f32 %v3637, 1.442695
        %v3672 = vpow.pop %v3671
        %v3673 = vmul.f32 %v3638, 1.442695
        %v3674 = vpow.pop %v3673
        %v3675 = vmul.f32 %v3639, 1.442695
        %v3676 = vpow.pop %v3675
        %v3677 = vmul.f32 %v3640, 1.442695
        %v3678 = vpow.pop %v3677
        %v3679 = vmul.f32 %v3641, 1.442695
        %v3680 = vpow.pop %v3679
        %v3681 = vmul.f32 %v3642, 1.442695
        %v3682 = vpow.pop %v3681
        %v3683 = vmul.f32 %v3643, 1.442695
        %v3684 = vpow.pop %v3683
        %v3685 = vmul.f32 %v3644, 1.442695
        %v3686 = vpow.pop %v3685
        %v3687 = vmul.f32 %v3645, 1.442695
        %v3688 = vpow.pop %v3687
        %v3689 = vmul.f32 %v3646, 1.442695
        %v3690 = vpow.pop %v3689
        %v3691 = vmul.f32 %v3647, 1.442695
        %v3692 = vpow.pop %v3691
        %v3693 = vmul.f32 %v3648, 1.442695
        %v3694 = vpow.pop %v3693
        %v3695 = vmul.f32 %v3649, 1.442695
        %v3696 = vpow.pop %v3695
        %v3697 = vmul.f32 %v3650, 1.442695
        %v3698 = vpow.pop %v3697
        %v3699 = vmul.f32 %v3651, 1.442695
        %v3700 = vpow.pop %v3699
        %v3701 = vmul.f32 %v3652, 1.442695
        %v3702 = vpow.pop %v3701
        %v3703 = vmul.f32 %v3653, 1.442695
        %v3704 = vpow.pop %v3703
        %v3705 = vmul.f32 %v3654, 1.442695
        %v3706 = vpow.pop %v3705
        %v3707 = vmul.f32 %v3655, 1.442695
        %v3708 = vpow.pop %v3707
        %v3709 = vmul.f32 %v3656, 1.442695
        %v3710 = vpow.pop %v3709
        %v3711 = vmul.f32 %v3657, 1.442695
        %v3712 = vpow.pop %v3711
        %v3713 = vmul.f32 %v3658, 1.442695
        %v3714 = vpow.pop %v3713
        %v3715 = vmul.f32 %v3659, 1.442695
        %v3716 = vpow.pop %v3715
        %v3717 = vmul.f32 %v3660, 1.442695
        %v3718 = vpow.pop %v3717
        %v3719 = vmul.f32 %v3661, 1.442695
        %v3720 = vpow.pop %v3719
        %v3721 = vmul.f32 %v3662, 1.442695
        %v3722 = vpow.pop %v3721
        %v3723 = vmul.f32 %v3663, 1.442695
        %v3724 = vpow.pop %v3723
        %v3725 = vmul.f32 %v3664, 1.442695
        %v3726 = vpow.pop %v3725
        %v3727 = vmul.f32 %v3665, 1.442695
        %v3728 = vpow.pop %v3727
        %v3729 = vmul.f32 %v3666, 1.442695
        %v3730 = vpow.pop %v3729
        %v3731 = vperm.slane %v373, 3
        %v3732 = vperm.slane %v373, 7
        %v3735 = vperm.slane %v3731, 3
        %v3736 = vperm.slane %v3732, 3
        %v3737 = vmul.f32 %v3668, %v3735
        %v3738 = vmul.f32 %v3670, %v3736
        %v3739 = vmul.f32 %v3672, %v3735
        %v3740 = vmul.f32 %v3674, %v3736
        %v3741 = vmul.f32 %v3676, %v3735
        %v3742 = vmul.f32 %v3678, %v3736
        %v3743 = vmul.f32 %v3680, %v3735
        %v3744 = vmul.f32 %v3682, %v3736
        %v3745 = vmul.f32 %v3684, %v3735
        %v3746 = vmul.f32 %v3686, %v3736
        %v3747 = vmul.f32 %v3688, %v3735
        %v3748 = vmul.f32 %v3690, %v3736
        %v3749 = vmul.f32 %v3692, %v3735
        %v3750 = vmul.f32 %v3694, %v3736
        %v3751 = vmul.f32 %v3696, %v3735
        %v3752 = vmul.f32 %v3698, %v3736
        %v3753 = vmul.f32 %v3700, %v3735
        %v3754 = vmul.f32 %v3702, %v3736
        %v3755 = vmul.f32 %v3704, %v3735
        %v3756 = vmul.f32 %v3706, %v3736
        %v3757 = vmul.f32 %v3708, %v3735
        %v3758 = vmul.f32 %v3710, %v3736
        %v3759 = vmul.f32 %v3712, %v3735
        %v3760 = vmul.f32 %v3714, %v3736
        %v3761 = vmul.f32 %v3716, %v3735
        %v3762 = vmul.f32 %v3718, %v3736
        %v3763 = vmul.f32 %v3720, %v3735
        %v3764 = vmul.f32 %v3722, %v3736
        %v3765 = vmul.f32 %v3724, %v3735
        %v3766 = vmul.f32 %v3726, %v3736
        %v3767 = vmul.f32 %v3728, %v3735
        %v3768 = vmul.f32 %v3730, %v3736
        %v3769 = vadd.f32 %v3603, %v3737
        %v3770 = vadd.f32 %v3604, %v3738
        %v3771 = vadd.f32 %v3605, %v3739
        %v3772 = vadd.f32 %v3606, %v3740
        %v3773 = vadd.f32 %v3607, %v3741
        %v3774 = vadd.f32 %v3608, %v3742
        %v3775 = vadd.f32 %v3609, %v3743
        %v3776 = vadd.f32 %v3610, %v3744
        %v3777 = vadd.f32 %v3611, %v3745
        %v3778 = vadd.f32 %v3612, %v3746
        %v3779 = vadd.f32 %v3613, %v3747
        %v3780 = vadd.f32 %v3614, %v3748
        %v3781 = vadd.f32 %v3615, %v3749
        %v3782 = vadd.f32 %v3616, %v3750
        %v3783 = vadd.f32 %v3617, %v3751
        %v3784 = vadd.f32 %v3618, %v3752
        %v3785 = vadd.f32 %v3619, %v3753
        %v3786 = vadd.f32 %v3620, %v3754
        %v3787 = vadd.f32 %v3621, %v3755
        %v3788 = vadd.f32 %v3622, %v3756
        %v3789 = vadd.f32 %v3623, %v3757
        %v3790 = vadd.f32 %v3624, %v3758
        %v3791 = vadd.f32 %v3625, %v3759
        %v3792 = vadd.f32 %v3626, %v3760
        %v3793 = vadd.f32 %v3627, %v3761
        %v3794 = vadd.f32 %v3628, %v3762
        %v3795 = vadd.f32 %v3629, %v3763
        %v3796 = vadd.f32 %v3630, %v3764
        %v3797 = vadd.f32 %v3631, %v3765
        %v3798 = vadd.f32 %v3632, %v3766
        %v3799 = vadd.f32 %v3633, %v3767
        %v3800 = vadd.f32 %v3634, %v3768
        %v3801 = vlog2.pop %v3769
        %v3802 = vmul.f32 %v3801, 0.6931472
        %v3803 = vlog2.pop %v3770
        %v3804 = vmul.f32 %v3803, 0.6931472
        %v3805 = vlog2.pop %v3771
        %v3806 = vmul.f32 %v3805, 0.6931472
        %v3807 = vlog2.pop %v3772
        %v3808 = vmul.f32 %v3807, 0.6931472
        %v3809 = vlog2.pop %v3773
        %v3810 = vmul.f32 %v3809, 0.6931472
        %v3811 = vlog2.pop %v3774
        %v3812 = vmul.f32 %v3811, 0.6931472
        %v3813 = vlog2.pop %v3775
        %v3814 = vmul.f32 %v3813, 0.6931472
        %v3815 = vlog2.pop %v3776
        %v3816 = vmul.f32 %v3815, 0.6931472
        %v3817 = vlog2.pop %v3777
        %v3818 = vmul.f32 %v3817, 0.6931472
        %v3819 = vlog2.pop %v3778
        %v3820 = vmul.f32 %v3819, 0.6931472
        %v3821 = vlog2.pop %v3779
        %v3822 = vmul.f32 %v3821, 0.6931472
        %v3823 = vlog2.pop %v3780
        %v3824 = vmul.f32 %v3823, 0.6931472
        %v3825 = vlog2.pop %v3781
        %v3826 = vmul.f32 %v3825, 0.6931472
        %v3827 = vlog2.pop %v3782
        %v3828 = vmul.f32 %v3827, 0.6931472
        %v3829 = vlog2.pop %v3783
        %v3830 = vmul.f32 %v3829, 0.6931472
        %v3831 = vlog2.pop %v3784
        %v3832 = vmul.f32 %v3831, 0.6931472
        %v3833 = vlog2.pop %v3785
        %v3834 = vmul.f32 %v3833, 0.6931472
        %v3835 = vlog2.pop %v3786
        %v3836 = vmul.f32 %v3835, 0.6931472
        %v3837 = vlog2.pop %v3787
        %v3838 = vmul.f32 %v3837, 0.6931472
        %v3839 = vlog2.pop %v3788
        %v3840 = vmul.f32 %v3839, 0.6931472
        %v3841 = vlog2.pop %v3789
        %v3842 = vmul.f32 %v3841, 0.6931472
        %v3843 = vlog2.pop %v3790
        %v3844 = vmul.f32 %v3843, 0.6931472
        %v3845 = vlog2.pop %v3791
        %v3846 = vmul.f32 %v3845, 0.6931472
        %v3847 = vlog2.pop %v3792
        %v3848 = vmul.f32 %v3847, 0.6931472
        %v3849 = vlog2.pop %v3793
        %v3850 = vmul.f32 %v3849, 0.6931472
        %v3851 = vlog2.pop %v3794
        %v3852 = vmul.f32 %v3851, 0.6931472
        %v3853 = vlog2.pop %v3795
        %v3854 = vmul.f32 %v3853, 0.6931472
        %v3855 = vlog2.pop %v3796
        %v3856 = vmul.f32 %v3855, 0.6931472
        %v3857 = vlog2.pop %v3797
        %v3858 = vmul.f32 %v3857, 0.6931472
        %v3859 = vlog2.pop %v3798
        %v3860 = vmul.f32 %v3859, 0.6931472
        %v3861 = vlog2.pop %v3799
        %v3862 = vmul.f32 %v3861, 0.6931472
        %v3863 = vlog2.pop %v3800
        %v3864 = vmul.f32 %v3863, 0.6931472
        %v3865 = vadd.f32 %v3105, %v3802
        %v3866 = vadd.f32 %v3106, %v3804
        %v3867 = vadd.f32 %v3107, %v3806
        %v3868 = vadd.f32 %v3108, %v3808
        %v3869 = vadd.f32 %v3109, %v3810
        %v3870 = vadd.f32 %v3110, %v3812
        %v3871 = vadd.f32 %v3111, %v3814
        %v3872 = vadd.f32 %v3112, %v3816
        %v3873 = vadd.f32 %v3113, %v3818
        %v3874 = vadd.f32 %v3114, %v3820
        %v3875 = vadd.f32 %v3115, %v3822
        %v3876 = vadd.f32 %v3116, %v3824
        %v3877 = vadd.f32 %v3117, %v3826
        %v3878 = vadd.f32 %v3118, %v3828
        %v3879 = vadd.f32 %v3119, %v3830
        %v3880 = vadd.f32 %v3120, %v3832
        %v3881 = vadd.f32 %v3121, %v3834
        %v3882 = vadd.f32 %v3122, %v3836
        %v3883 = vadd.f32 %v3123, %v3838
        %v3884 = vadd.f32 %v3124, %v3840
        %v3885 = vadd.f32 %v3125, %v3842
        %v3886 = vadd.f32 %v3126, %v3844
        %v3887 = vadd.f32 %v3127, %v3846
        %v3888 = vadd.f32 %v3128, %v3848
        %v3889 = vadd.f32 %v3129, %v3850
        %v3890 = vadd.f32 %v3130, %v3852
        %v3891 = vadd.f32 %v3131, %v3854
        %v3892 = vadd.f32 %v3132, %v3856
        %v3893 = vadd.f32 %v3133, %v3858
        %v3894 = vadd.f32 %v3134, %v3860
        %v3895 = vadd.f32 %v3135, %v3862
        %v3896 = vadd.f32 %v3136, %v3864
        %v3897 = vmax.f32 %v3865, %v3866
        %3898 = vmax.xlane.f32.xlu0 %v3897
        %v3899 = vpop.xlane.xlu0 %3898
        %v3900 = vmax.f32 %v3867, %v3868
        %3901 = vmax.xlane.f32.xlu0 %v3900
        %v3902 = vpop.xlane.xlu0 %3901
        %v3903 = vmax.f32 %v3869, %v3870
        %3904 = vmax.xlane.f32.xlu0 %v3903
        %v3905 = vpop.xlane.xlu0 %3904
        %v3906 = vmax.f32 %v3871, %v3872
        %3907 = vmax.xlane.f32.xlu0 %v3906
        %v3908 = vpop.xlane.xlu0 %3907
        %v3909 = vmax.f32 %v3873, %v3874
        %3910 = vmax.xlane.f32.xlu0 %v3909
        %v3911 = vpop.xlane.xlu0 %3910
        %v3912 = vmax.f32 %v3875, %v3876
        %3913 = vmax.xlane.f32.xlu0 %v3912
        %v3914 = vpop.xlane.xlu0 %3913
        %v3915 = vmax.f32 %v3877, %v3878
        %3916 = vmax.xlane.f32.xlu0 %v3915
        %v3917 = vpop.xlane.xlu0 %3916
        %v3918 = vmax.f32 %v3879, %v3880
        %3919 = vmax.xlane.f32.xlu0 %v3918
        %v3920 = vpop.xlane.xlu0 %3919
        %v3921 = vmax.f32 %v3881, %v3882
        %3922 = vmax.xlane.f32.xlu0 %v3921
        %v3923 = vpop.xlane.xlu0 %3922
        %v3924 = vmax.f32 %v3883, %v3884
        %3925 = vmax.xlane.f32.xlu0 %v3924
        %v3926 = vpop.xlane.xlu0 %3925
        %v3927 = vmax.f32 %v3885, %v3886
        %3928 = vmax.xlane.f32.xlu0 %v3927
        %v3929 = vpop.xlane.xlu0 %3928
        %v3930 = vmax.f32 %v3887, %v3888
        %3931 = vmax.xlane.f32.xlu0 %v3930
        %v3932 = vpop.xlane.xlu0 %3931
        %v3933 = vmax.f32 %v3889, %v3890
        %3934 = vmax.xlane.f32.xlu0 %v3933
        %v3935 = vpop.xlane.xlu0 %3934
        %v3936 = vmax.f32 %v3891, %v3892
        %3937 = vmax.xlane.f32.xlu0 %v3936
        %v3938 = vpop.xlane.xlu0 %3937
        %v3939 = vmax.f32 %v3893, %v3894
        %3940 = vmax.xlane.f32.xlu0 %v3939
        %v3941 = vpop.xlane.xlu0 %3940
        %v3942 = vmax.f32 %v3895, %v3896
        %3943 = vmax.xlane.f32.xlu0 %v3942
        %v3944 = vpop.xlane.xlu0 %3943
        %v3945 = vsub.f32 %v3105, %v3899
        %v3946 = vsub.f32 %v3106, %v3899
        %v3947 = vsub.f32 %v3107, %v3902
        %v3948 = vsub.f32 %v3108, %v3902
        %v3949 = vsub.f32 %v3109, %v3905
        %v3950 = vsub.f32 %v3110, %v3905
        %v3951 = vsub.f32 %v3111, %v3908
        %v3952 = vsub.f32 %v3112, %v3908
        %v3953 = vsub.f32 %v3113, %v3911
        %v3954 = vsub.f32 %v3114, %v3911
        %v3955 = vsub.f32 %v3115, %v3914
        %v3956 = vsub.f32 %v3116, %v3914
        %v3957 = vsub.f32 %v3117, %v3917
        %v3958 = vsub.f32 %v3118, %v3917
        %v3959 = vsub.f32 %v3119, %v3920
        %v3960 = vsub.f32 %v3120, %v3920
        %v3961 = vsub.f32 %v3121, %v3923
        %v3962 = vsub.f32 %v3122, %v3923
        %v3963 = vsub.f32 %v3123, %v3926
        %v3964 = vsub.f32 %v3124, %v3926
        %v3965 = vsub.f32 %v3125, %v3929
        %v3966 = vsub.f32 %v3126, %v3929
        %v3967 = vsub.f32 %v3127, %v3932
        %v3968 = vsub.f32 %v3128, %v3932
        %v3969 = vsub.f32 %v3129, %v3935
        %v3970 = vsub.f32 %v3130, %v3935
        %v3971 = vsub.f32 %v3131, %v3938
        %v3972 = vsub.f32 %v3132, %v3938
        %v3973 = vsub.f32 %v3133, %v3941
        %v3974 = vsub.f32 %v3134, %v3941
        %v3975 = vsub.f32 %v3135, %v3944
        %v3976 = vsub.f32 %v3136, %v3944
        %v3977 = vmul.f32 %v3945, 1.442695
        %v3978 = vpow.pop %v3977
        %v3979 = vmul.f32 %v3946, 1.442695
        %v3980 = vpow.pop %v3979
        %v3981 = vmul.f32 %v3947, 1.442695
        %v3982 = vpow.pop %v3981
        %v3983 = vmul.f32 %v3948, 1.442695
        %v3984 = vpow.pop %v3983
        %v3985 = vmul.f32 %v3949, 1.442695
        %v3986 = vpow.pop %v3985
        %v3987 = vmul.f32 %v3950, 1.442695
        %v3988 = vpow.pop %v3987
        %v3989 = vmul.f32 %v3951, 1.442695
        %v3990 = vpow.pop %v3989
        %v3991 = vmul.f32 %v3952, 1.442695
        %v3992 = vpow.pop %v3991
        %v3993 = vmul.f32 %v3953, 1.442695
        %v3994 = vpow.pop %v3993
        %v3995 = vmul.f32 %v3954, 1.442695
        %v3996 = vpow.pop %v3995
        %v3997 = vmul.f32 %v3955, 1.442695
        %v3998 = vpow.pop %v3997
        %v3999 = vmul.f32 %v3956, 1.442695
        %v4000 = vpow.pop %v3999
        %v4001 = vmul.f32 %v3957, 1.442695
        %v4002 = vpow.pop %v4001
        %v4003 = vmul.f32 %v3958, 1.442695
        %v4004 = vpow.pop %v4003
        %v4005 = vmul.f32 %v3959, 1.442695
        %v4006 = vpow.pop %v4005
        %v4007 = vmul.f32 %v3960, 1.442695
        %v4008 = vpow.pop %v4007
        %v4009 = vmul.f32 %v3961, 1.442695
        %v4010 = vpow.pop %v4009
        %v4011 = vmul.f32 %v3962, 1.442695
        %v4012 = vpow.pop %v4011
        %v4013 = vmul.f32 %v3963, 1.442695
        %v4014 = vpow.pop %v4013
        %v4015 = vmul.f32 %v3964, 1.442695
        %v4016 = vpow.pop %v4015
        %v4017 = vmul.f32 %v3965, 1.442695
        %v4018 = vpow.pop %v4017
        %v4019 = vmul.f32 %v3966, 1.442695
        %v4020 = vpow.pop %v4019
        %v4021 = vmul.f32 %v3967, 1.442695
        %v4022 = vpow.pop %v4021
        %v4023 = vmul.f32 %v3968, 1.442695
        %v4024 = vpow.pop %v4023
        %v4025 = vmul.f32 %v3969, 1.442695
        %v4026 = vpow.pop %v4025
        %v4027 = vmul.f32 %v3970, 1.442695
        %v4028 = vpow.pop %v4027
        %v4029 = vmul.f32 %v3971, 1.442695
        %v4030 = vpow.pop %v4029
        %v4031 = vmul.f32 %v3972, 1.442695
        %v4032 = vpow.pop %v4031
        %v4033 = vmul.f32 %v3973, 1.442695
        %v4034 = vpow.pop %v4033
        %v4035 = vmul.f32 %v3974, 1.442695
        %v4036 = vpow.pop %v4035
        %v4037 = vmul.f32 %v3975, 1.442695
        %v4038 = vpow.pop %v4037
        %v4039 = vmul.f32 %v3976, 1.442695
        %v4040 = vpow.pop %v4039
        %v4041 = vmul.f32 %v3769, %v3978
        %v4042 = vmul.f32 %v3770, %v3980
        %v4043 = vmul.f32 %v3771, %v3982
        %v4044 = vmul.f32 %v3772, %v3984
        %v4045 = vmul.f32 %v3773, %v3986
        %v4046 = vmul.f32 %v3774, %v3988
        %v4047 = vmul.f32 %v3775, %v3990
        %v4048 = vmul.f32 %v3776, %v3992
        %v4049 = vmul.f32 %v3777, %v3994
        %v4050 = vmul.f32 %v3778, %v3996
        %v4051 = vmul.f32 %v3779, %v3998
        %v4052 = vmul.f32 %v3780, %v4000
        %v4053 = vmul.f32 %v3781, %v4002
        %v4054 = vmul.f32 %v3782, %v4004
        %v4055 = vmul.f32 %v3783, %v4006
        %v4056 = vmul.f32 %v3784, %v4008
        %v4057 = vmul.f32 %v3785, %v4010
        %v4058 = vmul.f32 %v3786, %v4012
        %v4059 = vmul.f32 %v3787, %v4014
        %v4060 = vmul.f32 %v3788, %v4016
        %v4061 = vmul.f32 %v3789, %v4018
        %v4062 = vmul.f32 %v3790, %v4020
        %v4063 = vmul.f32 %v3791, %v4022
        %v4064 = vmul.f32 %v3792, %v4024
        %v4065 = vmul.f32 %v3793, %v4026
        %v4066 = vmul.f32 %v3794, %v4028
        %v4067 = vmul.f32 %v3795, %v4030
        %v4068 = vmul.f32 %v3796, %v4032
        %v4069 = vmul.f32 %v3797, %v4034
        %v4070 = vmul.f32 %v3798, %v4036
        %v4071 = vmul.f32 %v3799, %v4038
        %v4072 = vmul.f32 %v3800, %v4040
        %v4073 = vadd.f32 %v4041, %v4042
        %4074 = vadd.xlane.f32.xlu0 %v4073
        %v4075 = vpop.xlane.xlu0 %4074
        %v4076 = vadd.f32 %v4043, %v4044
        %4077 = vadd.xlane.f32.xlu0 %v4076
        %v4078 = vpop.xlane.xlu0 %4077
        %v4079 = vadd.f32 %v4045, %v4046
        %4080 = vadd.xlane.f32.xlu0 %v4079
        %v4081 = vpop.xlane.xlu0 %4080
        %v4082 = vadd.f32 %v4047, %v4048
        %4083 = vadd.xlane.f32.xlu0 %v4082
        %v4084 = vpop.xlane.xlu0 %4083
        %v4085 = vadd.f32 %v4049, %v4050
        %4086 = vadd.xlane.f32.xlu0 %v4085
        %v4087 = vpop.xlane.xlu0 %4086
        %v4088 = vadd.f32 %v4051, %v4052
        %4089 = vadd.xlane.f32.xlu0 %v4088
        %v4090 = vpop.xlane.xlu0 %4089
        %v4091 = vadd.f32 %v4053, %v4054
        %4092 = vadd.xlane.f32.xlu0 %v4091
        %v4093 = vpop.xlane.xlu0 %4092
        %v4094 = vadd.f32 %v4055, %v4056
        %4095 = vadd.xlane.f32.xlu0 %v4094
        %v4096 = vpop.xlane.xlu0 %4095
        %v4097 = vadd.f32 %v4057, %v4058
        %4098 = vadd.xlane.f32.xlu0 %v4097
        %v4099 = vpop.xlane.xlu0 %4098
        %v4100 = vadd.f32 %v4059, %v4060
        %4101 = vadd.xlane.f32.xlu0 %v4100
        %v4102 = vpop.xlane.xlu0 %4101
        %v4103 = vadd.f32 %v4061, %v4062
        %4104 = vadd.xlane.f32.xlu0 %v4103
        %v4105 = vpop.xlane.xlu0 %4104
        %v4106 = vadd.f32 %v4063, %v4064
        %4107 = vadd.xlane.f32.xlu0 %v4106
        %v4108 = vpop.xlane.xlu0 %4107
        %v4109 = vadd.f32 %v4065, %v4066
        %4110 = vadd.xlane.f32.xlu0 %v4109
        %v4111 = vpop.xlane.xlu0 %4110
        %v4112 = vadd.f32 %v4067, %v4068
        %4113 = vadd.xlane.f32.xlu0 %v4112
        %v4114 = vpop.xlane.xlu0 %4113
        %v4115 = vadd.f32 %v4069, %v4070
        %4116 = vadd.xlane.f32.xlu0 %v4115
        %v4117 = vpop.xlane.xlu0 %4116
        %v4118 = vadd.f32 %v4071, %v4072
        %4119 = vadd.xlane.f32.xlu0 %v4118
        %v4120 = vpop.xlane.xlu0 %4119
        %v4121 = vlog2.pop %v4075
        %v4122 = vmul.f32 %v4121, 0.6931472
        %v4123 = vlog2.pop %v4078
        %v4124 = vmul.f32 %v4123, 0.6931472
        %v4125 = vlog2.pop %v4081
        %v4126 = vmul.f32 %v4125, 0.6931472
        %v4127 = vlog2.pop %v4084
        %v4128 = vmul.f32 %v4127, 0.6931472
        %v4129 = vlog2.pop %v4087
        %v4130 = vmul.f32 %v4129, 0.6931472
        %v4131 = vlog2.pop %v4090
        %v4132 = vmul.f32 %v4131, 0.6931472
        %v4133 = vlog2.pop %v4093
        %v4134 = vmul.f32 %v4133, 0.6931472
        %v4135 = vlog2.pop %v4096
        %v4136 = vmul.f32 %v4135, 0.6931472
        %v4137 = vlog2.pop %v4099
        %v4138 = vmul.f32 %v4137, 0.6931472
        %v4139 = vlog2.pop %v4102
        %v4140 = vmul.f32 %v4139, 0.6931472
        %v4141 = vlog2.pop %v4105
        %v4142 = vmul.f32 %v4141, 0.6931472
        %v4143 = vlog2.pop %v4108
        %v4144 = vmul.f32 %v4143, 0.6931472
        %v4145 = vlog2.pop %v4111
        %v4146 = vmul.f32 %v4145, 0.6931472
        %v4147 = vlog2.pop %v4114
        %v4148 = vmul.f32 %v4147, 0.6931472
        %v4149 = vlog2.pop %v4117
        %v4150 = vmul.f32 %v4149, 0.6931472
        %v4151 = vlog2.pop %v4120
        %v4152 = vmul.f32 %v4151, 0.6931472
        %v4153 = vadd.f32 %v3899, %v4122
        %v4154 = vadd.f32 %v3902, %v4124
        %v4155 = vadd.f32 %v3905, %v4126
        %v4156 = vadd.f32 %v3908, %v4128
        %v4157 = vadd.f32 %v3911, %v4130
        %v4158 = vadd.f32 %v3914, %v4132
        %v4159 = vadd.f32 %v3917, %v4134
        %v4160 = vadd.f32 %v3920, %v4136
        %v4161 = vadd.f32 %v3923, %v4138
        %v4162 = vadd.f32 %v3926, %v4140
        %v4163 = vadd.f32 %v3929, %v4142
        %v4164 = vadd.f32 %v3932, %v4144
        %v4165 = vadd.f32 %v3935, %v4146
        %v4166 = vadd.f32 %v3938, %v4148
        %v4167 = vadd.f32 %v3941, %v4150
        %v4168 = vadd.f32 %v3944, %v4152
        %v4169 = vsub.f32 %v3865, %v4153
        %v4170 = vsub.f32 %v3866, %v4153
        %v4171 = vsub.f32 %v3867, %v4154
        %v4172 = vsub.f32 %v3868, %v4154
        %v4173 = vsub.f32 %v3869, %v4155
        %v4174 = vsub.f32 %v3870, %v4155
        %v4175 = vsub.f32 %v3871, %v4156
        %v4176 = vsub.f32 %v3872, %v4156
        %v4177 = vsub.f32 %v3873, %v4157
        %v4178 = vsub.f32 %v3874, %v4157
        %v4179 = vsub.f32 %v3875, %v4158
        %v4180 = vsub.f32 %v3876, %v4158
        %v4181 = vsub.f32 %v3877, %v4159
        %v4182 = vsub.f32 %v3878, %v4159
        %v4183 = vsub.f32 %v3879, %v4160
        %v4184 = vsub.f32 %v3880, %v4160
        %v4185 = vsub.f32 %v3881, %v4161
        %v4186 = vsub.f32 %v3882, %v4161
        %v4187 = vsub.f32 %v3883, %v4162
        %v4188 = vsub.f32 %v3884, %v4162
        %v4189 = vsub.f32 %v3885, %v4163
        %v4190 = vsub.f32 %v3886, %v4163
        %v4191 = vsub.f32 %v3887, %v4164
        %v4192 = vsub.f32 %v3888, %v4164
        %v4193 = vsub.f32 %v3889, %v4165
        %v4194 = vsub.f32 %v3890, %v4165
        %v4195 = vsub.f32 %v3891, %v4166
        %v4196 = vsub.f32 %v3892, %v4166
        %v4197 = vsub.f32 %v3893, %v4167
        %v4198 = vsub.f32 %v3894, %v4167
        %v4199 = vsub.f32 %v3895, %v4168
        %v4200 = vsub.f32 %v3896, %v4168
        %4201 = vst [vmem:[%s330] sm:$0xff] %v4169
        %4202 = vst [vmem:[%s330 + $0x8] sm:$0xff] %v4170
        %4203 = vst [vmem:[%s330 + $0x10] sm:$0xff] %v4171
        %4204 = vst [vmem:[%s330 + $0x18] sm:$0xff] %v4172
        %4205 = vst [vmem:[%s330 + $0x20] sm:$0xff] %v4173
        %4206 = vst [vmem:[%s330 + $0x28] sm:$0xff] %v4174
        %4207 = vst [vmem:[%s330 + $0x30] sm:$0xff] %v4175
        %4208 = vst [vmem:[%s330 + $0x38] sm:$0xff] %v4176
        %4209 = vst [vmem:[%s330 + $0x40] sm:$0xff] %v4177
        %4210 = vst [vmem:[%s330 + $0x48] sm:$0xff] %v4178
        %4211 = vst [vmem:[%s330 + $0x50] sm:$0xff] %v4179
        %4212 = vst [vmem:[%s330 + $0x58] sm:$0xff] %v4180
        %4213 = vst [vmem:[%s330 + $0x60] sm:$0xff] %v4181
        %4214 = vst [vmem:[%s330 + $0x68] sm:$0xff] %v4182
        %4215 = vst [vmem:[%s330 + $0x70] sm:$0xff] %v4183
        %4216 = vst [vmem:[%s330 + $0x78] sm:$0xff] %v4184
        %4217 = vst [vmem:[%s330 + $0x80] sm:$0xff] %v4185
        %4218 = vst [vmem:[%s330 + $0x88] sm:$0xff] %v4186
        %4219 = vst [vmem:[%s330 + $0x90] sm:$0xff] %v4187
        %4220 = vst [vmem:[%s330 + $0x98] sm:$0xff] %v4188
        %4221 = vst [vmem:[%s330 + $0xa0] sm:$0xff] %v4189
        %4222 = vst [vmem:[%s330 + $0xa8] sm:$0xff] %v4190
        %4223 = vst [vmem:[%s330 + $0xb0] sm:$0xff] %v4191
        %4224 = vst [vmem:[%s330 + $0xb8] sm:$0xff] %v4192
        %4225 = vst [vmem:[%s330 + $0xc0] sm:$0xff] %v4193
        %4226 = vst [vmem:[%s330 + $0xc8] sm:$0xff] %v4194
        %4227 = vst [vmem:[%s330 + $0xd0] sm:$0xff] %v4195
        %4228 = vst [vmem:[%s330 + $0xd8] sm:$0xff] %v4196
        %4229 = vst [vmem:[%s330 + $0xe0] sm:$0xff] %v4197
        %4230 = vst [vmem:[%s330 + $0xe8] sm:$0xff] %v4198
        %4231 = vst [vmem:[%s330 + $0xf0] sm:$0xff] %v4199
        %4232 = vst [vmem:[%s330 + $0xf8] sm:$0xff] %v4200
        %vm4233 = vcmask 523264
        %4234 = vst.msk [vmem:[%s337] sm:$0xff] %vm4233, %v1119
        %4235 = vst.msk [vmem:[%s337 + $0x10] sm:$0xff] %vm4233, %v1122
        %4236 = vst.msk [vmem:[%s337 + $0x20] sm:$0xff] %vm4233, %v1125
        %4237 = vst.msk [vmem:[%s337 + $0x30] sm:$0xff] %vm4233, %v1128
        %4238 = vst.msk [vmem:[%s337 + $0x40] sm:$0xff] %vm4233, %v1131
        %4239 = vst.msk [vmem:[%s337 + $0x50] sm:$0xff] %vm4233, %v1134
        %4240 = vst.msk [vmem:[%s337 + $0x60] sm:$0xff] %vm4233, %v1137
        %4241 = vst.msk [vmem:[%s337 + $0x70] sm:$0xff] %vm4233, %v1140
        %4242 = vst.msk [vmem:[%s337 + $0x80] sm:$0xff] %vm4233, %v1143
        %4243 = vst.msk [vmem:[%s337 + $0x90] sm:$0xff] %vm4233, %v1146
        %4244 = vst.msk [vmem:[%s337 + $0xa0] sm:$0xff] %vm4233, %v1149
        %4245 = vst.msk [vmem:[%s337 + $0xb0] sm:$0xff] %vm4233, %v1152
        %4246 = vst.msk [vmem:[%s337 + $0xc0] sm:$0xff] %vm4233, %v1155
        %4247 = vst.msk [vmem:[%s337 + $0xd0] sm:$0xff] %vm4233, %v1158
        %4248 = vst.msk [vmem:[%s337 + $0xe0] sm:$0xff] %vm4233, %v1161
        %4249 = vst.msk [vmem:[%s337 + $0xf0] sm:$0xff] %vm4233, %v1164
        %4266 = vrot.lane.b32.xlu0 %v1167, 64
        %v4267 = vpop.permute.xlu0 %4266
        %4268 = vrot.lane.b32.xlu0 %v1170, 64
        %v4269 = vpop.permute.xlu0 %4268
        %4270 = vrot.lane.b32.xlu0 %v1173, 64
        %v4271 = vpop.permute.xlu0 %4270
        %4272 = vrot.lane.b32.xlu0 %v1176, 64
        %v4273 = vpop.permute.xlu0 %4272
        %4274 = vrot.lane.b32.xlu0 %v1179, 64
        %v4275 = vpop.permute.xlu0 %4274
        %4276 = vrot.lane.b32.xlu0 %v1182, 64
        %v4277 = vpop.permute.xlu0 %4276
        %4278 = vrot.lane.b32.xlu0 %v1185, 64
        %v4279 = vpop.permute.xlu0 %4278
        %4280 = vrot.lane.b32.xlu0 %v1188, 64
        %v4281 = vpop.permute.xlu0 %4280
        %4282 = vrot.lane.b32.xlu0 %v1191, 64
        %v4283 = vpop.permute.xlu0 %4282
        %4284 = vrot.lane.b32.xlu0 %v1194, 64
        %v4285 = vpop.permute.xlu0 %4284
        %4286 = vrot.lane.b32.xlu0 %v1197, 64
        %v4287 = vpop.permute.xlu0 %4286
        %4288 = vrot.lane.b32.xlu0 %v1200, 64
        %v4289 = vpop.permute.xlu0 %4288
        %4290 = vrot.lane.b32.xlu0 %v1203, 64
        %v4291 = vpop.permute.xlu0 %4290
        %4292 = vrot.lane.b32.xlu0 %v1206, 64
        %v4293 = vpop.permute.xlu0 %4292
        %4294 = vrot.lane.b32.xlu0 %v1209, 64
        %v4295 = vpop.permute.xlu0 %4294
        %4296 = vrot.lane.b32.xlu0 %v1212, 64
        %v4297 = vpop.permute.xlu0 %4296
        %vm4314 = vcmask 1048064
        %4315 = vst.msk [vmem:[%s337] sm:$0xff] %vm4314, %v4267
        %4316 = vst.msk [vmem:[%s337 + $0x10] sm:$0xff] %vm4314, %v4269
        %4317 = vst.msk [vmem:[%s337 + $0x20] sm:$0xff] %vm4314, %v4271
        %4318 = vst.msk [vmem:[%s337 + $0x30] sm:$0xff] %vm4314, %v4273
        %4319 = vst.msk [vmem:[%s337 + $0x40] sm:$0xff] %vm4314, %v4275
        %4320 = vst.msk [vmem:[%s337 + $0x50] sm:$0xff] %vm4314, %v4277
        %4321 = vst.msk [vmem:[%s337 + $0x60] sm:$0xff] %vm4314, %v4279
        %4322 = vst.msk [vmem:[%s337 + $0x70] sm:$0xff] %vm4314, %v4281
        %4323 = vst.msk [vmem:[%s337 + $0x80] sm:$0xff] %vm4314, %v4283
        %4324 = vst.msk [vmem:[%s337 + $0x90] sm:$0xff] %vm4314, %v4285
        %4325 = vst.msk [vmem:[%s337 + $0xa0] sm:$0xff] %vm4314, %v4287
        %4326 = vst.msk [vmem:[%s337 + $0xb0] sm:$0xff] %vm4314, %v4289
        %4327 = vst.msk [vmem:[%s337 + $0xc0] sm:$0xff] %vm4314, %v4291
        %4328 = vst.msk [vmem:[%s337 + $0xd0] sm:$0xff] %vm4314, %v4293
        %4329 = vst.msk [vmem:[%s337 + $0xe0] sm:$0xff] %vm4314, %v4295
        %4330 = vst.msk [vmem:[%s337 + $0xf0] sm:$0xff] %vm4314, %v4297
        %4331 = vst.msk [vmem:[%s337 + $0x8] sm:$0xff] %vm4233, %v1215
        %4332 = vst.msk [vmem:[%s337 + $0x18] sm:$0xff] %vm4233, %v1218
        %4333 = vst.msk [vmem:[%s337 + $0x28] sm:$0xff] %vm4233, %v1221
        %4334 = vst.msk [vmem:[%s337 + $0x38] sm:$0xff] %vm4233, %v1224
        %4335 = vst.msk [vmem:[%s337 + $0x48] sm:$0xff] %vm4233, %v1227
        %4336 = vst.msk [vmem:[%s337 + $0x58] sm:$0xff] %vm4233, %v1230
        %4337 = vst.msk [vmem:[%s337 + $0x68] sm:$0xff] %vm4233, %v1233
        %4338 = vst.msk [vmem:[%s337 + $0x78] sm:$0xff] %vm4233, %v1236
        %4339 = vst.msk [vmem:[%s337 + $0x88] sm:$0xff] %vm4233, %v1239
        %4340 = vst.msk [vmem:[%s337 + $0x98] sm:$0xff] %vm4233, %v1242
        %4341 = vst.msk [vmem:[%s337 + $0xa8] sm:$0xff] %vm4233, %v1245
        %4342 = vst.msk [vmem:[%s337 + $0xb8] sm:$0xff] %vm4233, %v1248
        %4343 = vst.msk [vmem:[%s337 + $0xc8] sm:$0xff] %vm4233, %v1251
        %4344 = vst.msk [vmem:[%s337 + $0xd8] sm:$0xff] %vm4233, %v1254
        %4345 = vst.msk [vmem:[%s337 + $0xe8] sm:$0xff] %vm4233, %v1257
        %4346 = vst.msk [vmem:[%s337 + $0xf8] sm:$0xff] %vm4233, %v1260
        %4363 = vrot.lane.b32.xlu0 %v1263, 64
        %v4364 = vpop.permute.xlu0 %4363
        %4365 = vrot.lane.b32.xlu0 %v1266, 64
        %v4366 = vpop.permute.xlu0 %4365
        %4367 = vrot.lane.b32.xlu0 %v1269, 64
        %v4368 = vpop.permute.xlu0 %4367
        %4369 = vrot.lane.b32.xlu0 %v1272, 64
        %v4370 = vpop.permute.xlu0 %4369
        %4371 = vrot.lane.b32.xlu0 %v1275, 64
        %v4372 = vpop.permute.xlu0 %4371
        %4373 = vrot.lane.b32.xlu0 %v1278, 64
        %v4374 = vpop.permute.xlu0 %4373
        %4375 = vrot.lane.b32.xlu0 %v1281, 64
        %v4376 = vpop.permute.xlu0 %4375
        %4377 = vrot.lane.b32.xlu0 %v1284, 64
        %v4378 = vpop.permute.xlu0 %4377
        %4379 = vrot.lane.b32.xlu0 %v1287, 64
        %v4380 = vpop.permute.xlu0 %4379
        %4381 = vrot.lane.b32.xlu0 %v1290, 64
        %v4382 = vpop.permute.xlu0 %4381
        %4383 = vrot.lane.b32.xlu0 %v1293, 64
        %v4384 = vpop.permute.xlu0 %4383
        %4385 = vrot.lane.b32.xlu0 %v1296, 64
        %v4386 = vpop.permute.xlu0 %4385
        %4387 = vrot.lane.b32.xlu0 %v1299, 64
        %v4388 = vpop.permute.xlu0 %4387
        %4389 = vrot.lane.b32.xlu0 %v1302, 64
        %v4390 = vpop.permute.xlu0 %4389
        %4391 = vrot.lane.b32.xlu0 %v1305, 64
        %v4392 = vpop.permute.xlu0 %4391
        %4393 = vrot.lane.b32.xlu0 %v1308, 64
        %v4394 = vpop.permute.xlu0 %4393
        %4411 = vst.msk [vmem:[%s337 + $0x8] sm:$0xff] %vm4314, %v4364
        %4412 = vst.msk [vmem:[%s337 + $0x18] sm:$0xff] %vm4314, %v4366
        %4413 = vst.msk [vmem:[%s337 + $0x28] sm:$0xff] %vm4314, %v4368
        %4414 = vst.msk [vmem:[%s337 + $0x38] sm:$0xff] %vm4314, %v4370
        %4415 = vst.msk [vmem:[%s337 + $0x48] sm:$0xff] %vm4314, %v4372
        %4416 = vst.msk [vmem:[%s337 + $0x58] sm:$0xff] %vm4314, %v4374
        %4417 = vst.msk [vmem:[%s337 + $0x68] sm:$0xff] %vm4314, %v4376
        %4418 = vst.msk [vmem:[%s337 + $0x78] sm:$0xff] %vm4314, %v4378
        %4419 = vst.msk [vmem:[%s337 + $0x88] sm:$0xff] %vm4314, %v4380
        %4420 = vst.msk [vmem:[%s337 + $0x98] sm:$0xff] %vm4314, %v4382
        %4421 = vst.msk [vmem:[%s337 + $0xa8] sm:$0xff] %vm4314, %v4384
        %4422 = vst.msk [vmem:[%s337 + $0xb8] sm:$0xff] %vm4314, %v4386
        %4423 = vst.msk [vmem:[%s337 + $0xc8] sm:$0xff] %vm4314, %v4388
        %4424 = vst.msk [vmem:[%s337 + $0xd8] sm:$0xff] %vm4314, %v4390
        %4425 = vst.msk [vmem:[%s337 + $0xe8] sm:$0xff] %vm4314, %v4392
        %4426 = vst.msk [vmem:[%s337 + $0xf8] sm:$0xff] %vm4314, %v4394
        %s4427 = sand.u32 %s189, 1
        %s4428 = scalar_lea.sflag [#allocation4], %s4427
        %s4429 = sand.u32 %s189, 1
        %s4430 = smul.addr %s4429, 256
        %s4431 = scalar_lea.vmem [#allocation5], %s4430
        %s4432 = sand.u32 %s215, 1
        %s4433 = scalar_lea.sflag [#allocation7], %s4432
        %s4434 = sand.u32 %s215, 1
        %s4435 = smul.addr %s4434, 256
        %s4436 = scalar_lea.vmem [#allocation6], %s4435
        // Predicated region
        $region53: #{tpu_custom_call.1} parent=47 // pred_check
          %p4437 = pneg %p199
        $region54: #{tpu_custom_call.1} parent=47 // pred_check_branch
          %4439 = sbr.rel (%p4437) target = $region56
        $region55: #{tpu_custom_call.1} parent=47 // pred_region
          %s4440 = smul.u32 16, %s29
          %4442 = vsyncadd %s4428, 0
          %s4443 = smul.addr %s4440, 2
          %s4444 = smul.addr %s4443, 8
          %s4445 = scalar_lea.hbm %s7, %s4444
          %s4446 = sshll.u32 %s4431, 4
          %s4447 = int_to_ptr.vmem [resolvable:$true] %s4446
          %s4448 = sshll.u32 %s4445, 4
          %s4449 = int_to_ptr.hbm [resolvable:$true] %s4448
          %4454 = dma.vmem_to_hbm [thread:$0]  %s4447, 4096, %s4449, %s4428, 256, 256, 16
        $region56: #{tpu_custom_call.1} parent=47 // pred_fallthru
          _
        // Predicated region
        $region57: #{tpu_custom_call.1} parent=47 // pred_check
          %p4455 = pneg %p225
        $region58: #{tpu_custom_call.1} parent=47 // pred_check_branch
          %4457 = sbr.rel (%p4455) target = $region60
        $region59: #{tpu_custom_call.1} parent=47 // pred_region
          %s4458 = smul.u32 16, %s29
          %4460 = vsyncadd %s4433, 0
          %s4461 = smul.addr %s4458, 2
          %s4462 = smul.addr %s4461, 8
          %s4463 = scalar_lea.hbm %s8, %s4462
          %s4464 = sshll.u32 %s4436, 4
          %s4465 = int_to_ptr.vmem [resolvable:$true] %s4464
          %s4466 = sshll.u32 %s4463, 4
          %s4467 = int_to_ptr.hbm [resolvable:$true] %s4466
          %4472 = dma.vmem_to_hbm [thread:$0]  %s4465, 4096, %s4467, %s4433, 256, 256, 16
        $region60: #{tpu_custom_call.1} parent=47 // pred_fallthru
          _
      $region48: #{tpu_custom_call.1} parent=5 // pred_fallthru
        _
      %p4473 = scmp.le.s32.totalorder 2, %s24
      // Predicated region
      $region61: #{tpu_custom_call.1} parent=5 // pred_check
        %p4474 = pneg %p4473
      $region62: #{tpu_custom_call.1} parent=5 // pred_check_branch
        %4476 = sbr.rel (%p4474) target = $region64
      $region63: #{tpu_custom_call.1} parent=5 // pred_region
        %s4477 = ssub.s32 %s24, 2
        // Predicated region
        $region65: #{tpu_custom_call.1} parent=63 // pred_check
          %p4478 = pneg %p205
        $region66: #{tpu_custom_call.1} parent=63 // pred_check_branch
          %4480 = sbr.rel (%p4478) target = $region68
        $region67: #{tpu_custom_call.1} parent=63 // pred_region
          %s4481 = sand.u32 %s190, 1
          %s4482 = scalar_lea.sflag [#allocation4], %s4481
          %s4483 = sand.u32 %s190, 1
          %s4484 = smul.addr %s4483, 256
          %s4485 = scalar_lea.vmem [#allocation5], %s4484
          %4487 = dma.done %s4482, 4096
        $region68: #{tpu_custom_call.1} parent=63 // pred_fallthru
          _
        // Predicated region
        $region69: #{tpu_custom_call.1} parent=63 // pred_check
          %p4488 = pneg %p231
        $region70: #{tpu_custom_call.1} parent=63 // pred_check_branch
          %4490 = sbr.rel (%p4488) target = $region72
        $region71: #{tpu_custom_call.1} parent=63 // pred_region
          %s4491 = sand.u32 %s216, 1
          %s4492 = scalar_lea.sflag [#allocation7], %s4491
          %s4493 = sand.u32 %s216, 1
          %s4494 = smul.addr %s4493, 256
          %s4495 = scalar_lea.vmem [#allocation6], %s4494
          %4497 = dma.done %s4492, 4096
        $region72: #{tpu_custom_call.1} parent=63 // pred_fallthru
          _
      $region64: #{tpu_custom_call.1} parent=5 // pred_fallthru
        _
    $region6: #{tpu_custom_call.1} parent=1 // loop_footer
      %s28 = sadd.s32 1, %s24
    $region7: #{tpu_custom_call.1} parent=1 // loop_footer_branch
      %23 = sbr.rel target = $region3
    $region8: #{tpu_custom_call.1} parent=1 // loop_exit
      _
    %4498 = vsyncpa [#allocation3], 1
    %s4499 = scalar_lea.sflag [#allocation3], 1
    %4500 = vsyncpa %s4499, 1
    %4501 = vsyncpa [#allocation4], 1
    %s4502 = scalar_lea.sflag [#allocation4], 1
    %4503 = vsyncpa %s4502, 1
    %4504 = vsyncpa [#allocation7], 1
    %s4505 = scalar_lea.sflag [#allocation7], 1
    %4506 = vsyncpa %s4505, 1

</llo_original>
